<compile_context>
chip_gen: v7x
topology: tpu7x:2x2x1
jax: 0.10.0
libtpu: 0.0.40
codegen_flags: <defaults>
</compile_context>

<pallas_src>
import functools
import math

import jax
import jax.numpy as jnp
from jax import lax
from jax.experimental import pallas as pl
from jax.experimental.pallas import tpu as pltpu


def _round_up(v, m):
    return -(-v // m) * m


# ---------------------------------------------------------------------------
# Pallas kernels
# ---------------------------------------------------------------------------
def _matmul_bias_kernel(x_ref, w_ref, b_ref, o_ref, *, relu):
    """o = x @ w + b (optional relu). w pre-transposed (K, Np), bf16; f32 accum."""
    y = jnp.dot(x_ref[...].astype(jnp.bfloat16), w_ref[...],
                preferred_element_type=jnp.float32)
    y = y + b_ref[...]
    if relu:
        y = jnp.maximum(y, 0.0)
    o_ref[...] = y.astype(o_ref.dtype)


def _lstm_fused_kernel(x_ref,       # (chunk*Bp, NX)   raw inputs for this chunk
                       w_in_ref,    # (NX, Hp)   bf16  linearIn^T
                       b_in_ref,    # (1, Hp)    f32
                       w_ih_ref,    # (Hp, 4Hp)  bf16  input->gates^T (gate-padded)
                       b_g_ref,     # (1, 4Hp)   f32   b_ih + b_hh (gate-padded)
                       w_hh_ref,    # (Hp, 4Hp)  bf16  hidden->gates^T
                       w_out_ref,   # (Hp, NYp)  bf16  linearOut^T
                       b_out_ref,   # (1, NYp)   f32
                       h0_ref,      # (Bp, Hp)   f32   CNN conditioner output
                       out_ref,     # (chunk*Bp, NYp)  f32 output block
                       h_sc, c_sc,  # (Bp, Hp)   f32 scratch (carried across grid)
                       pg_sc,       # (chunk*Bp, 4Hp) f32 scratch (pre-gates)
                       hbuf,        # (chunk*Bp, Hp)  f32 scratch (chunk hiddens)
                       *, chunk, bp, hp):
    @pl.when(pl.program_id(0) == 0)
    def _():
        h_sc[...] = h0_ref[...]            # hx = cnn(xc), cx = 0
        c_sc[...] = jnp.zeros_like(c_sc)

    # --- chunk-parallel pre-gate projection, kept entirely in VMEM ----------
    x0 = jnp.dot(x_ref[...].astype(jnp.bfloat16), w_in_ref[...],
                 preferred_element_type=jnp.float32)
    x0 = jnp.maximum(x0 + b_in_ref[...], 0.0)          # relu(linearIn(x))
    pg_sc[...] = jnp.dot(x0.astype(jnp.bfloat16), w_ih_ref[...],
                         preferred_element_type=jnp.float32) + b_g_ref[...]

    w_hh = w_hh_ref[...]                                # loop-invariant bf16

    # --- sequential cell update ---------------------------------------------
    def step(s, carry):
        row = pl.multiple_of(s * bp, bp)
        h = h_sc[...]
        c = c_sc[...]
        g = pg_sc[pl.ds(row, bp), :] + jnp.dot(
            h.astype(jnp.bfloat16), w_hh, preferred_element_type=jnp.float32)
        i_g = jax.nn.sigmoid(g[:, 0 * hp:1 * hp])
        f_g = jax.nn.sigmoid(g[:, 1 * hp:2 * hp])
        g_g = jnp.tanh(g[:, 2 * hp:3 * hp])
        o_g = jax.nn.sigmoid(g[:, 3 * hp:4 * hp])
        c_new = f_g * c + i_g * g_g
        h_new = o_g * jnp.tanh(c_new)
        h_sc[...] = h_new
        c_sc[...] = c_new
        hbuf[pl.ds(row, bp), :] = h_new
        return carry

    lax.fori_loop(0, chunk, step, 0, unroll=min(chunk, 8))

    # --- fused linearOut epilogue: one lane-dense store per chunk ------------
    out_ref[...] = (jnp.dot(hbuf[...].astype(jnp.bfloat16), w_out_ref[...],
                            preferred_element_type=jnp.float32)
                    + b_out_ref[...]).astype(out_ref.dtype)


# ---------------------------------------------------------------------------
# Pallas wrappers
# ---------------------------------------------------------------------------
_ROW_BLOCK = 512


def _dense(x, w_t, b, *, relu=False):
    """y = x @ w_t + b (+relu).  Row-blocked, 128-lane padded output."""
    R, K = x.shape
    N = w_t.shape[1]
    Np = _round_up(N, 128)
    Rp = _round_up(max(R, 8), 8)
    if Rp <= _ROW_BLOCK:
        rb = Rp
    else:
        rb = _ROW_BLOCK
        Rp = _round_up(Rp, rb)
    xp = jnp.pad(x, ((0, Rp - R), (0, 0))) if Rp != R else x
    w_p = jnp.pad(w_t, ((0, 0), (0, Np - N))).astype(jnp.bfloat16)
    b_p = jnp.pad(b, (0, Np - N)).reshape(1, Np)
    out = pl.pallas_call(
        functools.partial(_matmul_bias_kernel, relu=relu),
        out_shape=jax.ShapeDtypeStruct((Rp, Np), jnp.float32),
        grid=(Rp // rb,),
        in_specs=[pl.BlockSpec((rb, K), lambda i: (i, 0)),
                  pl.BlockSpec((K, Np), lambda i: (0, 0)),
                  pl.BlockSpec((1, Np), lambda i: (0, 0))],
        out_specs=pl.BlockSpec((rb, Np), lambda i: (i, 0)),
        compiler_params=pltpu.CompilerParams(dimension_semantics=("parallel",)),
    )(xp, w_p, b_p)
    return out[:R, :N]


def _lstm_fused(x2d, w_in_t, b_in, w_ih_t, b_g, w_hh_t, w_out_t, b_out, h0,
                *, chunk, bp, hp, nyp):
    rows, nx = x2d.shape
    n_chunks = rows // (chunk * bp)
    return pl.pallas_call(
        functools.partial(_lstm_fused_kernel, chunk=chunk, bp=bp, hp=hp),
        out_shape=jax.ShapeDtypeStruct((rows, nyp), jnp.float32),
        grid=(n_chunks,),
        in_specs=[pl.BlockSpec((chunk * bp, nx), lambda c: (c, 0)),
                  pl.BlockSpec((nx, hp), lambda c: (0, 0)),
                  pl.BlockSpec((1, hp), lambda c: (0, 0)),
                  pl.BlockSpec((hp, 4 * hp), lambda c: (0, 0)),
                  pl.BlockSpec((1, 4 * hp), lambda c: (0, 0)),
                  pl.BlockSpec((hp, 4 * hp), lambda c: (0, 0)),
                  pl.BlockSpec((hp, nyp), lambda c: (0, 0)),
                  pl.BlockSpec((1, nyp), lambda c: (0, 0)),
                  pl.BlockSpec((bp, hp), lambda c: (0, 0))],
        out_specs=pl.BlockSpec((chunk * bp, nyp), lambda c: (c, 0)),
        scratch_shapes=[pltpu.VMEM((bp, hp), jnp.float32),
                        pltpu.VMEM((bp, hp), jnp.float32),
                        pltpu.VMEM((chunk * bp, 4 * hp), jnp.float32),
                        pltpu.VMEM((chunk * bp, hp), jnp.float32)],
        compiler_params=pltpu.CompilerParams(
            dimension_semantics=("arbitrary",)),   # time recurrence: sequential
    )(x2d, w_in_t, b_in, w_ih_t, b_g, w_hh_t, w_out_t, b_out, h0)


# ---------------------------------------------------------------------------
# Cnn1d conditioner.  Dense compute in Pallas; im2col / 2-wide maxpool are
# layout glue in plain JAX (tiny at ct=16).
# ---------------------------------------------------------------------------
def _cnn1d_forward(xc, p):
    ct, B, nx = xc.shape
    x = jnp.transpose(xc, (1, 2, 0))                       # (B, nx, ct)

    c1, _, k1 = p["w1"].shape
    L1 = ct - k1 + 1
    idx1 = jnp.arange(L1)[:, None] + jnp.arange(k1)[None, :]
    pat1 = jnp.transpose(x[:, :, idx1], (0, 2, 1, 3)).reshape(B * L1, nx * k1)
    h1 = _dense(pat1, p["w1"].reshape(c1, nx * k1).T, p["b1"], relu=True)

    P1 = L1 // 2
    p1 = h1.reshape(B, L1, c1)[:, :2 * P1].reshape(B, P1, 2, c1).max(axis=2)

    c2, _, k2 = p["w2"].shape
    L2 = P1 - k2 + 1
    idx2 = jnp.arange(L2)[:, None] + jnp.arange(k2)[None, :]
    pat2 = jnp.transpose(p1[:, idx2, :], (0, 1, 3, 2)).reshape(B * L2, c1 * k2)
    h2 = _dense(pat2, p["w2"].reshape(c2, c1 * k2).T, p["b2"], relu=True)

    P2 = L2 // 2
    p2 = h2.reshape(B, L2, c2)[:, :2 * P2].reshape(B, P2, 2, c2).max(axis=2)
    flat = jnp.transpose(p2, (0, 2, 1)).reshape(B, c2 * P2)  # channel-major (.view)

    f1 = _dense(flat, p["w_fc1"].T, p["b_fc1"], relu=True)
    f2 = _dense(f1, p["w_fc2"].T, p["b_fc2"], relu=False)
    return f2                                               # (B, cnnSize)


# ---------------------------------------------------------------------------
# LstmCnnCond forward (opt=1: cnnSize == hiddenSize, cnn output is hx)
# ---------------------------------------------------------------------------
def lstm_cnn_cond_forward(x, xc, params, *, time_chunk=32):
    T, B, nxf = x.shape
    H = params["lstm"]["w_hh"].shape[1]
    ny = params["lin_out"]["w"].shape[0]

    Hp = _round_up(H, 128)                 # lane-dense gate blocks / h stores
    NYp = _round_up(ny, 128)               # lane-dense linearOut block
    Bp = _round_up(max(B, 8), 8)           # sublane multiple
    chunk = max(1, min(time_chunk, T))
    Tp = _round_up(T, chunk)

    # --- CNN conditioner -> initial hidden state -----------------------------
    h0 = _cnn1d_forward(xc, params["cnn"])                  # (B, H)
    h0_p = jnp.pad(h0, ((0, Bp - B), (0, Hp - H)))          # padded lanes stay 0

    # --- padded, pre-transposed, bf16 weights; folded LSTM bias --------------
    def pad_gate_mat(w):                                    # (4H,H) -> (4Hp,Hp)
        w4 = w.reshape(4, H, H)
        w4 = jnp.pad(w4, ((0, 0), (0, Hp - H), (0, Hp - H)))
        return w4.reshape(4 * Hp, Hp)

    def pad_gate_vec(b):                                    # (4H,) -> (4Hp,)
        return jnp.pad(b.reshape(4, H), ((0, 0), (0, Hp - H))).reshape(4 * Hp)

    w_in_t = jnp.pad(params["lin_in"]["w"],
                     ((0, Hp - H), (0, 0))).T.astype(jnp.bfloat16)   # (nx, Hp)
    b_in = jnp.pad(params["lin_in"]["b"], (0, Hp - H)).reshape(1, Hp)
    w_ih_t = pad_gate_mat(params["lstm"]["w_ih"]).T.astype(jnp.bfloat16)  # (Hp,4Hp)
    w_hh_t = pad_gate_mat(params["lstm"]["w_hh"]).T.astype(jnp.bfloat16)  # (Hp,4Hp)
    b_g = pad_gate_vec(params["lstm"]["b_ih"]
                       + params["lstm"]["b_hh"]).reshape(1, 4 * Hp)
    w_out_t = jnp.pad(params["lin_out"]["w"],
                      ((0, NYp - ny), (0, Hp - H))).T.astype(jnp.bfloat16)  # (Hp,NYp)
    b_out = jnp.pad(params["lin_out"]["b"], (0, NYp - ny)).reshape(1, NYp)

    # --- fused recurrence (pre-gates + cell update + linearOut in one kernel) -
    x2d = jnp.pad(x, ((0, Tp - T), (0, Bp - B), (0, 0))).reshape(Tp * Bp, nxf)
    out2d = _lstm_fused(x2d, w_in_t, b_in, w_ih_t, b_g, w_hh_t, w_out_t, b_out,
                        h0_p, chunk=chunk, bp=Bp, hp=Hp, nyp=NYp)   # (Tp*Bp, NYp)

    return out2d.reshape(Tp, Bp, NYp)[:T, :B, :ny]


# ---------------------------------------------------------------------------
# Pure-JAX f32 reference (correctness guard; kernel uses bf16 matmul operands)
# ---------------------------------------------------------------------------
def _reference_forward(x, xc, p):
    ct, B, nx = xc.shape
    xb = jnp.transpose(xc, (1, 2, 0))                       # (B, nx, ct)

    def conv1d(inp, w, b):
        out = lax.conv_general_dilated(inp, w, (1,), "VALID",
                                        dimension_numbers=("NCH", "OIH", "NCH"))
        return out + b[None, :, None]

    def pool2(a):
        B_, C_, L_ = a.shape
        P_ = L_ // 2
        return a[:, :, :2 * P_].reshape(B_, C_, P_, 2).max(axis=3)

    h1 = pool2(jax.nn.relu(conv1d(xb, p["cnn"]["w1"], p["cnn"]["b1"])))
    h2 = pool2(jax.nn.relu(conv1d(h1, p["cnn"]["w2"], p["cnn"]["b2"])))
    flat = h2.reshape(B, -1)
    f1 = jax.nn.relu(flat @ p["cnn"]["w_fc1"].T + p["cnn"]["b_fc1"])
    h0 = f1 @ p["cnn"]["w_fc2"].T + p["cnn"]["b_fc2"]       # (B, H)

    H = p["lstm"]["w_hh"].shape[1]
    x2 = jax.nn.relu(jnp.einsum("tbn,hn->tbh", x, p["lin_in"]["w"])
                     + p["lin_in"]["b"])

    def step(carry, xt):
        h, c = carry
        g = (xt @ p["lstm"]["w_ih"].T + p["lstm"]["b_ih"]
             + h @ p["lstm"]["w_hh"].T + p["lstm"]["b_hh"])
        i = jax.nn.sigmoid(g[:, 0:H]); f = jax.nn.sigmoid(g[:, H:2 * H])
        gg = jnp.tanh(g[:, 2 * H:3 * H]); o = jax.nn.sigmoid(g[:, 3 * H:4 * H])
        c = f * c + i * gg
        h = o * jnp.tanh(c)
        return (h, c), h

    _, hs = lax.scan(step, (h0, jnp.zeros_like(h0)), x2)
    return jnp.einsum("tbh,yh->tby", hs, p["lin_out"]["w"]) + p["lin_out"]["b"]


# ---------------------------------------------------------------------------
# Parameter construction (deterministic, mirrors PyTorch init ranges/shapes)
# ---------------------------------------------------------------------------
def _uniform(key, shape, bound):
    return jax.random.uniform(key, shape, jnp.float32, -bound, bound)


def init_lstm_cnn_cond(key, *, nx, ny, ct, hidden,
                       cp1=(64, 3, 2), cp2=(128, 5, 2)):
    cnn_size = hidden                       # opt == 1
    c1, k1, _ = cp1
    c2, k2, _ = cp2
    L1 = ct - k1 + 1
    P1 = L1 // cp1[2]
    L2 = P1 - k2 + 1
    P2 = L2 // cp2[2]
    flat = c2 * P2

    ks = jax.random.split(key, 16)
    cnn = dict(
        w1=_uniform(ks[0], (c1, nx, k1), 1.0 / math.sqrt(nx * k1)),
        b1=_uniform(ks[1], (c1,), 1.0 / math.sqrt(nx * k1)),
        w2=_uniform(ks[2], (c2, c1, k2), 1.0 / math.sqrt(c1 * k2)),
        b2=_uniform(ks[3], (c2,), 1.0 / math.sqrt(c1 * k2)),
        w_fc1=_uniform(ks[4], (cnn_size, flat), 1.0 / math.sqrt(flat)),
        b_fc1=_uniform(ks[5], (cnn_size,), 1.0 / math.sqrt(flat)),
        w_fc2=_uniform(ks[6], (cnn_size, cnn_size), 1.0 / math.sqrt(cnn_size)),
        b_fc2=_uniform(ks[7], (cnn_size,), 1.0 / math.sqrt(cnn_size)),
    )
    stdv = 1.0 / math.sqrt(hidden)
    lstm = dict(
        w_ih=_uniform(ks[8], (4 * hidden, hidden), stdv),
        w_hh=_uniform(ks[9], (4 * hidden, hidden), stdv),
        b_ih=_uniform(ks[10], (4 * hidden,), stdv),
        b_hh=_uniform(ks[11], (4 * hidden,), stdv),
    )
    lin_in = dict(w=_uniform(ks[12], (hidden, nx), 1.0 / math.sqrt(nx)),
                  b=_uniform(ks[13], (hidden,), 1.0 / math.sqrt(nx)))
    lin_out = dict(w=_uniform(ks[14], (ny, hidden), 1.0 / math.sqrt(hidden)),
                   b=_uniform(ks[15], (ny,), 1.0 / math.sqrt(hidden)))
    return dict(cnn=cnn, lstm=lstm, lin_in=lin_in, lin_out=lin_out)


if __name__ == "__main__":
    # Small config consistent with the module: batch=2, channels(nx)=4,
    # conditioner length ct=16, sequence length T=8, hidden=32, ny=2, opt=1.
    nx, ny, ct = 4, 2, 16
    hiddenSize = 32
    B, T = 2, 8

    key = jax.random.PRNGKey(0)
    kp, kx, kc = jax.random.split(key, 3)

    params = init_lstm_cnn_cond(kp, nx=nx, ny=ny, ct=ct, hidden=hiddenSize)
    x = jax.random.normal(kx, (T, B, nx), jnp.float32)    # LSTM driver sequence
    xc = jax.random.normal(kc, (ct, B, nx), jnp.float32)  # CNN conditioner input

    fwd = jax.jit(lstm_cnn_cond_forward)
    out = fwd(x, xc, params)
    jax.block_until_ready(out)

    assert out.shape == (T, B, ny), out.shape
    assert out.dtype == jnp.float32
    assert bool(jnp.all(jnp.isfinite(out)))

    # tolerance-checked reference (bf16 matmul operands -> loose tolerance)
    ref = _reference_forward(x, xc, params)
    err = float(jnp.max(jnp.abs(out - ref)))
    assert err < 1e-1, f"max abs err vs f32 reference: {err}"

    print("KERNEL_OK")
</pallas_src>

<mosaic_0001>
module attributes {stable_mosaic.version = 11 : i64} {
  func.func @_matmul_bias_kernel(%arg0: i32, %arg1: memref<32x12xf32, #tpu.memory_space<vmem>>, %arg2: memref<12x128xbf16, #tpu.memory_space<vmem>>, %arg3: memref<1x128xf32, #tpu.memory_space<vmem>>, %arg4: memref<32x128xf32, #tpu.memory_space<vmem>>) attributes {dimension_semantics = [#tpu.dimension_semantics<parallel>], iteration_bounds = array<i64: 1>, scalar_prefetch = 0 : i64, scratch_operands = 0 : i64, tpu.core_type = #tpu.core_type<tc>, window_params = [{transform_indices = @transform_0, window_bounds = array<i64: 32, 12>}, {pipeline_mode = #tpu.pipeline_mode<synchronous>, transform_indices = @transform_1, window_bounds = array<i64: 12, 128>}, {pipeline_mode = #tpu.pipeline_mode<synchronous>, transform_indices = @transform_2, window_bounds = array<i64: 1, 128>}, {transform_indices = @transform_3, window_bounds = array<i64: 32, 128>}]} {
    %c0 = arith.constant 0 : index
    %c0_0 = arith.constant 0 : index
    %0 = vector.load %arg1[%c0, %c0_0] : memref<32x12xf32, #tpu.memory_space<vmem>>, vector<32x12xf32>
    %1 = arith.truncf %0 : vector<32x12xf32> to vector<32x12xbf16>
    %c0_1 = arith.constant 0 : index
    %c0_2 = arith.constant 0 : index
    %2 = vector.load %arg2[%c0_1, %c0_2] : memref<12x128xbf16, #tpu.memory_space<vmem>>, vector<12x128xbf16>
    %cst = arith.constant dense<0.000000e+00> : vector<32x128xf32>
    %3 = tpu.matmul %1, %2, %cst {dimension_numbers = #tpu.dot_dimension_numbers<[1], [0], [0], [1], [0, 0, 1, 1], [], []>} : vector<32x12xbf16>, vector<12x128xbf16>, vector<32x128xf32> -> vector<32x128xf32>
    %c0_3 = arith.constant 0 : index
    %c0_4 = arith.constant 0 : index
    %4 = vector.load %arg3[%c0_3, %c0_4] : memref<1x128xf32, #tpu.memory_space<vmem>>, vector<1x128xf32>
    %5 = vector.broadcast %4 : vector<1x128xf32> to vector<32x128xf32>
    %6 = arith.addf %3, %5 : vector<32x128xf32>
    %cst_5 = arith.constant 0.000000e+00 : f32
    %7 = vector.broadcast %cst_5 : f32 to vector<32x128xf32>
    %8 = arith.maximumf %6, %7 : vector<32x128xf32>
    %c0_6 = arith.constant 0 : index
    %c0_7 = arith.constant 0 : index
    %9 = vector.load %arg4[%c0_6, %c0_7] : memref<32x128xf32, #tpu.memory_space<vmem>>, vector<32x128xf32>
    tpu.vector_store %arg4[%c0_6, %c0_7], %8 {strides = array<i32>} : memref<32x128xf32, #tpu.memory_space<vmem>>, vector<32x128xf32>,
    return
  }
  func.func @transform_0(%arg0: i32) -> (i32, i32) {
    %c0_i32 = arith.constant 0 : i32
    %c0_i32_0 = arith.constant 0 : i32
    return %arg0, %c0_i32 : i32, i32
  }
  func.func @transform_1(%arg0: i32) -> (i32, i32) {
    %c0_i32 = arith.constant 0 : i32
    %c0_i32_0 = arith.constant 0 : i32
    %c0_i32_1 = arith.constant 0 : i32
    return %c0_i32, %c0_i32_0 : i32, i32
  }
  func.func @transform_2(%arg0: i32) -> (i32, i32) {
    %c0_i32 = arith.constant 0 : i32
    %c0_i32_0 = arith.constant 0 : i32
    %c0_i32_1 = arith.constant 0 : i32
    return %c0_i32, %c0_i32_0 : i32, i32
  }
  func.func @transform_3(%arg0: i32) -> (i32, i32) {
    %c0_i32 = arith.constant 0 : i32
    %c0_i32_0 = arith.constant 0 : i32
    return %arg0, %c0_i32 : i32, i32
  }
}

module attributes {stable_mosaic.version = 11 : i64} {
  func.func @_matmul_bias_kernel(%arg0: i32, %arg1: memref<8x320xf32, #tpu.memory_space<vmem>>, %arg2: memref<320x128xbf16, #tpu.memory_space<vmem>>, %arg3: memref<1x128xf32, #tpu.memory_space<vmem>>, %arg4: memref<8x128xf32, #tpu.memory_space<vmem>>) attributes {dimension_semantics = [#tpu.dimension_semantics<parallel>], iteration_bounds = array<i64: 1>, scalar_prefetch = 0 : i64, scratch_operands = 0 : i64, tpu.core_type = #tpu.core_type<tc>, window_params = [{transform_indices = @transform_0, window_bounds = array<i64: 8, 320>}, {pipeline_mode = #tpu.pipeline_mode<synchronous>, transform_indices = @transform_1, window_bounds = array<i64: 320, 128>}, {pipeline_mode = #tpu.pipeline_mode<synchronous>, transform_indices = @transform_2, window_bounds = array<i64: 1, 128>}, {transform_indices = @transform_3, window_bounds = array<i64: 8, 128>}]} {
    %c0 = arith.constant 0 : index
    %c0_0 = arith.constant 0 : index
    %0 = vector.load %arg1[%c0, %c0_0] : memref<8x320xf32, #tpu.memory_space<vmem>>, vector<8x320xf32>
    %1 = arith.truncf %0 : vector<8x320xf32> to vector<8x320xbf16>
    %c0_1 = arith.constant 0 : index
    %c0_2 = arith.constant 0 : index
    %2 = vector.load %arg2[%c0_1, %c0_2] : memref<320x128xbf16, #tpu.memory_space<vmem>>, vector<320x128xbf16>
    %cst = arith.constant dense<0.000000e+00> : vector<8x128xf32>
    %3 = tpu.matmul %1, %2, %cst {dimension_numbers = #tpu.dot_dimension_numbers<[1], [0], [0], [1], [0, 0, 1, 1], [], []>} : vector<8x320xbf16>, vector<320x128xbf16>, vector<8x128xf32> -> vector<8x128xf32>
    %c0_3 = arith.constant 0 : index
    %c0_4 = arith.constant 0 : index
    %4 = vector.load %arg3[%c0_3, %c0_4] : memref<1x128xf32, #tpu.memory_space<vmem>>, vector<1x128xf32>
    %5 = vector.broadcast %4 : vector<1x128xf32> to vector<8x128xf32>
    %6 = arith.addf %3, %5 : vector<8x128xf32>
    %cst_5 = arith.constant 0.000000e+00 : f32
    %7 = vector.broadcast %cst_5 : f32 to vector<8x128xf32>
    %8 = arith.maximumf %6, %7 : vector<8x128xf32>
    %c0_6 = arith.constant 0 : index
    %c0_7 = arith.constant 0 : index
    %9 = vector.load %arg4[%c0_6, %c0_7] : memref<8x128xf32, #tpu.memory_space<vmem>>, vector<8x128xf32>
    tpu.vector_store %arg4[%c0_6, %c0_7], %8 {strides = array<i32>} : memref<8x128xf32, #tpu.memory_space<vmem>>, vector<8x128xf32>,
    return
  }
  func.func @transform_0(%arg0: i32) -> (i32, i32) {
    %c0_i32 = arith.constant 0 : i32
    %c0_i32_0 = arith.constant 0 : i32
    return %arg0, %c0_i32 : i32, i32
  }
  func.func @transform_1(%arg0: i32) -> (i32, i32) {
    %c0_i32 = arith.constant 0 : i32
    %c0_i32_0 = arith.constant 0 : i32
    %c0_i32_1 = arith.constant 0 : i32
    return %c0_i32, %c0_i32_0 : i32, i32
  }
  func.func @transform_2(%arg0: i32) -> (i32, i32) {
    %c0_i32 = arith.constant 0 : i32
    %c0_i32_0 = arith.constant 0 : i32
    %c0_i32_1 = arith.constant 0 : i32
    return %c0_i32, %c0_i32_0 : i32, i32
  }
  func.func @transform_3(%arg0: i32) -> (i32, i32) {
    %c0_i32 = arith.constant 0 : i32
    %c0_i32_0 = arith.constant 0 : i32
    return %arg0, %c0_i32 : i32, i32
  }
}

module attributes {stable_mosaic.version = 11 : i64} {
  func.func @_matmul_bias_kernel(%arg0: i32, %arg1: memref<8x128xf32, #tpu.memory_space<vmem>>, %arg2: memref<128x128xbf16, #tpu.memory_space<vmem>>, %arg3: memref<1x128xf32, #tpu.memory_space<vmem>>, %arg4: memref<8x128xf32, #tpu.memory_space<vmem>>) attributes {dimension_semantics = [#tpu.dimension_semantics<parallel>], iteration_bounds = array<i64: 1>, scalar_prefetch = 0 : i64, scratch_operands = 0 : i64, tpu.core_type = #tpu.core_type<tc>, window_params = [{transform_indices = @transform_0, window_bounds = array<i64: 8, 128>}, {pipeline_mode = #tpu.pipeline_mode<synchronous>, transform_indices = @transform_1, window_bounds = array<i64: 128, 128>}, {pipeline_mode = #tpu.pipeline_mode<synchronous>, transform_indices = @transform_2, window_bounds = array<i64: 1, 128>}, {transform_indices = @transform_3, window_bounds = array<i64: 8, 128>}]} {
    %c0 = arith.constant 0 : index
    %c0_0 = arith.constant 0 : index
    %0 = vector.load %arg1[%c0, %c0_0] : memref<8x128xf32, #tpu.memory_space<vmem>>, vector<8x128xf32>
    %1 = arith.truncf %0 : vector<8x128xf32> to vector<8x128xbf16>
    %c0_1 = arith.constant 0 : index
    %c0_2 = arith.constant 0 : index
    %2 = vector.load %arg2[%c0_1, %c0_2] : memref<128x128xbf16, #tpu.memory_space<vmem>>, vector<128x128xbf16>
    %cst = arith.constant dense<0.000000e+00> : vector<8x128xf32>
    %3 = tpu.matmul %1, %2, %cst {dimension_numbers = #tpu.dot_dimension_numbers<[1], [0], [0], [1], [0, 0, 1, 1], [], []>} : vector<8x128xbf16>, vector<128x128xbf16>, vector<8x128xf32> -> vector<8x128xf32>
    %c0_3 = arith.constant 0 : index
    %c0_4 = arith.constant 0 : index
    %4 = vector.load %arg3[%c0_3, %c0_4] : memref<1x128xf32, #tpu.memory_space<vmem>>, vector<1x128xf32>
    %5 = vector.broadcast %4 : vector<1x128xf32> to vector<8x128xf32>
    %6 = arith.addf %3, %5 : vector<8x128xf32>
    %cst_5 = arith.constant 0.000000e+00 : f32
    %7 = vector.broadcast %cst_5 : f32 to vector<8x128xf32>
    %8 = arith.maximumf %6, %7 : vector<8x128xf32>
    %c0_6 = arith.constant 0 : index
    %c0_7 = arith.constant 0 : index
    %9 = vector.load %arg4[%c0_6, %c0_7] : memref<8x128xf32, #tpu.memory_space<vmem>>, vector<8x128xf32>
    tpu.vector_store %arg4[%c0_6, %c0_7], %8 {strides = array<i32>} : memref<8x128xf32, #tpu.memory_space<vmem>>, vector<8x128xf32>,
    return
  }
  func.func @transform_0(%arg0: i32) -> (i32, i32) {
    %c0_i32 = arith.constant 0 : i32
    %c0_i32_0 = arith.constant 0 : i32
    return %arg0, %c0_i32 : i32, i32
  }
  func.func @transform_1(%arg0: i32) -> (i32, i32) {
    %c0_i32 = arith.constant 0 : i32
    %c0_i32_0 = arith.constant 0 : i32
    %c0_i32_1 = arith.constant 0 : i32
    return %c0_i32, %c0_i32_0 : i32, i32
  }
  func.func @transform_2(%arg0: i32) -> (i32, i32) {
    %c0_i32 = arith.constant 0 : i32
    %c0_i32_0 = arith.constant 0 : i32
    %c0_i32_1 = arith.constant 0 : i32
    return %c0_i32, %c0_i32_0 : i32, i32
  }
  func.func @transform_3(%arg0: i32) -> (i32, i32) {
    %c0_i32 = arith.constant 0 : i32
    %c0_i32_0 = arith.constant 0 : i32
    return %arg0, %c0_i32 : i32, i32
  }
}

module attributes {stable_mosaic.version = 11 : i64} {
  func.func @_matmul_bias_kernel(%arg0: i32, %arg1: memref<8x32xf32, #tpu.memory_space<vmem>>, %arg2: memref<32x128xbf16, #tpu.memory_space<vmem>>, %arg3: memref<1x128xf32, #tpu.memory_space<vmem>>, %arg4: memref<8x128xf32, #tpu.memory_space<vmem>>) attributes {dimension_semantics = [#tpu.dimension_semantics<parallel>], iteration_bounds = array<i64: 1>, scalar_prefetch = 0 : i64, scratch_operands = 0 : i64, tpu.core_type = #tpu.core_type<tc>, window_params = [{transform_indices = @transform_0, window_bounds = array<i64: 8, 32>}, {pipeline_mode = #tpu.pipeline_mode<synchronous>, transform_indices = @transform_1, window_bounds = array<i64: 32, 128>}, {pipeline_mode = #tpu.pipeline_mode<synchronous>, transform_indices = @transform_2, window_bounds = array<i64: 1, 128>}, {transform_indices = @transform_3, window_bounds = array<i64: 8, 128>}]} {
    %c0 = arith.constant 0 : index
    %c0_0 = arith.constant 0 : index
    %0 = vector.load %arg1[%c0, %c0_0] : memref<8x32xf32, #tpu.memory_space<vmem>>, vector<8x32xf32>
    %1 = arith.truncf %0 : vector<8x32xf32> to vector<8x32xbf16>
    %c0_1 = arith.constant 0 : index
    %c0_2 = arith.constant 0 : index
    %2 = vector.load %arg2[%c0_1, %c0_2] : memref<32x128xbf16, #tpu.memory_space<vmem>>, vector<32x128xbf16>
    %cst = arith.constant dense<0.000000e+00> : vector<8x128xf32>
    %3 = tpu.matmul %1, %2, %cst {dimension_numbers = #tpu.dot_dimension_numbers<[1], [0], [0], [1], [0, 0, 1, 1], [], []>} : vector<8x32xbf16>, vector<32x128xbf16>, vector<8x128xf32> -> vector<8x128xf32>
    %c0_3 = arith.constant 0 : index
    %c0_4 = arith.constant 0 : index
    %4 = vector.load %arg3[%c0_3, %c0_4] : memref<1x128xf32, #tpu.memory_space<vmem>>, vector<1x128xf32>
    %5 = vector.broadcast %4 : vector<1x128xf32> to vector<8x128xf32>
    %6 = arith.addf %3, %5 : vector<8x128xf32>
    %c0_5 = arith.constant 0 : index
    %c0_6 = arith.constant 0 : index
    %7 = vector.load %arg4[%c0_5, %c0_6] : memref<8x128xf32, #tpu.memory_space<vmem>>, vector<8x128xf32>
    tpu.vector_store %arg4[%c0_5, %c0_6], %6 {strides = array<i32>} : memref<8x128xf32, #tpu.memory_space<vmem>>, vector<8x128xf32>,
    return
  }
  func.func @transform_0(%arg0: i32) -> (i32, i32) {
    %c0_i32 = arith.constant 0 : i32
    %c0_i32_0 = arith.constant 0 : i32
    return %arg0, %c0_i32 : i32, i32
  }
  func.func @transform_1(%arg0: i32) -> (i32, i32) {
    %c0_i32 = arith.constant 0 : i32
    %c0_i32_0 = arith.constant 0 : i32
    %c0_i32_1 = arith.constant 0 : i32
    return %c0_i32, %c0_i32_0 : i32, i32
  }
  func.func @transform_2(%arg0: i32) -> (i32, i32) {
    %c0_i32 = arith.constant 0 : i32
    %c0_i32_0 = arith.constant 0 : i32
    %c0_i32_1 = arith.constant 0 : i32
    return %c0_i32, %c0_i32_0 : i32, i32
  }
  func.func @transform_3(%arg0: i32) -> (i32, i32) {
    %c0_i32 = arith.constant 0 : i32
    %c0_i32_0 = arith.constant 0 : i32
    return %arg0, %c0_i32 : i32, i32
  }
}

module attributes {stable_mosaic.version = 11 : i64} {
  func.func @_lstm_fused_kernel(%arg0: i32, %arg1: memref<64x4xf32, #tpu.memory_space<vmem>>, %arg2: memref<4x128xbf16, #tpu.memory_space<vmem>>, %arg3: memref<1x128xf32, #tpu.memory_space<vmem>>, %arg4: memref<128x512xbf16, #tpu.memory_space<vmem>>, %arg5: memref<1x512xf32, #tpu.memory_space<vmem>>, %arg6: memref<128x512xbf16, #tpu.memory_space<vmem>>, %arg7: memref<128x128xbf16, #tpu.memory_space<vmem>>, %arg8: memref<1x128xf32, #tpu.memory_space<vmem>>, %arg9: memref<8x128xf32, #tpu.memory_space<vmem>>, %arg10: memref<64x128xf32, #tpu.memory_space<vmem>>, %arg11: memref<8x128xf32, #tpu.memory_space<vmem>>, %arg12: memref<8x128xf32, #tpu.memory_space<vmem>>, %arg13: memref<64x512xf32, #tpu.memory_space<vmem>>, %arg14: memref<64x128xf32, #tpu.memory_space<vmem>>) attributes {dimension_semantics = [#tpu.dimension_semantics<arbitrary>], iteration_bounds = array<i64: 1>, scalar_prefetch = 0 : i64, scratch_operands = 4 : i64, tpu.core_type = #tpu.core_type<tc>, window_params = [{transform_indices = @transform_0, window_bounds = array<i64: 64, 4>}, {pipeline_mode = #tpu.pipeline_mode<synchronous>, transform_indices = @transform_1, window_bounds = array<i64: 4, 128>}, {pipeline_mode = #tpu.pipeline_mode<synchronous>, transform_indices = @transform_2, window_bounds = array<i64: 1, 128>}, {pipeline_mode = #tpu.pipeline_mode<synchronous>, transform_indices = @transform_3, window_bounds = array<i64: 128, 512>}, {pipeline_mode = #tpu.pipeline_mode<synchronous>, transform_indices = @transform_4, window_bounds = array<i64: 1, 512>}, {pipeline_mode = #tpu.pipeline_mode<synchronous>, transform_indices = @transform_5, window_bounds = array<i64: 128, 512>}, {pipeline_mode = #tpu.pipeline_mode<synchronous>, transform_indices = @transform_6, window_bounds = array<i64: 128, 128>}, {pipeline_mode = #tpu.pipeline_mode<synchronous>, transform_indices = @transform_7, window_bounds = array<i64: 1, 128>}, {pipeline_mode = #tpu.pipeline_mode<synchronous>, transform_indices = @transform_8, window_bounds = array<i64: 8, 128>}, {transform_indices = @transform_9, window_bounds = array<i64: 64, 128>}]} {
    %c0_i32 = arith.constant 0 : i32
    %0 = arith.cmpi eq, %arg0, %c0_i32 : i32
    %1 = arith.extui %0 : i1 to i32
    %c0_i32_0 = arith.constant 0 : i32
    %2 = arith.cmpi ne, %1, %c0_i32_0 : i32
    scf.if %2 {
      %c0_146 = arith.constant 0 : index
      %c0_147 = arith.constant 0 : index
      %332 = vector.load %arg9[%c0_146, %c0_147] : memref<8x128xf32, #tpu.memory_space<vmem>>, vector<8x128xf32>
      %c0_148 = arith.constant 0 : index
      %c0_149 = arith.constant 0 : index
      %333 = vector.load %arg11[%c0_148, %c0_149] : memref<8x128xf32, #tpu.memory_space<vmem>>, vector<8x128xf32>
      tpu.vector_store %arg11[%c0_148, %c0_149], %332 {strides = array<i32>} : memref<8x128xf32, #tpu.memory_space<vmem>>, vector<8x128xf32>,
      %cst_150 = arith.constant 0.000000e+00 : f32
      %334 = vector.broadcast %cst_150 : f32 to vector<8x128xf32>
      %c0_151 = arith.constant 0 : index
      %c0_152 = arith.constant 0 : index
      %335 = vector.load %arg12[%c0_151, %c0_152] : memref<8x128xf32, #tpu.memory_space<vmem>>, vector<8x128xf32>
      tpu.vector_store %arg12[%c0_151, %c0_152], %334 {strides = array<i32>} : memref<8x128xf32, #tpu.memory_space<vmem>>, vector<8x128xf32>,
    } else {
    }
    %c0 = arith.constant 0 : index
    %c0_1 = arith.constant 0 : index
    %3 = vector.load %arg1[%c0, %c0_1] : memref<64x4xf32, #tpu.memory_space<vmem>>, vector<64x4xf32>
    %4 = arith.truncf %3 : vector<64x4xf32> to vector<64x4xbf16>
    %c0_2 = arith.constant 0 : index
    %c0_3 = arith.constant 0 : index
    %5 = vector.load %arg2[%c0_2, %c0_3] : memref<4x128xbf16, #tpu.memory_space<vmem>>, vector<4x128xbf16>
    %cst = arith.constant dense<0.000000e+00> : vector<64x128xf32>
    %6 = tpu.matmul %4, %5, %cst {dimension_numbers = #tpu.dot_dimension_numbers<[1], [0], [0], [1], [0, 0, 1, 1], [], []>} : vector<64x4xbf16>, vector<4x128xbf16>, vector<64x128xf32> -> vector<64x128xf32>
    %c0_4 = arith.constant 0 : index
    %c0_5 = arith.constant 0 : index
    %7 = vector.load %arg3[%c0_4, %c0_5] : memref<1x128xf32, #tpu.memory_space<vmem>>, vector<1x128xf32>
    %8 = vector.broadcast %7 : vector<1x128xf32> to vector<64x128xf32>
    %9 = arith.addf %6, %8 : vector<64x128xf32>
    %cst_6 = arith.constant 0.000000e+00 : f32
    %10 = vector.broadcast %cst_6 : f32 to vector<64x128xf32>
    %11 = arith.maximumf %9, %10 : vector<64x128xf32>
    %12 = arith.truncf %11 : vector<64x128xf32> to vector<64x128xbf16>
    %c0_7 = arith.constant 0 : index
    %c0_8 = arith.constant 0 : index
    %13 = vector.load %arg4[%c0_7, %c0_8] : memref<128x512xbf16, #tpu.memory_space<vmem>>, vector<128x512xbf16>
    %cst_9 = arith.constant dense<0.000000e+00> : vector<64x512xf32>
    %14 = tpu.matmul %12, %13, %cst_9 {dimension_numbers = #tpu.dot_dimension_numbers<[1], [0], [0], [1], [0, 0, 1, 1], [], []>} : vector<64x128xbf16>, vector<128x512xbf16>, vector<64x512xf32> -> vector<64x512xf32>
    %c0_10 = arith.constant 0 : index
    %c0_11 = arith.constant 0 : index
    %15 = vector.load %arg5[%c0_10, %c0_11] : memref<1x512xf32, #tpu.memory_space<vmem>>, vector<1x512xf32>
    %16 = vector.broadcast %15 : vector<1x512xf32> to vector<64x512xf32>
    %17 = arith.addf %14, %16 : vector<64x512xf32>
    %c0_12 = arith.constant 0 : index
    %c0_13 = arith.constant 0 : index
    %18 = vector.load %arg13[%c0_12, %c0_13] : memref<64x512xf32, #tpu.memory_space<vmem>>, vector<64x512xf32>
    tpu.vector_store %arg13[%c0_12, %c0_13], %17 {strides = array<i32>} : memref<64x512xf32, #tpu.memory_space<vmem>>, vector<64x512xf32>,
    %c0_14 = arith.constant 0 : index
    %c0_15 = arith.constant 0 : index
    %19 = vector.load %arg6[%c0_14, %c0_15] : memref<128x512xbf16, #tpu.memory_space<vmem>>, vector<128x512xbf16>
    %c0_i32_16 = arith.constant 0 : i32
    %c8_i32 = arith.constant 8 : i32
    %20 = arith.muli %c0_i32_16, %c8_i32 : i32
    %21 = tpu.assume_multiple %20, 8 : i32
    %c0_17 = arith.constant 0 : index
    %c0_18 = arith.constant 0 : index
    %22 = vector.load %arg11[%c0_17, %c0_18] : memref<8x128xf32, #tpu.memory_space<vmem>>, vector<8x128xf32>
    %c0_19 = arith.constant 0 : index
    %c0_20 = arith.constant 0 : index
    %23 = vector.load %arg12[%c0_19, %c0_20] : memref<8x128xf32, #tpu.memory_space<vmem>>, vector<8x128xf32>
    %24 = arith.index_cast %21 : i32 to index
    %c0_21 = arith.constant 0 : index
    %25 = vector.load %arg13[%24, %c0_21] : memref<64x512xf32, #tpu.memory_space<vmem>>, vector<8x512xf32>
    %26 = arith.truncf %22 : vector<8x128xf32> to vector<8x128xbf16>
    %cst_22 = arith.constant dense<0.000000e+00> : vector<8x512xf32>
    %27 = tpu.matmul %26, %19, %cst_22 {dimension_numbers = #tpu.dot_dimension_numbers<[1], [0], [0], [1], [0, 0, 1, 1], [], []>} : vector<8x128xbf16>, vector<128x512xbf16>, vector<8x512xf32> -> vector<8x512xf32>
    %28 = arith.addf %25, %27 : vector<8x512xf32>
    %29 = vector.extract_strided_slice %28 {offsets = [0, 0], sizes = [8, 128], strides = [1, 1]} : vector<8x512xf32> to vector<8x128xf32>
    %30 = arith.negf %29 : vector<8x128xf32>
    %31 = math.exp %30 : vector<8x128xf32>
    %cst_23 = arith.constant 1.000000e+00 : f32
    %32 = vector.broadcast %cst_23 : f32 to vector<8x128xf32>
    %33 = arith.addf %32, %31 : vector<8x128xf32>
    %34 = arith.divf %32, %33 : vector<8x128xf32>
    %35 = vector.extract_strided_slice %28 {offsets = [0, 128], sizes = [8, 128], strides = [1, 1]} : vector<8x512xf32> to vector<8x128xf32>
    %36 = arith.negf %35 : vector<8x128xf32>
    %37 = math.exp %36 : vector<8x128xf32>
    %cst_24 = arith.constant 1.000000e+00 : f32
    %38 = vector.broadcast %cst_24 : f32 to vector<8x128xf32>
    %39 = arith.addf %38, %37 : vector<8x128xf32>
    %40 = arith.divf %38, %39 : vector<8x128xf32>
    %41 = vector.extract_strided_slice %28 {offsets = [0, 256], sizes = [8, 128], strides = [1, 1]} : vector<8x512xf32> to vector<8x128xf32>
    %42 = math.tanh %41 : vector<8x128xf32>
    %43 = vector.extract_strided_slice %28 {offsets = [0, 384], sizes = [8, 128], strides = [1, 1]} : vector<8x512xf32> to vector<8x128xf32>
    %44 = arith.negf %43 : vector<8x128xf32>
    %45 = math.exp %44 : vector<8x128xf32>
    %cst_25 = arith.constant 1.000000e+00 : f32
    %46 = vector.broadcast %cst_25 : f32 to vector<8x128xf32>
    %47 = arith.addf %46, %45 : vector<8x128xf32>
    %48 = arith.divf %46, %47 : vector<8x128xf32>
    %49 = arith.mulf %40, %23 : vector<8x128xf32>
    %50 = arith.mulf %34, %42 : vector<8x128xf32>
    %51 = arith.addf %49, %50 : vector<8x128xf32>
    %52 = math.tanh %51 : vector<8x128xf32>
    %53 = arith.mulf %48, %52 : vector<8x128xf32>
    %c0_26 = arith.constant 0 : index
    %c0_27 = arith.constant 0 : index
    %54 = vector.load %arg11[%c0_26, %c0_27] : memref<8x128xf32, #tpu.memory_space<vmem>>, vector<8x128xf32>
    tpu.vector_store %arg11[%c0_26, %c0_27], %53 {strides = array<i32>} : memref<8x128xf32, #tpu.memory_space<vmem>>, vector<8x128xf32>,
    %c0_28 = arith.constant 0 : index
    %c0_29 = arith.constant 0 : index
    %55 = vector.load %arg12[%c0_28, %c0_29] : memref<8x128xf32, #tpu.memory_space<vmem>>, vector<8x128xf32>
    tpu.vector_store %arg12[%c0_28, %c0_29], %51 {strides = array<i32>} : memref<8x128xf32, #tpu.memory_space<vmem>>, vector<8x128xf32>,
    %56 = arith.index_cast %21 : i32 to index
    %c0_30 = arith.constant 0 : index
    %57 = vector.load %arg14[%56, %c0_30] : memref<64x128xf32, #tpu.memory_space<vmem>>, vector<8x128xf32>
    tpu.vector_store %arg14[%56, %c0_30], %53 {strides = array<i32>} : memref<64x128xf32, #tpu.memory_space<vmem>>, vector<8x128xf32>,
    %c1_i32 = arith.constant 1 : i32
    %c8_i32_31 = arith.constant 8 : i32
    %58 = arith.muli %c1_i32, %c8_i32_31 : i32
    %59 = tpu.assume_multiple %58, 8 : i32
    %c0_32 = arith.constant 0 : index
    %c0_33 = arith.constant 0 : index
    %60 = vector.load %arg11[%c0_32, %c0_33] : memref<8x128xf32, #tpu.memory_space<vmem>>, vector<8x128xf32>
    %c0_34 = arith.constant 0 : index
    %c0_35 = arith.constant 0 : index
    %61 = vector.load %arg12[%c0_34, %c0_35] : memref<8x128xf32, #tpu.memory_space<vmem>>, vector<8x128xf32>
    %62 = arith.index_cast %59 : i32 to index
    %c0_36 = arith.constant 0 : index
    %63 = vector.load %arg13[%62, %c0_36] : memref<64x512xf32, #tpu.memory_space<vmem>>, vector<8x512xf32>
    %64 = arith.truncf %60 : vector<8x128xf32> to vector<8x128xbf16>
    %cst_37 = arith.constant dense<0.000000e+00> : vector<8x512xf32>
    %65 = tpu.matmul %64, %19, %cst_37 {dimension_numbers = #tpu.dot_dimension_numbers<[1], [0], [0], [1], [0, 0, 1, 1], [], []>} : vector<8x128xbf16>, vector<128x512xbf16>, vector<8x512xf32> -> vector<8x512xf32>
    %66 = arith.addf %63, %65 : vector<8x512xf32>
    %67 = vector.extract_strided_slice %66 {offsets = [0, 0], sizes = [8, 128], strides = [1, 1]} : vector<8x512xf32> to vector<8x128xf32>
    %68 = arith.negf %67 : vector<8x128xf32>
    %69 = math.exp %68 : vector<8x128xf32>
    %cst_38 = arith.constant 1.000000e+00 : f32
    %70 = vector.broadcast %cst_38 : f32 to vector<8x128xf32>
    %71 = arith.addf %70, %69 : vector<8x128xf32>
    %72 = arith.divf %70, %71 : vector<8x128xf32>
    %73 = vector.extract_strided_slice %66 {offsets = [0, 128], sizes = [8, 128], strides = [1, 1]} : vector<8x512xf32> to vector<8x128xf32>
    %74 = arith.negf %73 : vector<8x128xf32>
    %75 = math.exp %74 : vector<8x128xf32>
    %cst_39 = arith.constant 1.000000e+00 : f32
    %76 = vector.broadcast %cst_39 : f32 to vector<8x128xf32>
    %77 = arith.addf %76, %75 : vector<8x128xf32>
    %78 = arith.divf %76, %77 : vector<8x128xf32>
    %79 = vector.extract_strided_slice %66 {offsets = [0, 256], sizes = [8, 128], strides = [1, 1]} : vector<8x512xf32> to vector<8x128xf32>
    %80 = math.tanh %79 : vector<8x128xf32>
    %81 = vector.extract_strided_slice %66 {offsets = [0, 384], sizes = [8, 128], strides = [1, 1]} : vector<8x512xf32> to vector<8x128xf32>
    %82 = arith.negf %81 : vector<8x128xf32>
    %83 = math.exp %82 : vector<8x128xf32>
    %cst_40 = arith.constant 1.000000e+00 : f32
    %84 = vector.broadcast %cst_40 : f32 to vector<8x128xf32>
    %85 = arith.addf %84, %83 : vector<8x128xf32>
    %86 = arith.divf %84, %85 : vector<8x128xf32>
    %87 = arith.mulf %78, %61 : vector<8x128xf32>
    %88 = arith.mulf %72, %80 : vector<8x128xf32>
    %89 = arith.addf %87, %88 : vector<8x128xf32>
    %90 = math.tanh %89 : vector<8x128xf32>
    %91 = arith.mulf %86, %90 : vector<8x128xf32>
    %c0_41 = arith.constant 0 : index
    %c0_42 = arith.constant 0 : index
    %92 = vector.load %arg11[%c0_41, %c0_42] : memref<8x128xf32, #tpu.memory_space<vmem>>, vector<8x128xf32>
    tpu.vector_store %arg11[%c0_41, %c0_42], %91 {strides = array<i32>} : memref<8x128xf32, #tpu.memory_space<vmem>>, vector<8x128xf32>,
    %c0_43 = arith.constant 0 : index
    %c0_44 = arith.constant 0 : index
    %93 = vector.load %arg12[%c0_43, %c0_44] : memref<8x128xf32, #tpu.memory_space<vmem>>, vector<8x128xf32>
    tpu.vector_store %arg12[%c0_43, %c0_44], %89 {strides = array<i32>} : memref<8x128xf32, #tpu.memory_space<vmem>>, vector<8x128xf32>,
    %94 = arith.index_cast %59 : i32 to index
    %c0_45 = arith.constant 0 : index
    %95 = vector.load %arg14[%94, %c0_45] : memref<64x128xf32, #tpu.memory_space<vmem>>, vector<8x128xf32>
    tpu.vector_store %arg14[%94, %c0_45], %91 {strides = array<i32>} : memref<64x128xf32, #tpu.memory_space<vmem>>, vector<8x128xf32>,
    %c2_i32 = arith.constant 2 : i32
    %c8_i32_46 = arith.constant 8 : i32
    %96 = arith.muli %c2_i32, %c8_i32_46 : i32
    %97 = tpu.assume_multiple %96, 8 : i32
    %c0_47 = arith.constant 0 : index
    %c0_48 = arith.constant 0 : index
    %98 = vector.load %arg11[%c0_47, %c0_48] : memref<8x128xf32, #tpu.memory_space<vmem>>, vector<8x128xf32>
    %c0_49 = arith.constant 0 : index
    %c0_50 = arith.constant 0 : index
    %99 = vector.load %arg12[%c0_49, %c0_50] : memref<8x128xf32, #tpu.memory_space<vmem>>, vector<8x128xf32>
    %100 = arith.index_cast %97 : i32 to index
    %c0_51 = arith.constant 0 : index
    %101 = vector.load %arg13[%100, %c0_51] : memref<64x512xf32, #tpu.memory_space<vmem>>, vector<8x512xf32>
    %102 = arith.truncf %98 : vector<8x128xf32> to vector<8x128xbf16>
    %cst_52 = arith.constant dense<0.000000e+00> : vector<8x512xf32>
    %103 = tpu.matmul %102, %19, %cst_52 {dimension_numbers = #tpu.dot_dimension_numbers<[1], [0], [0], [1], [0, 0, 1, 1], [], []>} : vector<8x128xbf16>, vector<128x512xbf16>, vector<8x512xf32> -> vector<8x512xf32>
    %104 = arith.addf %101, %103 : vector<8x512xf32>
    %105 = vector.extract_strided_slice %104 {offsets = [0, 0], sizes = [8, 128], strides = [1, 1]} : vector<8x512xf32> to vector<8x128xf32>
    %106 = arith.negf %105 : vector<8x128xf32>
    %107 = math.exp %106 : vector<8x128xf32>
    %cst_53 = arith.constant 1.000000e+00 : f32
    %108 = vector.broadcast %cst_53 : f32 to vector<8x128xf32>
    %109 = arith.addf %108, %107 : vector<8x128xf32>
    %110 = arith.divf %108, %109 : vector<8x128xf32>
    %111 = vector.extract_strided_slice %104 {offsets = [0, 128], sizes = [8, 128], strides = [1, 1]} : vector<8x512xf32> to vector<8x128xf32>
    %112 = arith.negf %111 : vector<8x128xf32>
    %113 = math.exp %112 : vector<8x128xf32>
    %cst_54 = arith.constant 1.000000e+00 : f32
    %114 = vector.broadcast %cst_54 : f32 to vector<8x128xf32>
    %115 = arith.addf %114, %113 : vector<8x128xf32>
    %116 = arith.divf %114, %115 : vector<8x128xf32>
    %117 = vector.extract_strided_slice %104 {offsets = [0, 256], sizes = [8, 128], strides = [1, 1]} : vector<8x512xf32> to vector<8x128xf32>
    %118 = math.tanh %117 : vector<8x128xf32>
    %119 = vector.extract_strided_slice %104 {offsets = [0, 384], sizes = [8, 128], strides = [1, 1]} : vector<8x512xf32> to vector<8x128xf32>
    %120 = arith.negf %119 : vector<8x128xf32>
    %121 = math.exp %120 : vector<8x128xf32>
    %cst_55 = arith.constant 1.000000e+00 : f32
    %122 = vector.broadcast %cst_55 : f32 to vector<8x128xf32>
    %123 = arith.addf %122, %121 : vector<8x128xf32>
    %124 = arith.divf %122, %123 : vector<8x128xf32>
    %125 = arith.mulf %116, %99 : vector<8x128xf32>
    %126 = arith.mulf %110, %118 : vector<8x128xf32>
    %127 = arith.addf %125, %126 : vector<8x128xf32>
    %128 = math.tanh %127 : vector<8x128xf32>
    %129 = arith.mulf %124, %128 : vector<8x128xf32>
    %c0_56 = arith.constant 0 : index
    %c0_57 = arith.constant 0 : index
    %130 = vector.load %arg11[%c0_56, %c0_57] : memref<8x128xf32, #tpu.memory_space<vmem>>, vector<8x128xf32>
    tpu.vector_store %arg11[%c0_56, %c0_57], %129 {strides = array<i32>} : memref<8x128xf32, #tpu.memory_space<vmem>>, vector<8x128xf32>,
    %c0_58 = arith.constant 0 : index
    %c0_59 = arith.constant 0 : index
    %131 = vector.load %arg12[%c0_58, %c0_59] : memref<8x128xf32, #tpu.memory_space<vmem>>, vector<8x128xf32>
    tpu.vector_store %arg12[%c0_58, %c0_59], %127 {strides = array<i32>} : memref<8x128xf32, #tpu.memory_space<vmem>>, vector<8x128xf32>,
    %132 = arith.index_cast %97 : i32 to index
    %c0_60 = arith.constant 0 : index
    %133 = vector.load %arg14[%132, %c0_60] : memref<64x128xf32, #tpu.memory_space<vmem>>, vector<8x128xf32>
    tpu.vector_store %arg14[%132, %c0_60], %129 {strides = array<i32>} : memref<64x128xf32, #tpu.memory_space<vmem>>, vector<8x128xf32>,
    %c3_i32 = arith.constant 3 : i32
    %c8_i32_61 = arith.constant 8 : i32
    %134 = arith.muli %c3_i32, %c8_i32_61 : i32
    %135 = tpu.assume_multiple %134, 8 : i32
    %c0_62 = arith.constant 0 : index
    %c0_63 = arith.constant 0 : index
    %136 = vector.load %arg11[%c0_62, %c0_63] : memref<8x128xf32, #tpu.memory_space<vmem>>, vector<8x128xf32>
    %c0_64 = arith.constant 0 : index
    %c0_65 = arith.constant 0 : index
    %137 = vector.load %arg12[%c0_64, %c0_65] : memref<8x128xf32, #tpu.memory_space<vmem>>, vector<8x128xf32>
    %138 = arith.index_cast %135 : i32 to index
    %c0_66 = arith.constant 0 : index
    %139 = vector.load %arg13[%138, %c0_66] : memref<64x512xf32, #tpu.memory_space<vmem>>, vector<8x512xf32>
    %140 = arith.truncf %136 : vector<8x128xf32> to vector<8x128xbf16>
    %cst_67 = arith.constant dense<0.000000e+00> : vector<8x512xf32>
    %141 = tpu.matmul %140, %19, %cst_67 {dimension_numbers = #tpu.dot_dimension_numbers<[1], [0], [0], [1], [0, 0, 1, 1], [], []>} : vector<8x128xbf16>, vector<128x512xbf16>, vector<8x512xf32> -> vector<8x512xf32>
    %142 = arith.addf %139, %141 : vector<8x512xf32>
    %143 = vector.extract_strided_slice %142 {offsets = [0, 0], sizes = [8, 128], strides = [1, 1]} : vector<8x512xf32> to vector<8x128xf32>
    %144 = arith.negf %143 : vector<8x128xf32>
    %145 = math.exp %144 : vector<8x128xf32>
    %cst_68 = arith.constant 1.000000e+00 : f32
    %146 = vector.broadcast %cst_68 : f32 to vector<8x128xf32>
    %147 = arith.addf %146, %145 : vector<8x128xf32>
    %148 = arith.divf %146, %147 : vector<8x128xf32>
    %149 = vector.extract_strided_slice %142 {offsets = [0, 128], sizes = [8, 128], strides = [1, 1]} : vector<8x512xf32> to vector<8x128xf32>
    %150 = arith.negf %149 : vector<8x128xf32>
    %151 = math.exp %150 : vector<8x128xf32>
    %cst_69 = arith.constant 1.000000e+00 : f32
    %152 = vector.broadcast %cst_69 : f32 to vector<8x128xf32>
    %153 = arith.addf %152, %151 : vector<8x128xf32>
    %154 = arith.divf %152, %153 : vector<8x128xf32>
    %155 = vector.extract_strided_slice %142 {offsets = [0, 256], sizes = [8, 128], strides = [1, 1]} : vector<8x512xf32> to vector<8x128xf32>
    %156 = math.tanh %155 : vector<8x128xf32>
    %157 = vector.extract_strided_slice %142 {offsets = [0, 384], sizes = [8, 128], strides = [1, 1]} : vector<8x512xf32> to vector<8x128xf32>
    %158 = arith.negf %157 : vector<8x128xf32>
    %159 = math.exp %158 : vector<8x128xf32>
    %cst_70 = arith.constant 1.000000e+00 : f32
    %160 = vector.broadcast %cst_70 : f32 to vector<8x128xf32>
    %161 = arith.addf %160, %159 : vector<8x128xf32>
    %162 = arith.divf %160, %161 : vector<8x128xf32>
    %163 = arith.mulf %154, %137 : vector<8x128xf32>
    %164 = arith.mulf %148, %156 : vector<8x128xf32>
    %165 = arith.addf %163, %164 : vector<8x128xf32>
    %166 = math.tanh %165 : vector<8x128xf32>
    %167 = arith.mulf %162, %166 : vector<8x128xf32>
    %c0_71 = arith.constant 0 : index
    %c0_72 = arith.constant 0 : index
    %168 = vector.load %arg11[%c0_71, %c0_72] : memref<8x128xf32, #tpu.memory_space<vmem>>, vector<8x128xf32>
    tpu.vector_store %arg11[%c0_71, %c0_72], %167 {strides = array<i32>} : memref<8x128xf32, #tpu.memory_space<vmem>>, vector<8x128xf32>,
    %c0_73 = arith.constant 0 : index
    %c0_74 = arith.constant 0 : index
    %169 = vector.load %arg12[%c0_73, %c0_74] : memref<8x128xf32, #tpu.memory_space<vmem>>, vector<8x128xf32>
    tpu.vector_store %arg12[%c0_73, %c0_74], %165 {strides = array<i32>} : memref<8x128xf32, #tpu.memory_space<vmem>>, vector<8x128xf32>,
    %170 = arith.index_cast %135 : i32 to index
    %c0_75 = arith.constant 0 : index
    %171 = vector.load %arg14[%170, %c0_75] : memref<64x128xf32, #tpu.memory_space<vmem>>, vector<8x128xf32>
    tpu.vector_store %arg14[%170, %c0_75], %167 {strides = array<i32>} : memref<64x128xf32, #tpu.memory_space<vmem>>, vector<8x128xf32>,
    %c4_i32 = arith.constant 4 : i32
    %c8_i32_76 = arith.constant 8 : i32
    %172 = arith.muli %c4_i32, %c8_i32_76 : i32
    %173 = tpu.assume_multiple %172, 8 : i32
    %c0_77 = arith.constant 0 : index
    %c0_78 = arith.constant 0 : index
    %174 = vector.load %arg11[%c0_77, %c0_78] : memref<8x128xf32, #tpu.memory_space<vmem>>, vector<8x128xf32>
    %c0_79 = arith.constant 0 : index
    %c0_80 = arith.constant 0 : index
    %175 = vector.load %arg12[%c0_79, %c0_80] : memref<8x128xf32, #tpu.memory_space<vmem>>, vector<8x128xf32>
    %176 = arith.index_cast %173 : i32 to index
    %c0_81 = arith.constant 0 : index
    %177 = vector.load %arg13[%176, %c0_81] : memref<64x512xf32, #tpu.memory_space<vmem>>, vector<8x512xf32>
    %178 = arith.truncf %174 : vector<8x128xf32> to vector<8x128xbf16>
    %cst_82 = arith.constant dense<0.000000e+00> : vector<8x512xf32>
    %179 = tpu.matmul %178, %19, %cst_82 {dimension_numbers = #tpu.dot_dimension_numbers<[1], [0], [0], [1], [0, 0, 1, 1], [], []>} : vector<8x128xbf16>, vector<128x512xbf16>, vector<8x512xf32> -> vector<8x512xf32>
    %180 = arith.addf %177, %179 : vector<8x512xf32>
    %181 = vector.extract_strided_slice %180 {offsets = [0, 0], sizes = [8, 128], strides = [1, 1]} : vector<8x512xf32> to vector<8x128xf32>
    %182 = arith.negf %181 : vector<8x128xf32>
    %183 = math.exp %182 : vector<8x128xf32>
    %cst_83 = arith.constant 1.000000e+00 : f32
    %184 = vector.broadcast %cst_83 : f32 to vector<8x128xf32>
    %185 = arith.addf %184, %183 : vector<8x128xf32>
    %186 = arith.divf %184, %185 : vector<8x128xf32>
    %187 = vector.extract_strided_slice %180 {offsets = [0, 128], sizes = [8, 128], strides = [1, 1]} : vector<8x512xf32> to vector<8x128xf32>
    %188 = arith.negf %187 : vector<8x128xf32>
    %189 = math.exp %188 : vector<8x128xf32>
    %cst_84 = arith.constant 1.000000e+00 : f32
    %190 = vector.broadcast %cst_84 : f32 to vector<8x128xf32>
    %191 = arith.addf %190, %189 : vector<8x128xf32>
    %192 = arith.divf %190, %191 : vector<8x128xf32>
    %193 = vector.extract_strided_slice %180 {offsets = [0, 256], sizes = [8, 128], strides = [1, 1]} : vector<8x512xf32> to vector<8x128xf32>
    %194 = math.tanh %193 : vector<8x128xf32>
    %195 = vector.extract_strided_slice %180 {offsets = [0, 384], sizes = [8, 128], strides = [1, 1]} : vector<8x512xf32> to vector<8x128xf32>
    %196 = arith.negf %195 : vector<8x128xf32>
    %197 = math.exp %196 : vector<8x128xf32>
    %cst_85 = arith.constant 1.000000e+00 : f32
    %198 = vector.broadcast %cst_85 : f32 to vector<8x128xf32>
    %199 = arith.addf %198, %197 : vector<8x128xf32>
    %200 = arith.divf %198, %199 : vector<8x128xf32>
    %201 = arith.mulf %192, %175 : vector<8x128xf32>
    %202 = arith.mulf %186, %194 : vector<8x128xf32>
    %203 = arith.addf %201, %202 : vector<8x128xf32>
    %204 = math.tanh %203 : vector<8x128xf32>
    %205 = arith.mulf %200, %204 : vector<8x128xf32>
    %c0_86 = arith.constant 0 : index
    %c0_87 = arith.constant 0 : index
    %206 = vector.load %arg11[%c0_86, %c0_87] : memref<8x128xf32, #tpu.memory_space<vmem>>, vector<8x128xf32>
    tpu.vector_store %arg11[%c0_86, %c0_87], %205 {strides = array<i32>} : memref<8x128xf32, #tpu.memory_space<vmem>>, vector<8x128xf32>,
    %c0_88 = arith.constant 0 : index
    %c0_89 = arith.constant 0 : index
    %207 = vector.load %arg12[%c0_88, %c0_89] : memref<8x128xf32, #tpu.memory_space<vmem>>, vector<8x128xf32>
    tpu.vector_store %arg12[%c0_88, %c0_89], %203 {strides = array<i32>} : memref<8x128xf32, #tpu.memory_space<vmem>>, vector<8x128xf32>,
    %208 = arith.index_cast %173 : i32 to index
    %c0_90 = arith.constant 0 : index
    %209 = vector.load %arg14[%208, %c0_90] : memref<64x128xf32, #tpu.memory_space<vmem>>, vector<8x128xf32>
    tpu.vector_store %arg14[%208, %c0_90], %205 {strides = array<i32>} : memref<64x128xf32, #tpu.memory_space<vmem>>, vector<8x128xf32>,
    %c5_i32 = arith.constant 5 : i32
    %c8_i32_91 = arith.constant 8 : i32
    %210 = arith.muli %c5_i32, %c8_i32_91 : i32
    %211 = tpu.assume_multiple %210, 8 : i32
    %c0_92 = arith.constant 0 : index
    %c0_93 = arith.constant 0 : index
    %212 = vector.load %arg11[%c0_92, %c0_93] : memref<8x128xf32, #tpu.memory_space<vmem>>, vector<8x128xf32>
    %c0_94 = arith.constant 0 : index
    %c0_95 = arith.constant 0 : index
    %213 = vector.load %arg12[%c0_94, %c0_95] : memref<8x128xf32, #tpu.memory_space<vmem>>, vector<8x128xf32>
    %214 = arith.index_cast %211 : i32 to index
    %c0_96 = arith.constant 0 : index
    %215 = vector.load %arg13[%214, %c0_96] : memref<64x512xf32, #tpu.memory_space<vmem>>, vector<8x512xf32>
    %216 = arith.truncf %212 : vector<8x128xf32> to vector<8x128xbf16>
    %cst_97 = arith.constant dense<0.000000e+00> : vector<8x512xf32>
    %217 = tpu.matmul %216, %19, %cst_97 {dimension_numbers = #tpu.dot_dimension_numbers<[1], [0], [0], [1], [0, 0, 1, 1], [], []>} : vector<8x128xbf16>, vector<128x512xbf16>, vector<8x512xf32> -> vector<8x512xf32>
    %218 = arith.addf %215, %217 : vector<8x512xf32>
    %219 = vector.extract_strided_slice %218 {offsets = [0, 0], sizes = [8, 128], strides = [1, 1]} : vector<8x512xf32> to vector<8x128xf32>
    %220 = arith.negf %219 : vector<8x128xf32>
    %221 = math.exp %220 : vector<8x128xf32>
    %cst_98 = arith.constant 1.000000e+00 : f32
    %222 = vector.broadcast %cst_98 : f32 to vector<8x128xf32>
    %223 = arith.addf %222, %221 : vector<8x128xf32>
    %224 = arith.divf %222, %223 : vector<8x128xf32>
    %225 = vector.extract_strided_slice %218 {offsets = [0, 128], sizes = [8, 128], strides = [1, 1]} : vector<8x512xf32> to vector<8x128xf32>
    %226 = arith.negf %225 : vector<8x128xf32>
    %227 = math.exp %226 : vector<8x128xf32>
    %cst_99 = arith.constant 1.000000e+00 : f32
    %228 = vector.broadcast %cst_99 : f32 to vector<8x128xf32>
    %229 = arith.addf %228, %227 : vector<8x128xf32>
    %230 = arith.divf %228, %229 : vector<8x128xf32>
    %231 = vector.extract_strided_slice %218 {offsets = [0, 256], sizes = [8, 128], strides = [1, 1]} : vector<8x512xf32> to vector<8x128xf32>
    %232 = math.tanh %231 : vector<8x128xf32>
    %233 = vector.extract_strided_slice %218 {offsets = [0, 384], sizes = [8, 128], strides = [1, 1]} : vector<8x512xf32> to vector<8x128xf32>
    %234 = arith.negf %233 : vector<8x128xf32>
    %235 = math.exp %234 : vector<8x128xf32>
    %cst_100 = arith.constant 1.000000e+00 : f32
    %236 = vector.broadcast %cst_100 : f32 to vector<8x128xf32>
    %237 = arith.addf %236, %235 : vector<8x128xf32>
    %238 = arith.divf %236, %237 : vector<8x128xf32>
    %239 = arith.mulf %230, %213 : vector<8x128xf32>
    %240 = arith.mulf %224, %232 : vector<8x128xf32>
    %241 = arith.addf %239, %240 : vector<8x128xf32>
    %242 = math.tanh %241 : vector<8x128xf32>
    %243 = arith.mulf %238, %242 : vector<8x128xf32>
    %c0_101 = arith.constant 0 : index
    %c0_102 = arith.constant 0 : index
    %244 = vector.load %arg11[%c0_101, %c0_102] : memref<8x128xf32, #tpu.memory_space<vmem>>, vector<8x128xf32>
    tpu.vector_store %arg11[%c0_101, %c0_102], %243 {strides = array<i32>} : memref<8x128xf32, #tpu.memory_space<vmem>>, vector<8x128xf32>,
    %c0_103 = arith.constant 0 : index
    %c0_104 = arith.constant 0 : index
    %245 = vector.load %arg12[%c0_103, %c0_104] : memref<8x128xf32, #tpu.memory_space<vmem>>, vector<8x128xf32>
    tpu.vector_store %arg12[%c0_103, %c0_104], %241 {strides = array<i32>} : memref<8x128xf32, #tpu.memory_space<vmem>>, vector<8x128xf32>,
    %246 = arith.index_cast %211 : i32 to index
    %c0_105 = arith.constant 0 : index
    %247 = vector.load %arg14[%246, %c0_105] : memref<64x128xf32, #tpu.memory_space<vmem>>, vector<8x128xf32>
    tpu.vector_store %arg14[%246, %c0_105], %243 {strides = array<i32>} : memref<64x128xf32, #tpu.memory_space<vmem>>, vector<8x128xf32>,
    %c6_i32 = arith.constant 6 : i32
    %c8_i32_106 = arith.constant 8 : i32
    %248 = arith.muli %c6_i32, %c8_i32_106 : i32
    %249 = tpu.assume_multiple %248, 8 : i32
    %c0_107 = arith.constant 0 : index
    %c0_108 = arith.constant 0 : index
    %250 = vector.load %arg11[%c0_107, %c0_108] : memref<8x128xf32, #tpu.memory_space<vmem>>, vector<8x128xf32>
    %c0_109 = arith.constant 0 : index
    %c0_110 = arith.constant 0 : index
    %251 = vector.load %arg12[%c0_109, %c0_110] : memref<8x128xf32, #tpu.memory_space<vmem>>, vector<8x128xf32>
    %252 = arith.index_cast %249 : i32 to index
    %c0_111 = arith.constant 0 : index
    %253 = vector.load %arg13[%252, %c0_111] : memref<64x512xf32, #tpu.memory_space<vmem>>, vector<8x512xf32>
    %254 = arith.truncf %250 : vector<8x128xf32> to vector<8x128xbf16>
    %cst_112 = arith.constant dense<0.000000e+00> : vector<8x512xf32>
    %255 = tpu.matmul %254, %19, %cst_112 {dimension_numbers = #tpu.dot_dimension_numbers<[1], [0], [0], [1], [0, 0, 1, 1], [], []>} : vector<8x128xbf16>, vector<128x512xbf16>, vector<8x512xf32> -> vector<8x512xf32>
    %256 = arith.addf %253, %255 : vector<8x512xf32>
    %257 = vector.extract_strided_slice %256 {offsets = [0, 0], sizes = [8, 128], strides = [1, 1]} : vector<8x512xf32> to vector<8x128xf32>
    %258 = arith.negf %257 : vector<8x128xf32>
    %259 = math.exp %258 : vector<8x128xf32>
    %cst_113 = arith.constant 1.000000e+00 : f32
    %260 = vector.broadcast %cst_113 : f32 to vector<8x128xf32>
    %261 = arith.addf %260, %259 : vector<8x128xf32>
    %262 = arith.divf %260, %261 : vector<8x128xf32>
    %263 = vector.extract_strided_slice %256 {offsets = [0, 128], sizes = [8, 128], strides = [1, 1]} : vector<8x512xf32> to vector<8x128xf32>
    %264 = arith.negf %263 : vector<8x128xf32>
    %265 = math.exp %264 : vector<8x128xf32>
    %cst_114 = arith.constant 1.000000e+00 : f32
    %266 = vector.broadcast %cst_114 : f32 to vector<8x128xf32>
    %267 = arith.addf %266, %265 : vector<8x128xf32>
    %268 = arith.divf %266, %267 : vector<8x128xf32>
    %269 = vector.extract_strided_slice %256 {offsets = [0, 256], sizes = [8, 128], strides = [1, 1]} : vector<8x512xf32> to vector<8x128xf32>
    %270 = math.tanh %269 : vector<8x128xf32>
    %271 = vector.extract_strided_slice %256 {offsets = [0, 384], sizes = [8, 128], strides = [1, 1]} : vector<8x512xf32> to vector<8x128xf32>
    %272 = arith.negf %271 : vector<8x128xf32>
    %273 = math.exp %272 : vector<8x128xf32>
    %cst_115 = arith.constant 1.000000e+00 : f32
    %274 = vector.broadcast %cst_115 : f32 to vector<8x128xf32>
    %275 = arith.addf %274, %273 : vector<8x128xf32>
    %276 = arith.divf %274, %275 : vector<8x128xf32>
    %277 = arith.mulf %268, %251 : vector<8x128xf32>
    %278 = arith.mulf %262, %270 : vector<8x128xf32>
    %279 = arith.addf %277, %278 : vector<8x128xf32>
    %280 = math.tanh %279 : vector<8x128xf32>
    %281 = arith.mulf %276, %280 : vector<8x128xf32>
    %c0_116 = arith.constant 0 : index
    %c0_117 = arith.constant 0 : index
    %282 = vector.load %arg11[%c0_116, %c0_117] : memref<8x128xf32, #tpu.memory_space<vmem>>, vector<8x128xf32>
    tpu.vector_store %arg11[%c0_116, %c0_117], %281 {strides = array<i32>} : memref<8x128xf32, #tpu.memory_space<vmem>>, vector<8x128xf32>,
    %c0_118 = arith.constant 0 : index
    %c0_119 = arith.constant 0 : index
    %283 = vector.load %arg12[%c0_118, %c0_119] : memref<8x128xf32, #tpu.memory_space<vmem>>, vector<8x128xf32>
    tpu.vector_store %arg12[%c0_118, %c0_119], %279 {strides = array<i32>} : memref<8x128xf32, #tpu.memory_space<vmem>>, vector<8x128xf32>,
    %284 = arith.index_cast %249 : i32 to index
    %c0_120 = arith.constant 0 : index
    %285 = vector.load %arg14[%284, %c0_120] : memref<64x128xf32, #tpu.memory_space<vmem>>, vector<8x128xf32>
    tpu.vector_store %arg14[%284, %c0_120], %281 {strides = array<i32>} : memref<64x128xf32, #tpu.memory_space<vmem>>, vector<8x128xf32>,
    %c7_i32 = arith.constant 7 : i32
    %c8_i32_121 = arith.constant 8 : i32
    %286 = arith.muli %c7_i32, %c8_i32_121 : i32
    %287 = tpu.assume_multiple %286, 8 : i32
    %c0_122 = arith.constant 0 : index
    %c0_123 = arith.constant 0 : index
    %288 = vector.load %arg11[%c0_122, %c0_123] : memref<8x128xf32, #tpu.memory_space<vmem>>, vector<8x128xf32>
    %c0_124 = arith.constant 0 : index
    %c0_125 = arith.constant 0 : index
    %289 = vector.load %arg12[%c0_124, %c0_125] : memref<8x128xf32, #tpu.memory_space<vmem>>, vector<8x128xf32>
    %290 = arith.index_cast %287 : i32 to index
    %c0_126 = arith.constant 0 : index
    %291 = vector.load %arg13[%290, %c0_126] : memref<64x512xf32, #tpu.memory_space<vmem>>, vector<8x512xf32>
    %292 = arith.truncf %288 : vector<8x128xf32> to vector<8x128xbf16>
    %cst_127 = arith.constant dense<0.000000e+00> : vector<8x512xf32>
    %293 = tpu.matmul %292, %19, %cst_127 {dimension_numbers = #tpu.dot_dimension_numbers<[1], [0], [0], [1], [0, 0, 1, 1], [], []>} : vector<8x128xbf16>, vector<128x512xbf16>, vector<8x512xf32> -> vector<8x512xf32>
    %294 = arith.addf %291, %293 : vector<8x512xf32>
    %295 = vector.extract_strided_slice %294 {offsets = [0, 0], sizes = [8, 128], strides = [1, 1]} : vector<8x512xf32> to vector<8x128xf32>
    %296 = arith.negf %295 : vector<8x128xf32>
    %297 = math.exp %296 : vector<8x128xf32>
    %cst_128 = arith.constant 1.000000e+00 : f32
    %298 = vector.broadcast %cst_128 : f32 to vector<8x128xf32>
    %299 = arith.addf %298, %297 : vector<8x128xf32>
    %300 = arith.divf %298, %299 : vector<8x128xf32>
    %301 = vector.extract_strided_slice %294 {offsets = [0, 128], sizes = [8, 128], strides = [1, 1]} : vector<8x512xf32> to vector<8x128xf32>
    %302 = arith.negf %301 : vector<8x128xf32>
    %303 = math.exp %302 : vector<8x128xf32>
    %cst_129 = arith.constant 1.000000e+00 : f32
    %304 = vector.broadcast %cst_129 : f32 to vector<8x128xf32>
    %305 = arith.addf %304, %303 : vector<8x128xf32>
    %306 = arith.divf %304, %305 : vector<8x128xf32>
    %307 = vector.extract_strided_slice %294 {offsets = [0, 256], sizes = [8, 128], strides = [1, 1]} : vector<8x512xf32> to vector<8x128xf32>
    %308 = math.tanh %307 : vector<8x128xf32>
    %309 = vector.extract_strided_slice %294 {offsets = [0, 384], sizes = [8, 128], strides = [1, 1]} : vector<8x512xf32> to vector<8x128xf32>
    %310 = arith.negf %309 : vector<8x128xf32>
    %311 = math.exp %310 : vector<8x128xf32>
    %cst_130 = arith.constant 1.000000e+00 : f32
    %312 = vector.broadcast %cst_130 : f32 to vector<8x128xf32>
    %313 = arith.addf %312, %311 : vector<8x128xf32>
    %314 = arith.divf %312, %313 : vector<8x128xf32>
    %315 = arith.mulf %306, %289 : vector<8x128xf32>
    %316 = arith.mulf %300, %308 : vector<8x128xf32>
    %317 = arith.addf %315, %316 : vector<8x128xf32>
    %318 = math.tanh %317 : vector<8x128xf32>
    %319 = arith.mulf %314, %318 : vector<8x128xf32>
    %c0_131 = arith.constant 0 : index
    %c0_132 = arith.constant 0 : index
    %320 = vector.load %arg11[%c0_131, %c0_132] : memref<8x128xf32, #tpu.memory_space<vmem>>, vector<8x128xf32>
    tpu.vector_store %arg11[%c0_131, %c0_132], %319 {strides = array<i32>} : memref<8x128xf32, #tpu.memory_space<vmem>>, vector<8x128xf32>,
    %c0_133 = arith.constant 0 : index
    %c0_134 = arith.constant 0 : index
    %321 = vector.load %arg12[%c0_133, %c0_134] : memref<8x128xf32, #tpu.memory_space<vmem>>, vector<8x128xf32>
    tpu.vector_store %arg12[%c0_133, %c0_134], %317 {strides = array<i32>} : memref<8x128xf32, #tpu.memory_space<vmem>>, vector<8x128xf32>,
    %322 = arith.index_cast %287 : i32 to index
    %c0_135 = arith.constant 0 : index
    %323 = vector.load %arg14[%322, %c0_135] : memref<64x128xf32, #tpu.memory_space<vmem>>, vector<8x128xf32>
    tpu.vector_store %arg14[%322, %c0_135], %319 {strides = array<i32>} : memref<64x128xf32, #tpu.memory_space<vmem>>, vector<8x128xf32>,
    %c8_i32_136 = arith.constant 8 : i32
    %c0_137 = arith.constant 0 : index
    %c0_138 = arith.constant 0 : index
    %324 = vector.load %arg14[%c0_137, %c0_138] : memref<64x128xf32, #tpu.memory_space<vmem>>, vector<64x128xf32>
    %325 = arith.truncf %324 : vector<64x128xf32> to vector<64x128xbf16>
    %c0_139 = arith.constant 0 : index
    %c0_140 = arith.constant 0 : index
    %326 = vector.load %arg7[%c0_139, %c0_140] : memref<128x128xbf16, #tpu.memory_space<vmem>>, vector<128x128xbf16>
    %cst_141 = arith.constant dense<0.000000e+00> : vector<64x128xf32>
    %327 = tpu.matmul %325, %326, %cst_141 {dimension_numbers = #tpu.dot_dimension_numbers<[1], [0], [0], [1], [0, 0, 1, 1], [], []>} : vector<64x128xbf16>, vector<128x128xbf16>, vector<64x128xf32> -> vector<64x128xf32>
    %c0_142 = arith.constant 0 : index
    %c0_143 = arith.constant 0 : index
    %328 = vector.load %arg8[%c0_142, %c0_143] : memref<1x128xf32, #tpu.memory_space<vmem>>, vector<1x128xf32>
    %329 = vector.broadcast %328 : vector<1x128xf32> to vector<64x128xf32>
    %330 = arith.addf %327, %329 : vector<64x128xf32>
    %c0_144 = arith.constant 0 : index
    %c0_145 = arith.constant 0 : index
    %331 = vector.load %arg10[%c0_144, %c0_145] : memref<64x128xf32, #tpu.memory_space<vmem>>, vector<64x128xf32>
    tpu.vector_store %arg10[%c0_144, %c0_145], %330 {strides = array<i32>} : memref<64x128xf32, #tpu.memory_space<vmem>>, vector<64x128xf32>,
    return
  }
  func.func @transform_0(%arg0: i32) -> (i32, i32) {
    %c0_i32 = arith.constant 0 : i32
    %c0_i32_0 = arith.constant 0 : i32
    return %arg0, %c0_i32 : i32, i32
  }
  func.func @transform_1(%arg0: i32) -> (i32, i32) {
    %c0_i32 = arith.constant 0 : i32
    %c0_i32_0 = arith.constant 0 : i32
    %c0_i32_1 = arith.constant 0 : i32
    return %c0_i32, %c0_i32_0 : i32, i32
  }
  func.func @transform_2(%arg0: i32) -> (i32, i32) {
    %c0_i32 = arith.constant 0 : i32
    %c0_i32_0 = arith.constant 0 : i32
    %c0_i32_1 = arith.constant 0 : i32
    return %c0_i32, %c0_i32_0 : i32, i32
  }
  func.func @transform_3(%arg0: i32) -> (i32, i32) {
    %c0_i32 = arith.constant 0 : i32
    %c0_i32_0 = arith.constant 0 : i32
    %c0_i32_1 = arith.constant 0 : i32
    return %c0_i32, %c0_i32_0 : i32, i32
  }
  func.func @transform_4(%arg0: i32) -> (i32, i32) {
    %c0_i32 = arith.constant 0 : i32
    %c0_i32_0 = arith.constant 0 : i32
    %c0_i32_1 = arith.constant 0 : i32
    return %c0_i32, %c0_i32_0 : i32, i32
  }
  func.func @transform_5(%arg0: i32) -> (i32, i32) {
    %c0_i32 = arith.constant 0 : i32
    %c0_i32_0 = arith.constant 0 : i32
    %c0_i32_1 = arith.constant 0 : i32
    return %c0_i32, %c0_i32_0 : i32, i32
  }
  func.func @transform_6(%arg0: i32) -> (i32, i32) {
    %c0_i32 = arith.constant 0 : i32
    %c0_i32_0 = arith.constant 0 : i32
    %c0_i32_1 = arith.constant 0 : i32
    return %c0_i32, %c0_i32_0 : i32, i32
  }
  func.func @transform_7(%arg0: i32) -> (i32, i32) {
    %c0_i32 = arith.constant 0 : i32
    %c0_i32_0 = arith.constant 0 : i32
    %c0_i32_1 = arith.constant 0 : i32
    return %c0_i32, %c0_i32_0 : i32, i32
  }
  func.func @transform_8(%arg0: i32) -> (i32, i32) {
    %c0_i32 = arith.constant 0 : i32
    %c0_i32_0 = arith.constant 0 : i32
    %c0_i32_1 = arith.constant 0 : i32
    return %c0_i32, %c0_i32_0 : i32, i32
  }
  func.func @transform_9(%arg0: i32) -> (i32, i32) {
    %c0_i32 = arith.constant 0 : i32
    %c0_i32_0 = arith.constant 0 : i32
    return %arg0, %c0_i32 : i32, i32
  }
}

</mosaic_0001>

<llo_original>
// kernel: lstm_cnn_cond_forward.5
$region0: #{lstm_cnn_cond_forward.5}
  #allocation0 [shape = 'u32[]', space=smem, size = 0x4, offset = 0x4, fixed_abs, tag = 'smem constant byte address 0x4 - core index']
  #allocation1 [shape = 'u32[144,128]{1,0:T(1,128)}', space=vmem, size = 0x12000, scoped, tag = 'internal scratch']
  %s0 = inlined_call_operand.vmem [shape: f32[32,12], index: 0, kind: input, shape index: {}]
  %s1 = inlined_call_operand.vmem [shape: bf16[12,128], index: 1, kind: input, shape index: {}]
  %s2 = inlined_call_operand.vmem [shape: f32[1,128], index: 2, kind: input, shape index: {}]
  %s3 = inlined_call_operand.vmem [shape: f32[32,128], index: 3, kind: output, shape index: {}]
  %s4 = sld [smem:[#allocation0]]
  $region22: #{lstm_cnn_cond_forward.5} parent=0
    _
  %s6 = ssub.s32 1, %s4
  %s7 = scalar_select 0, %s6, %s4
  // Predicated region
  $region2: #{lstm_cnn_cond_forward.5} parent=0 // pred_check
    _
  $region3: #{lstm_cnn_cond_forward.5} parent=0 // pred_check_branch
    %9 = sbr.rel (0) target = $region5
  $region4: #{lstm_cnn_cond_forward.5} parent=0 // pred_region
    _
  $region5: #{lstm_cnn_cond_forward.5} parent=0 // pred_fallthru
    _
  // Predicated region
  $region6: #{lstm_cnn_cond_forward.5} parent=0 // pred_check
    _
  $region7: #{lstm_cnn_cond_forward.5} parent=0 // pred_check_branch
    %11 = sbr.rel (0) target = $region9
  $region8: #{lstm_cnn_cond_forward.5} parent=0 // pred_region
    _
  $region9: #{lstm_cnn_cond_forward.5} parent=0 // pred_fallthru
    _
  // Predicated region
  $region10: #{lstm_cnn_cond_forward.5} parent=0 // pred_check
    _
  $region11: #{lstm_cnn_cond_forward.5} parent=0 // pred_check_branch
    %13 = sbr.rel (0) target = $region13
  $region12: #{lstm_cnn_cond_forward.5} parent=0 // pred_region
    _
  $region13: #{lstm_cnn_cond_forward.5} parent=0 // pred_fallthru
    _
  %v15 = vld [vmem:[%s0] sm:$0xff]
  %v16 = vld [vmem:[%s0 + $0x8] sm:$0xff]
  %v17 = vld [vmem:[%s0 + $0x10] sm:$0xff]
  %v18 = vld [vmem:[%s0 + $0x18] sm:$0xff]
  %v19 = vpack.c.bf16 %v16, %v15
  %v20 = vpack.c.bf16 %v18, %v17
  %v21 = vld [vmem:[%s1] sm:$0xf]
  %v22 = vld [vmem:[%s1 + $0x4] sm:$0x3]
  %v23 = vld [vmem:[%s2] sm:$0x1]
  %v25 = vlaneseq
  %v26 = vshrl.u32 %v25, 7
  %v27 = vsub.s32 0, %v26
  %v28 = vrot.slane %v23, %v27
  %v32 = vunpack.c.l.b16 %v21
  %v33 = vunpack.c.l.b16 %v22
  %v34 = vpack.c.b16 %v33, %v32
  %vm35 = vcmask 97280
  %v37 = vsel %vm35, %v19, 0
  %v40 = vsel %vm35, %v20, 0
  %vm42 = vcmask 1045504
  %v44 = vsel %vm42, %v34, 0
  %46 = vmatprep.subr.bf16.mxu0 0
  %47 = vmatpush1.bf16.msra.mxu0 %v44
  %48 = vmatprep.subr.bf16.mxu0 0
  %49 = vmatpush1.bf16.msra.mxu0 0
  %50 = vmatprep.subr.bf16.mxu0 0
  %51 = vmatpush1.bf16.msra.mxu0 0
  %52 = vmatprep.subr.bf16.mxu0 0
  %53 = vmatpush1.bf16.msra.mxu0 0
  %54 = vmatprep.subr.bf16.mxu0 0
  %55 = vmatpush1.bf16.msra.mxu0 0
  %56 = vmatprep.subr.bf16.mxu0 0
  %57 = vmatpush1.bf16.msra.mxu0 0
  %58 = vmatprep.subr.bf16.mxu0 0
  %59 = vmatpush1.bf16.msra.mxu0 0
  %60 = vmatprep.subr.bf16.mxu0 0
  %61 = vmatpush1.bf16.msra.mxu0 0
  %62 = vmatprep.subr.bf16.mxu0 0
  %63 = vmatpush1.bf16.msra.mxu0 0
  %64 = vmatprep.subr.bf16.mxu0 0
  %65 = vmatpush1.bf16.msra.mxu0 0
  %66 = vmatprep.subr.bf16.mxu0 0
  %67 = vmatpush1.bf16.msra.mxu0 0
  %68 = vmatprep.subr.bf16.mxu0 0
  %69 = vmatpush1.bf16.msra.mxu0 0
  %70 = vmatprep.subr.bf16.mxu0 0
  %71 = vmatpush1.bf16.msra.mxu0 0
  %72 = vmatprep.subr.bf16.mxu0 0
  %73 = vmatpush1.bf16.msra.mxu0 0
  %74 = vmatprep.subr.bf16.mxu0 0
  %75 = vmatpush1.bf16.msra.mxu0 0
  %76 = vmatprep.subr.bf16.mxu0 0
  %77 = vmatpush1.bf16.msra.mxu0 0
  %78 = vmatprep.mubr.bf16.mxu0 0
  %79 = vmatmul.mubr.bf16.gmra.mrb[0].mxu0 %v37
  %v80 = vpop.f32.mrb[0].mxu0
  %v81 = vadd.f32 %v28, %v80
  %v82 = vpop.f32.mrb[0].mxu0
  %v83 = vpop.f32.mrb[0].mxu0
  %v84 = vadd.f32 %v28, %v83
  %v85 = vpop.f32.mrb[0].mxu0
  %86 = vmatprep.mubr.bf16.mxu0 0
  %87 = vmatmul.mubr.bf16.gmra.mrb[0].mxu0 %v40
  %v88 = vpop.f32.mrb[0].mxu0
  %v89 = vadd.f32 %v28, %v88
  %v90 = vpop.f32.mrb[0].mxu0
  %v91 = vpop.f32.mrb[0].mxu0
  %v92 = vadd.f32 %v28, %v91
  %v93 = vpop.f32.mrb[0].mxu0
  %94 = vdwg.mxu0
  %v95 = vmax.f32 %v81, 0.0
  %v96 = vmax.f32 %v84, 0.0
  %v97 = vmax.f32 %v89, 0.0
  %v98 = vmax.f32 %v92, 0.0
  %99 = vst [vmem:[%s3] sm:$0xff] %v95
  %100 = vst [vmem:[%s3 + $0x8] sm:$0xff] %v96
  %101 = vst [vmem:[%s3 + $0x10] sm:$0xff] %v97
  %102 = vst [vmem:[%s3 + $0x18] sm:$0xff] %v98
  // Predicated region
  $region14: #{lstm_cnn_cond_forward.5} parent=0 // pred_check
    _
  $region15: #{lstm_cnn_cond_forward.5} parent=0 // pred_check_branch
    %104 = sbr.rel (0) target = $region17
  $region16: #{lstm_cnn_cond_forward.5} parent=0 // pred_region
    _
  $region17: #{lstm_cnn_cond_forward.5} parent=0 // pred_fallthru
    _
  // Predicated region
  $region18: #{lstm_cnn_cond_forward.5} parent=0 // pred_check
    _
  $region19: #{lstm_cnn_cond_forward.5} parent=0 // pred_check_branch
    %106 = sbr.rel (0) target = $region21
  $region20: #{lstm_cnn_cond_forward.5} parent=0 // pred_region
    _
  $region21: #{lstm_cnn_cond_forward.5} parent=0 // pred_fallthru
    _

// kernel: lstm_cnn_cond_forward.6
$region0: #{lstm_cnn_cond_forward.6}
  #allocation0 [shape = 'u32[]', space=smem, size = 0x4, offset = 0x4, fixed_abs, tag = 'smem constant byte address 0x4 - core index']
  #allocation1 [shape = 'u32[144,128]{1,0:T(1,128)}', space=vmem, size = 0x12000, scoped, tag = 'internal scratch']
  %s0 = inlined_call_operand.vmem [shape: f32[8,320], index: 0, kind: input, shape index: {}]
  %s1 = inlined_call_operand.vmem [shape: bf16[320,128], index: 1, kind: input, shape index: {}]
  %s2 = inlined_call_operand.vmem [shape: f32[1,128], index: 2, kind: input, shape index: {}]
  %s3 = inlined_call_operand.vmem [shape: f32[8,128], index: 3, kind: output, shape index: {}]
  %s4 = sld [smem:[#allocation0]]
  $region22: #{lstm_cnn_cond_forward.6} parent=0
    _
  %s6 = ssub.s32 1, %s4
  %s7 = scalar_select 0, %s6, %s4
  // Predicated region
  $region2: #{lstm_cnn_cond_forward.6} parent=0 // pred_check
    _
  $region3: #{lstm_cnn_cond_forward.6} parent=0 // pred_check_branch
    %9 = sbr.rel (0) target = $region5
  $region4: #{lstm_cnn_cond_forward.6} parent=0 // pred_region
    _
  $region5: #{lstm_cnn_cond_forward.6} parent=0 // pred_fallthru
    _
  // Predicated region
  $region6: #{lstm_cnn_cond_forward.6} parent=0 // pred_check
    _
  $region7: #{lstm_cnn_cond_forward.6} parent=0 // pred_check_branch
    %11 = sbr.rel (0) target = $region9
  $region8: #{lstm_cnn_cond_forward.6} parent=0 // pred_region
    _
  $region9: #{lstm_cnn_cond_forward.6} parent=0 // pred_fallthru
    _
  // Predicated region
  $region10: #{lstm_cnn_cond_forward.6} parent=0 // pred_check
    _
  $region11: #{lstm_cnn_cond_forward.6} parent=0 // pred_check_branch
    %13 = sbr.rel (0) target = $region13
  $region12: #{lstm_cnn_cond_forward.6} parent=0 // pred_region
    _
  $region13: #{lstm_cnn_cond_forward.6} parent=0 // pred_fallthru
    _
  %v15 = vld [vmem:[%s0] sm:$0xff]
  %v16 = vld [vmem:[%s0 + $0x8] sm:$0xff]
  %v17 = vld [vmem:[%s0 + $0x10] sm:$0xff]
  %v18 = vpack.c.bf16 %v15, %v15
  %v19 = vpack.c.bf16 %v16, %v16
  %v20 = vpack.c.bf16 %v17, %v17
  %v21 = vld [vmem:[%s1] sm:$0xf]
  %v22 = vld [vmem:[%s1 + $0x4] sm:$0xf]
  %v23 = vld [vmem:[%s1 + $0x8] sm:$0xf]
  %v24 = vld [vmem:[%s1 + $0xc] sm:$0xf]
  %v25 = vld [vmem:[%s1 + $0x10] sm:$0xf]
  %v26 = vld [vmem:[%s1 + $0x14] sm:$0xf]
  %v27 = vld [vmem:[%s1 + $0x18] sm:$0xf]
  %v28 = vld [vmem:[%s1 + $0x1c] sm:$0xf]
  %v29 = vld [vmem:[%s1 + $0x20] sm:$0xf]
  %v30 = vld [vmem:[%s1 + $0x24] sm:$0xf]
  %v31 = vld [vmem:[%s1 + $0x28] sm:$0xf]
  %v32 = vld [vmem:[%s1 + $0x2c] sm:$0xf]
  %v33 = vld [vmem:[%s1 + $0x30] sm:$0xf]
  %v34 = vld [vmem:[%s1 + $0x34] sm:$0xf]
  %v35 = vld [vmem:[%s1 + $0x38] sm:$0xf]
  %v36 = vld [vmem:[%s1 + $0x3c] sm:$0xf]
  %v37 = vld [vmem:[%s1 + $0x40] sm:$0xf]
  %v38 = vld [vmem:[%s1 + $0x44] sm:$0xf]
  %v39 = vld [vmem:[%s1 + $0x48] sm:$0xf]
  %v40 = vld [vmem:[%s1 + $0x4c] sm:$0xf]
  %v41 = vld [vmem:[%s1 + $0x50] sm:$0xf]
  %v42 = vld [vmem:[%s1 + $0x54] sm:$0xf]
  %v43 = vld [vmem:[%s1 + $0x58] sm:$0xf]
  %v44 = vld [vmem:[%s1 + $0x5c] sm:$0xf]
  %v45 = vld [vmem:[%s1 + $0x60] sm:$0xf]
  %v46 = vld [vmem:[%s1 + $0x64] sm:$0xf]
  %v47 = vld [vmem:[%s1 + $0x68] sm:$0xf]
  %v48 = vld [vmem:[%s1 + $0x6c] sm:$0xf]
  %v49 = vld [vmem:[%s1 + $0x70] sm:$0xf]
  %v50 = vld [vmem:[%s1 + $0x74] sm:$0xf]
  %v51 = vld [vmem:[%s1 + $0x78] sm:$0xf]
  %v52 = vld [vmem:[%s1 + $0x7c] sm:$0xf]
  %v53 = vld [vmem:[%s1 + $0x80] sm:$0xf]
  %v54 = vld [vmem:[%s1 + $0x84] sm:$0xf]
  %v55 = vld [vmem:[%s1 + $0x88] sm:$0xf]
  %v56 = vld [vmem:[%s1 + $0x8c] sm:$0xf]
  %v57 = vld [vmem:[%s1 + $0x90] sm:$0xf]
  %v58 = vld [vmem:[%s1 + $0x94] sm:$0xf]
  %v59 = vld [vmem:[%s1 + $0x98] sm:$0xf]
  %v60 = vld [vmem:[%s1 + $0x9c] sm:$0xf]
  %v61 = vld [vmem:[%s2] sm:$0x1]
  %v63 = vlaneseq
  %v64 = vshrl.u32 %v63, 7
  %v65 = vsub.s32 0, %v64
  %v66 = vrot.slane %v61, %v65
  %v108 = vunpack.c.l.b16 %v21
  %v109 = vunpack.c.l.b16 %v22
  %v110 = vunpack.c.l.b16 %v23
  %v111 = vunpack.c.l.b16 %v24
  %v112 = vunpack.c.l.b16 %v25
  %v113 = vunpack.c.l.b16 %v26
  %v114 = vunpack.c.l.b16 %v27
  %v115 = vunpack.c.l.b16 %v28
  %v116 = vunpack.c.l.b16 %v29
  %v117 = vunpack.c.l.b16 %v30
  %v118 = vunpack.c.l.b16 %v31
  %v119 = vunpack.c.l.b16 %v32
  %v120 = vunpack.c.l.b16 %v33
  %v121 = vunpack.c.l.b16 %v34
  %v122 = vunpack.c.l.b16 %v35
  %v123 = vunpack.c.l.b16 %v36
  %v124 = vunpack.c.l.b16 %v37
  %v125 = vunpack.c.l.b16 %v38
  %v126 = vunpack.c.l.b16 %v39
  %v127 = vunpack.c.l.b16 %v40
  %v128 = vunpack.c.l.b16 %v41
  %v129 = vunpack.c.l.b16 %v42
  %v130 = vunpack.c.l.b16 %v43
  %v131 = vunpack.c.l.b16 %v44
  %v132 = vunpack.c.l.b16 %v45
  %v133 = vunpack.c.l.b16 %v46
  %v134 = vunpack.c.l.b16 %v47
  %v135 = vunpack.c.l.b16 %v48
  %v136 = vunpack.c.l.b16 %v49
  %v137 = vunpack.c.l.b16 %v50
  %v138 = vunpack.c.l.b16 %v51
  %v139 = vunpack.c.l.b16 %v52
  %v140 = vunpack.c.l.b16 %v53
  %v141 = vunpack.c.l.b16 %v54
  %v142 = vunpack.c.l.b16 %v55
  %v143 = vunpack.c.l.b16 %v56
  %v144 = vunpack.c.l.b16 %v57
  %v145 = vunpack.c.l.b16 %v58
  %v146 = vunpack.c.l.b16 %v59
  %v147 = vunpack.c.l.b16 %v60
  %v148 = vpack.c.b16 %v109, %v108
  %v149 = vpack.c.b16 %v111, %v110
  %v150 = vpack.c.b16 %v113, %v112
  %v151 = vpack.c.b16 %v115, %v114
  %v152 = vpack.c.b16 %v117, %v116
  %v153 = vpack.c.b16 %v119, %v118
  %v154 = vpack.c.b16 %v121, %v120
  %v155 = vpack.c.b16 %v123, %v122
  %v156 = vpack.c.b16 %v125, %v124
  %v157 = vpack.c.b16 %v127, %v126
  %v158 = vpack.c.b16 %v129, %v128
  %v159 = vpack.c.b16 %v131, %v130
  %v160 = vpack.c.b16 %v133, %v132
  %v161 = vpack.c.b16 %v135, %v134
  %v162 = vpack.c.b16 %v137, %v136
  %v163 = vpack.c.b16 %v139, %v138
  %v164 = vpack.c.b16 %v141, %v140
  %v165 = vpack.c.b16 %v143, %v142
  %v166 = vpack.c.b16 %v145, %v144
  %v167 = vpack.c.b16 %v147, %v146
  %vm188 = vcmask 523264
  %v190 = vsel %vm188, %v20, 0
  %192 = vmatprep.subr.bf16.mxu0 0
  %193 = vmatpush1.bf16.msra.mxu0 %v148
  %194 = vmatprep.subr.bf16.mxu0 0
  %195 = vmatpush1.bf16.msra.mxu0 %v149
  %196 = vmatprep.subr.bf16.mxu0 0
  %197 = vmatpush1.bf16.msra.mxu0 %v150
  %198 = vmatprep.subr.bf16.mxu0 0
  %199 = vmatpush1.bf16.msra.mxu0 %v151
  %200 = vmatprep.subr.bf16.mxu0 0
  %201 = vmatpush1.bf16.msra.mxu0 %v152
  %202 = vmatprep.subr.bf16.mxu0 0
  %203 = vmatpush1.bf16.msra.mxu0 %v153
  %204 = vmatprep.subr.bf16.mxu0 0
  %205 = vmatpush1.bf16.msra.mxu0 %v154
  %206 = vmatprep.subr.bf16.mxu0 0
  %207 = vmatpush1.bf16.msra.mxu0 %v155
  %208 = vmatprep.subr.bf16.mxu0 0
  %209 = vmatpush1.bf16.msra.mxu0 %v156
  %210 = vmatprep.subr.bf16.mxu0 0
  %211 = vmatpush1.bf16.msra.mxu0 %v157
  %212 = vmatprep.subr.bf16.mxu0 0
  %213 = vmatpush1.bf16.msra.mxu0 %v158
  %214 = vmatprep.subr.bf16.mxu0 0
  %215 = vmatpush1.bf16.msra.mxu0 %v159
  %216 = vmatprep.subr.bf16.mxu0 0
  %217 = vmatpush1.bf16.msra.mxu0 %v160
  %218 = vmatprep.subr.bf16.mxu0 0
  %219 = vmatpush1.bf16.msra.mxu0 %v161
  %220 = vmatprep.subr.bf16.mxu0 0
  %221 = vmatpush1.bf16.msra.mxu0 %v162
  %222 = vmatprep.subr.bf16.mxu0 0
  %223 = vmatpush1.bf16.msra.mxu0 %v163
  %224 = vmatprep.mubr.bf16.mxu0 %v19
  %225 = vmatmul.mubr.bf16.gmra.mrb[0].mxu0 %v18
  %v226 = vpop.f32.mrb[0].mxu0
  %v227 = vadd.f32 %v66, %v226
  %v228 = vpop.f32.mrb[0].mxu0
  %v229 = vpop.f32.mrb[0].mxu0
  %v230 = vpop.f32.mrb[0].mxu0
  %231 = vdwg.mxu0
  %232 = vmatprep.subr.bf16.mxu0 0
  %233 = vmatpush1.bf16.msra.mxu0 %v164
  %234 = vmatprep.subr.bf16.mxu0 0
  %235 = vmatpush1.bf16.msra.mxu0 %v165
  %236 = vmatprep.subr.bf16.mxu0 0
  %237 = vmatpush1.bf16.msra.mxu0 %v166
  %238 = vmatprep.subr.bf16.mxu0 0
  %239 = vmatpush1.bf16.msra.mxu0 %v167
  %240 = vmatprep.subr.bf16.mxu0 0
  %241 = vmatpush1.bf16.msra.mxu0 0
  %242 = vmatprep.subr.bf16.mxu0 0
  %243 = vmatpush1.bf16.msra.mxu0 0
  %244 = vmatprep.subr.bf16.mxu0 0
  %245 = vmatpush1.bf16.msra.mxu0 0
  %246 = vmatprep.subr.bf16.mxu0 0
  %247 = vmatpush1.bf16.msra.mxu0 0
  %248 = vmatprep.subr.bf16.mxu0 0
  %249 = vmatpush1.bf16.msra.mxu0 0
  %250 = vmatprep.subr.bf16.mxu0 0
  %251 = vmatpush1.bf16.msra.mxu0 0
  %252 = vmatprep.subr.bf16.mxu0 0
  %253 = vmatpush1.bf16.msra.mxu0 0
  %254 = vmatprep.subr.bf16.mxu0 0
  %255 = vmatpush1.bf16.msra.mxu0 0
  %256 = vmatprep.subr.bf16.mxu0 0
  %257 = vmatpush1.bf16.msra.mxu0 0
  %258 = vmatprep.subr.bf16.mxu0 0
  %259 = vmatpush1.bf16.msra.mxu0 0
  %260 = vmatprep.subr.bf16.mxu0 0
  %261 = vmatpush1.bf16.msra.mxu0 0
  %262 = vmatprep.subr.bf16.mxu0 0
  %263 = vmatpush1.bf16.msra.mxu0 0
  %264 = vmatprep.mubr.bf16.mxu0 0
  %265 = vmatmul.mubr.bf16.gmra.mrb[0].mxu0 %v190
  %v266 = vpop.f32.mrb[0].mxu0
  %v267 = vadd.f32 %v227, %v266
  %v268 = vpop.f32.mrb[0].mxu0
  %v269 = vpop.f32.mrb[0].mxu0
  %v270 = vpop.f32.mrb[0].mxu0
  %271 = vdwg.mxu0
  %v272 = vmax.f32 %v267, 0.0
  %273 = vst [vmem:[%s3] sm:$0xff] %v272
  // Predicated region
  $region14: #{lstm_cnn_cond_forward.6} parent=0 // pred_check
    _
  $region15: #{lstm_cnn_cond_forward.6} parent=0 // pred_check_branch
    %275 = sbr.rel (0) target = $region17
  $region16: #{lstm_cnn_cond_forward.6} parent=0 // pred_region
    _
  $region17: #{lstm_cnn_cond_forward.6} parent=0 // pred_fallthru
    _
  // Predicated region
  $region18: #{lstm_cnn_cond_forward.6} parent=0 // pred_check
    _
  $region19: #{lstm_cnn_cond_forward.6} parent=0 // pred_check_branch
    %277 = sbr.rel (0) target = $region21
  $region20: #{lstm_cnn_cond_forward.6} parent=0 // pred_region
    _
  $region21: #{lstm_cnn_cond_forward.6} parent=0 // pred_fallthru
    _

// kernel: lstm_cnn_cond_forward.7
$region0: #{lstm_cnn_cond_forward.7}
  #allocation0 [shape = 'u32[]', space=smem, size = 0x4, offset = 0x4, fixed_abs, tag = 'smem constant byte address 0x4 - core index']
  #allocation1 [shape = 'u32[144,128]{1,0:T(1,128)}', space=vmem, size = 0x12000, scoped, tag = 'internal scratch']
  %s0 = inlined_call_operand.vmem [shape: f32[8,128], index: 0, kind: input, shape index: {}]
  %s1 = inlined_call_operand.vmem [shape: bf16[128,128], index: 1, kind: input, shape index: {}]
  %s2 = inlined_call_operand.vmem [shape: f32[1,128], index: 2, kind: input, shape index: {}]
  %s3 = inlined_call_operand.vmem [shape: f32[8,128], index: 3, kind: output, shape index: {}]
  %s4 = sld [smem:[#allocation0]]
  $region22: #{lstm_cnn_cond_forward.7} parent=0
    _
  %s6 = ssub.s32 1, %s4
  %s7 = scalar_select 0, %s6, %s4
  // Predicated region
  $region2: #{lstm_cnn_cond_forward.7} parent=0 // pred_check
    _
  $region3: #{lstm_cnn_cond_forward.7} parent=0 // pred_check_branch
    %9 = sbr.rel (0) target = $region5
  $region4: #{lstm_cnn_cond_forward.7} parent=0 // pred_region
    _
  $region5: #{lstm_cnn_cond_forward.7} parent=0 // pred_fallthru
    _
  // Predicated region
  $region6: #{lstm_cnn_cond_forward.7} parent=0 // pred_check
    _
  $region7: #{lstm_cnn_cond_forward.7} parent=0 // pred_check_branch
    %11 = sbr.rel (0) target = $region9
  $region8: #{lstm_cnn_cond_forward.7} parent=0 // pred_region
    _
  $region9: #{lstm_cnn_cond_forward.7} parent=0 // pred_fallthru
    _
  // Predicated region
  $region10: #{lstm_cnn_cond_forward.7} parent=0 // pred_check
    _
  $region11: #{lstm_cnn_cond_forward.7} parent=0 // pred_check_branch
    %13 = sbr.rel (0) target = $region13
  $region12: #{lstm_cnn_cond_forward.7} parent=0 // pred_region
    _
  $region13: #{lstm_cnn_cond_forward.7} parent=0 // pred_fallthru
    _
  %v15 = vld [vmem:[%s0] sm:$0xff]
  %v16 = vpack.c.bf16 %v15, %v15
  %v17 = vld [vmem:[%s1] sm:$0xf]
  %v18 = vld [vmem:[%s1 + $0x4] sm:$0xf]
  %v19 = vld [vmem:[%s1 + $0x8] sm:$0xf]
  %v20 = vld [vmem:[%s1 + $0xc] sm:$0xf]
  %v21 = vld [vmem:[%s1 + $0x10] sm:$0xf]
  %v22 = vld [vmem:[%s1 + $0x14] sm:$0xf]
  %v23 = vld [vmem:[%s1 + $0x18] sm:$0xf]
  %v24 = vld [vmem:[%s1 + $0x1c] sm:$0xf]
  %v25 = vld [vmem:[%s1 + $0x20] sm:$0xf]
  %v26 = vld [vmem:[%s1 + $0x24] sm:$0xf]
  %v27 = vld [vmem:[%s1 + $0x28] sm:$0xf]
  %v28 = vld [vmem:[%s1 + $0x2c] sm:$0xf]
  %v29 = vld [vmem:[%s1 + $0x30] sm:$0xf]
  %v30 = vld [vmem:[%s1 + $0x34] sm:$0xf]
  %v31 = vld [vmem:[%s1 + $0x38] sm:$0xf]
  %v32 = vld [vmem:[%s1 + $0x3c] sm:$0xf]
  %v33 = vld [vmem:[%s2] sm:$0x1]
  %v35 = vlaneseq
  %v36 = vshrl.u32 %v35, 7
  %v37 = vsub.s32 0, %v36
  %v38 = vrot.slane %v33, %v37
  %v56 = vunpack.c.l.b16 %v17
  %v57 = vunpack.c.l.b16 %v18
  %v58 = vunpack.c.l.b16 %v19
  %v59 = vunpack.c.l.b16 %v20
  %v60 = vunpack.c.l.b16 %v21
  %v61 = vunpack.c.l.b16 %v22
  %v62 = vunpack.c.l.b16 %v23
  %v63 = vunpack.c.l.b16 %v24
  %v64 = vunpack.c.l.b16 %v25
  %v65 = vunpack.c.l.b16 %v26
  %v66 = vunpack.c.l.b16 %v27
  %v67 = vunpack.c.l.b16 %v28
  %v68 = vunpack.c.l.b16 %v29
  %v69 = vunpack.c.l.b16 %v30
  %v70 = vunpack.c.l.b16 %v31
  %v71 = vunpack.c.l.b16 %v32
  %v72 = vpack.c.b16 %v57, %v56
  %v73 = vpack.c.b16 %v59, %v58
  %v74 = vpack.c.b16 %v61, %v60
  %v75 = vpack.c.b16 %v63, %v62
  %v76 = vpack.c.b16 %v65, %v64
  %v77 = vpack.c.b16 %v67, %v66
  %v78 = vpack.c.b16 %v69, %v68
  %v79 = vpack.c.b16 %v71, %v70
  %88 = vmatprep.subr.bf16.mxu0 0
  %89 = vmatpush1.bf16.msra.mxu0 %v72
  %90 = vmatprep.subr.bf16.mxu0 0
  %91 = vmatpush1.bf16.msra.mxu0 %v73
  %92 = vmatprep.subr.bf16.mxu0 0
  %93 = vmatpush1.bf16.msra.mxu0 %v74
  %94 = vmatprep.subr.bf16.mxu0 0
  %95 = vmatpush1.bf16.msra.mxu0 %v75
  %96 = vmatprep.subr.bf16.mxu0 0
  %97 = vmatpush1.bf16.msra.mxu0 %v76
  %98 = vmatprep.subr.bf16.mxu0 0
  %99 = vmatpush1.bf16.msra.mxu0 %v77
  %100 = vmatprep.subr.bf16.mxu0 0
  %101 = vmatpush1.bf16.msra.mxu0 %v78
  %102 = vmatprep.subr.bf16.mxu0 0
  %103 = vmatpush1.bf16.msra.mxu0 %v79
  %104 = vmatprep.subr.bf16.mxu0 0
  %105 = vmatpush1.bf16.msra.mxu0 0
  %106 = vmatprep.subr.bf16.mxu0 0
  %107 = vmatpush1.bf16.msra.mxu0 0
  %108 = vmatprep.subr.bf16.mxu0 0
  %109 = vmatpush1.bf16.msra.mxu0 0
  %110 = vmatprep.subr.bf16.mxu0 0
  %111 = vmatpush1.bf16.msra.mxu0 0
  %112 = vmatprep.subr.bf16.mxu0 0
  %113 = vmatpush1.bf16.msra.mxu0 0
  %114 = vmatprep.subr.bf16.mxu0 0
  %115 = vmatpush1.bf16.msra.mxu0 0
  %116 = vmatprep.subr.bf16.mxu0 0
  %117 = vmatpush1.bf16.msra.mxu0 0
  %118 = vmatprep.subr.bf16.mxu0 0
  %119 = vmatpush1.bf16.msra.mxu0 0
  %120 = vmatprep.mubr.bf16.mxu0 0
  %121 = vmatmul.mubr.bf16.gmra.mrb[0].mxu0 %v16
  %v122 = vpop.f32.mrb[0].mxu0
  %v123 = vadd.f32 %v38, %v122
  %v124 = vpop.f32.mrb[0].mxu0
  %v125 = vpop.f32.mrb[0].mxu0
  %v126 = vpop.f32.mrb[0].mxu0
  %127 = vdwg.mxu0
  %v128 = vmax.f32 %v123, 0.0
  %129 = vst [vmem:[%s3] sm:$0xff] %v128
  // Predicated region
  $region14: #{lstm_cnn_cond_forward.7} parent=0 // pred_check
    _
  $region15: #{lstm_cnn_cond_forward.7} parent=0 // pred_check_branch
    %131 = sbr.rel (0) target = $region17
  $region16: #{lstm_cnn_cond_forward.7} parent=0 // pred_region
    _
  $region17: #{lstm_cnn_cond_forward.7} parent=0 // pred_fallthru
    _
  // Predicated region
  $region18: #{lstm_cnn_cond_forward.7} parent=0 // pred_check
    _
  $region19: #{lstm_cnn_cond_forward.7} parent=0 // pred_check_branch
    %133 = sbr.rel (0) target = $region21
  $region20: #{lstm_cnn_cond_forward.7} parent=0 // pred_region
    _
  $region21: #{lstm_cnn_cond_forward.7} parent=0 // pred_fallthru
    _

// kernel: lstm_cnn_cond_forward.8
$region0: #{lstm_cnn_cond_forward.8}
  #allocation0 [shape = 'u32[]', space=smem, size = 0x4, offset = 0x4, fixed_abs, tag = 'smem constant byte address 0x4 - core index']
  #allocation1 [shape = 'u32[144,128]{1,0:T(1,128)}', space=vmem, size = 0x12000, scoped, tag = 'internal scratch']
  %s0 = inlined_call_operand.vmem [shape: f32[8,32], index: 0, kind: input, shape index: {}]
  %s1 = inlined_call_operand.vmem [shape: bf16[32,128], index: 1, kind: input, shape index: {}]
  %s2 = inlined_call_operand.vmem [shape: f32[1,128], index: 2, kind: input, shape index: {}]
  %s3 = inlined_call_operand.vmem [shape: f32[8,128], index: 3, kind: output, shape index: {}]
  %s4 = sld [smem:[#allocation0]]
  $region22: #{lstm_cnn_cond_forward.8} parent=0
    _
  %s6 = ssub.s32 1, %s4
  %s7 = scalar_select 0, %s6, %s4
  // Predicated region
  $region2: #{lstm_cnn_cond_forward.8} parent=0 // pred_check
    _
  $region3: #{lstm_cnn_cond_forward.8} parent=0 // pred_check_branch
    %9 = sbr.rel (0) target = $region5
  $region4: #{lstm_cnn_cond_forward.8} parent=0 // pred_region
    _
  $region5: #{lstm_cnn_cond_forward.8} parent=0 // pred_fallthru
    _
  // Predicated region
  $region6: #{lstm_cnn_cond_forward.8} parent=0 // pred_check
    _
  $region7: #{lstm_cnn_cond_forward.8} parent=0 // pred_check_branch
    %11 = sbr.rel (0) target = $region9
  $region8: #{lstm_cnn_cond_forward.8} parent=0 // pred_region
    _
  $region9: #{lstm_cnn_cond_forward.8} parent=0 // pred_fallthru
    _
  // Predicated region
  $region10: #{lstm_cnn_cond_forward.8} parent=0 // pred_check
    _
  $region11: #{lstm_cnn_cond_forward.8} parent=0 // pred_check_branch
    %13 = sbr.rel (0) target = $region13
  $region12: #{lstm_cnn_cond_forward.8} parent=0 // pred_region
    _
  $region13: #{lstm_cnn_cond_forward.8} parent=0 // pred_fallthru
    _
  %v15 = vld [vmem:[%s0] sm:$0xff]
  %v16 = vpack.c.bf16 %v15, %v15
  %v17 = vld [vmem:[%s1] sm:$0xf]
  %v18 = vld [vmem:[%s1 + $0x4] sm:$0xf]
  %v19 = vld [vmem:[%s1 + $0x8] sm:$0xf]
  %v20 = vld [vmem:[%s1 + $0xc] sm:$0xf]
  %v21 = vld [vmem:[%s2] sm:$0x1]
  %v23 = vlaneseq
  %v24 = vshrl.u32 %v23, 7
  %v25 = vsub.s32 0, %v24
  %v26 = vrot.slane %v21, %v25
  %v32 = vunpack.c.l.b16 %v17
  %v33 = vunpack.c.l.b16 %v18
  %v34 = vunpack.c.l.b16 %v19
  %v35 = vunpack.c.l.b16 %v20
  %v36 = vpack.c.b16 %v33, %v32
  %v37 = vpack.c.b16 %v35, %v34
  %vm40 = vcmask 261120
  %v42 = vsel %vm40, %v16, 0
  %44 = vmatprep.subr.bf16.mxu0 0
  %45 = vmatpush1.bf16.msra.mxu0 %v36
  %46 = vmatprep.subr.bf16.mxu0 0
  %47 = vmatpush1.bf16.msra.mxu0 %v37
  %48 = vmatprep.subr.bf16.mxu0 0
  %49 = vmatpush1.bf16.msra.mxu0 0
  %50 = vmatprep.subr.bf16.mxu0 0
  %51 = vmatpush1.bf16.msra.mxu0 0
  %52 = vmatprep.subr.bf16.mxu0 0
  %53 = vmatpush1.bf16.msra.mxu0 0
  %54 = vmatprep.subr.bf16.mxu0 0
  %55 = vmatpush1.bf16.msra.mxu0 0
  %56 = vmatprep.subr.bf16.mxu0 0
  %57 = vmatpush1.bf16.msra.mxu0 0
  %58 = vmatprep.subr.bf16.mxu0 0
  %59 = vmatpush1.bf16.msra.mxu0 0
  %60 = vmatprep.subr.bf16.mxu0 0
  %61 = vmatpush1.bf16.msra.mxu0 0
  %62 = vmatprep.subr.bf16.mxu0 0
  %63 = vmatpush1.bf16.msra.mxu0 0
  %64 = vmatprep.subr.bf16.mxu0 0
  %65 = vmatpush1.bf16.msra.mxu0 0
  %66 = vmatprep.subr.bf16.mxu0 0
  %67 = vmatpush1.bf16.msra.mxu0 0
  %68 = vmatprep.subr.bf16.mxu0 0
  %69 = vmatpush1.bf16.msra.mxu0 0
  %70 = vmatprep.subr.bf16.mxu0 0
  %71 = vmatpush1.bf16.msra.mxu0 0
  %72 = vmatprep.subr.bf16.mxu0 0
  %73 = vmatpush1.bf16.msra.mxu0 0
  %74 = vmatprep.subr.bf16.mxu0 0
  %75 = vmatpush1.bf16.msra.mxu0 0
  %76 = vmatprep.mubr.bf16.mxu0 0
  %77 = vmatmul.mubr.bf16.gmra.mrb[0].mxu0 %v42
  %v78 = vpop.f32.mrb[0].mxu0
  %v79 = vadd.f32 %v26, %v78
  %v80 = vpop.f32.mrb[0].mxu0
  %v81 = vpop.f32.mrb[0].mxu0
  %v82 = vpop.f32.mrb[0].mxu0
  %83 = vdwg.mxu0
  %84 = vst [vmem:[%s3] sm:$0xff] %v79
  // Predicated region
  $region14: #{lstm_cnn_cond_forward.8} parent=0 // pred_check
    _
  $region15: #{lstm_cnn_cond_forward.8} parent=0 // pred_check_branch
    %86 = sbr.rel (0) target = $region17
  $region16: #{lstm_cnn_cond_forward.8} parent=0 // pred_region
    _
  $region17: #{lstm_cnn_cond_forward.8} parent=0 // pred_fallthru
    _
  // Predicated region
  $region18: #{lstm_cnn_cond_forward.8} parent=0 // pred_check
    _
  $region19: #{lstm_cnn_cond_forward.8} parent=0 // pred_check_branch
    %88 = sbr.rel (0) target = $region21
  $region20: #{lstm_cnn_cond_forward.8} parent=0 // pred_region
    _
  $region21: #{lstm_cnn_cond_forward.8} parent=0 // pred_fallthru
    _

// kernel: lstm_cnn_cond_forward.9
$region0: #{lstm_cnn_cond_forward.9}
  #allocation0 [shape = 'u32[]', space=smem, size = 0x4, offset = 0x4, fixed_abs, tag = 'smem constant byte address 0x4 - core index']
  #allocation1 [shape = 'u32[144,128]{1,0:T(1,128)}', space=vmem, size = 0x12000, scoped, tag = 'internal scratch']
  #allocation2 [shape = 'f32[8,128]{1,0:T(8,128)}', space=vmem, size = 0x1000, scoped, tag = 'scratch operand']
  #allocation3 [shape = 'f32[8,128]{1,0:T(8,128)}', space=vmem, size = 0x1000, scoped, tag = 'scratch operand']
  #allocation4 [shape = 'f32[64,512]{1,0:T(8,128)}', space=vmem, size = 0x20000, scoped, tag = 'scratch operand']
  #allocation5 [shape = 'f32[64,128]{1,0:T(8,128)}', space=vmem, size = 0x8000, scoped, tag = 'scratch operand']
  %s0 = inlined_call_operand.vmem [shape: f32[64,4], index: 0, kind: input, shape index: {}]
  %s1 = inlined_call_operand.vmem [shape: bf16[4,128], index: 1, kind: input, shape index: {}]
  %s2 = inlined_call_operand.vmem [shape: f32[1,128], index: 2, kind: input, shape index: {}]
  %s3 = inlined_call_operand.vmem [shape: bf16[128,512], index: 3, kind: input, shape index: {}]
  %s4 = inlined_call_operand.vmem [shape: f32[1,512], index: 4, kind: input, shape index: {}]
  %s5 = inlined_call_operand.vmem [shape: bf16[128,512], index: 5, kind: input, shape index: {}]
  %s6 = inlined_call_operand.vmem [shape: bf16[128,128], index: 6, kind: input, shape index: {}]
  %s7 = inlined_call_operand.vmem [shape: f32[1,128], index: 7, kind: input, shape index: {}]
  %s8 = inlined_call_operand.vmem [shape: f32[8,128], index: 8, kind: input, shape index: {}]
  %s9 = inlined_call_operand.vmem [shape: f32[64,128], index: 9, kind: output, shape index: {}]
  %s10 = sld [smem:[#allocation0]]
  $region50: #{lstm_cnn_cond_forward.9} parent=0
    _
  %s12 = ssub.s32 1, %s10
  %s13 = scalar_select 0, %s12, %s10
  // Predicated region
  $region2: #{lstm_cnn_cond_forward.9} parent=0 // pred_check
    _
  $region3: #{lstm_cnn_cond_forward.9} parent=0 // pred_check_branch
    %15 = sbr.rel (0) target = $region5
  $region4: #{lstm_cnn_cond_forward.9} parent=0 // pred_region
    _
  $region5: #{lstm_cnn_cond_forward.9} parent=0 // pred_fallthru
    _
  // Predicated region
  $region6: #{lstm_cnn_cond_forward.9} parent=0 // pred_check
    _
  $region7: #{lstm_cnn_cond_forward.9} parent=0 // pred_check_branch
    %17 = sbr.rel (0) target = $region9
  $region8: #{lstm_cnn_cond_forward.9} parent=0 // pred_region
    _
  $region9: #{lstm_cnn_cond_forward.9} parent=0 // pred_fallthru
    _
  // Predicated region
  $region10: #{lstm_cnn_cond_forward.9} parent=0 // pred_check
    _
  $region11: #{lstm_cnn_cond_forward.9} parent=0 // pred_check_branch
    %19 = sbr.rel (0) target = $region13
  $region12: #{lstm_cnn_cond_forward.9} parent=0 // pred_region
    _
  $region13: #{lstm_cnn_cond_forward.9} parent=0 // pred_fallthru
    _
  // Predicated region
  $region14: #{lstm_cnn_cond_forward.9} parent=0 // pred_check
    _
  $region15: #{lstm_cnn_cond_forward.9} parent=0 // pred_check_branch
    %21 = sbr.rel (0) target = $region17
  $region16: #{lstm_cnn_cond_forward.9} parent=0 // pred_region
    _
  $region17: #{lstm_cnn_cond_forward.9} parent=0 // pred_fallthru
    _
  // Predicated region
  $region18: #{lstm_cnn_cond_forward.9} parent=0 // pred_check
    _
  $region19: #{lstm_cnn_cond_forward.9} parent=0 // pred_check_branch
    %23 = sbr.rel (0) target = $region21
  $region20: #{lstm_cnn_cond_forward.9} parent=0 // pred_region
    _
  $region21: #{lstm_cnn_cond_forward.9} parent=0 // pred_fallthru
    _
  // Predicated region
  $region22: #{lstm_cnn_cond_forward.9} parent=0 // pred_check
    _
  $region23: #{lstm_cnn_cond_forward.9} parent=0 // pred_check_branch
    %25 = sbr.rel (0) target = $region25
  $region24: #{lstm_cnn_cond_forward.9} parent=0 // pred_region
    _
  $region25: #{lstm_cnn_cond_forward.9} parent=0 // pred_fallthru
    _
  // Predicated region
  $region26: #{lstm_cnn_cond_forward.9} parent=0 // pred_check
    _
  $region27: #{lstm_cnn_cond_forward.9} parent=0 // pred_check_branch
    %27 = sbr.rel (0) target = $region29
  $region28: #{lstm_cnn_cond_forward.9} parent=0 // pred_region
    _
  $region29: #{lstm_cnn_cond_forward.9} parent=0 // pred_fallthru
    _
  // Predicated region
  $region30: #{lstm_cnn_cond_forward.9} parent=0 // pred_check
    _
  $region31: #{lstm_cnn_cond_forward.9} parent=0 // pred_check_branch
    %29 = sbr.rel (0) target = $region33
  $region32: #{lstm_cnn_cond_forward.9} parent=0 // pred_region
    _
  $region33: #{lstm_cnn_cond_forward.9} parent=0 // pred_fallthru
    _
  // Predicated region
  $region34: #{lstm_cnn_cond_forward.9} parent=0 // pred_check
    _
  $region35: #{lstm_cnn_cond_forward.9} parent=0 // pred_check_branch
    %31 = sbr.rel (0) target = $region37
  $region36: #{lstm_cnn_cond_forward.9} parent=0 // pred_region
    _
  $region37: #{lstm_cnn_cond_forward.9} parent=0 // pred_fallthru
    _
  %p33 = scmp.eq.s32.totalorder 0, 0
  // Predicated region
  $region38: #{lstm_cnn_cond_forward.9} parent=0 // pred_check
    %p34 = pneg %p33
  $region39: #{lstm_cnn_cond_forward.9} parent=0 // pred_check_branch
    %36 = sbr.rel (%p34) target = $region41
  $region40: #{lstm_cnn_cond_forward.9} parent=0 // pred_region
    %v37 = vld [vmem:[%s8] sm:$0xff]
    %38 = vst [vmem:[#allocation2] sm:$0xff] %v37
    %39 = vst [vmem:[#allocation3] sm:$0xff] 0.0
  $region41: #{lstm_cnn_cond_forward.9} parent=0 // pred_fallthru
    _
  %v40 = vld [vmem:[%s0] sm:$0xff]
  %v41 = vld [vmem:[%s0 + $0x8] sm:$0xff]
  %v42 = vld [vmem:[%s0 + $0x10] sm:$0xff]
  %v43 = vld [vmem:[%s0 + $0x18] sm:$0xff]
  %v44 = vld [vmem:[%s0 + $0x20] sm:$0xff]
  %v45 = vld [vmem:[%s0 + $0x28] sm:$0xff]
  %v46 = vld [vmem:[%s0 + $0x30] sm:$0xff]
  %v47 = vld [vmem:[%s0 + $0x38] sm:$0xff]
  %v48 = vpack.c.bf16 %v41, %v40
  %v49 = vpack.c.bf16 %v43, %v42
  %v50 = vpack.c.bf16 %v45, %v44
  %v51 = vpack.c.bf16 %v47, %v46
  %v52 = vld [vmem:[%s1] sm:$0x3]
  %v53 = vld [vmem:[%s2] sm:$0x1]
  %v55 = vlaneseq
  %v56 = vshrl.u32 %v55, 7
  %v57 = vsub.s32 0, %v56
  %v58 = vrot.slane %v53, %v57
  %vm60 = vcmask 31744
  %v62 = vsel %vm60, %v48, 0
  %v65 = vsel %vm60, %v49, 0
  %v68 = vsel %vm60, %v50, 0
  %v71 = vsel %vm60, %v51, 0
  %vm73 = vcmask 1041408
  %v75 = vsel %vm73, %v52, 0
  %77 = vmatprep.subr.bf16.mxu0 0
  %78 = vmatpush1.bf16.msra.mxu0 %v75
  %79 = vmatprep.subr.bf16.mxu0 0
  %80 = vmatpush1.bf16.msra.mxu0 0
  %81 = vmatprep.subr.bf16.mxu0 0
  %82 = vmatpush1.bf16.msra.mxu0 0
  %83 = vmatprep.subr.bf16.mxu0 0
  %84 = vmatpush1.bf16.msra.mxu0 0
  %85 = vmatprep.subr.bf16.mxu0 0
  %86 = vmatpush1.bf16.msra.mxu0 0
  %87 = vmatprep.subr.bf16.mxu0 0
  %88 = vmatpush1.bf16.msra.mxu0 0
  %89 = vmatprep.subr.bf16.mxu0 0
  %90 = vmatpush1.bf16.msra.mxu0 0
  %91 = vmatprep.subr.bf16.mxu0 0
  %92 = vmatpush1.bf16.msra.mxu0 0
  %93 = vmatprep.subr.bf16.mxu0 0
  %94 = vmatpush1.bf16.msra.mxu0 0
  %95 = vmatprep.subr.bf16.mxu0 0
  %96 = vmatpush1.bf16.msra.mxu0 0
  %97 = vmatprep.subr.bf16.mxu0 0
  %98 = vmatpush1.bf16.msra.mxu0 0
  %99 = vmatprep.subr.bf16.mxu0 0
  %100 = vmatpush1.bf16.msra.mxu0 0
  %101 = vmatprep.subr.bf16.mxu0 0
  %102 = vmatpush1.bf16.msra.mxu0 0
  %103 = vmatprep.subr.bf16.mxu0 0
  %104 = vmatpush1.bf16.msra.mxu0 0
  %105 = vmatprep.subr.bf16.mxu0 0
  %106 = vmatpush1.bf16.msra.mxu0 0
  %107 = vmatprep.subr.bf16.mxu0 0
  %108 = vmatpush1.bf16.msra.mxu0 0
  %109 = vmatprep.mubr.bf16.mxu0 0
  %110 = vmatmul.mubr.bf16.gmra.mrb[0].mxu0 %v62
  %v111 = vpop.f32.mrb[0].mxu0
  %v112 = vadd.f32 %v58, %v111
  %v113 = vpop.f32.mrb[0].mxu0
  %v114 = vpop.f32.mrb[0].mxu0
  %v115 = vadd.f32 %v58, %v114
  %v116 = vpop.f32.mrb[0].mxu0
  %117 = vmatprep.mubr.bf16.mxu0 0
  %118 = vmatmul.mubr.bf16.gmra.mrb[0].mxu0 %v65
  %v119 = vpop.f32.mrb[0].mxu0
  %v120 = vadd.f32 %v58, %v119
  %v121 = vpop.f32.mrb[0].mxu0
  %v122 = vpop.f32.mrb[0].mxu0
  %v123 = vadd.f32 %v58, %v122
  %v124 = vpop.f32.mrb[0].mxu0
  %125 = vmatprep.mubr.bf16.mxu0 0
  %126 = vmatmul.mubr.bf16.gmra.mrb[0].mxu0 %v68
  %v127 = vpop.f32.mrb[0].mxu0
  %v128 = vadd.f32 %v58, %v127
  %v129 = vpop.f32.mrb[0].mxu0
  %v130 = vpop.f32.mrb[0].mxu0
  %v131 = vadd.f32 %v58, %v130
  %v132 = vpop.f32.mrb[0].mxu0
  %133 = vmatprep.mubr.bf16.mxu0 0
  %134 = vmatmul.mubr.bf16.gmra.mrb[0].mxu0 %v71
  %v135 = vpop.f32.mrb[0].mxu0
  %v136 = vadd.f32 %v58, %v135
  %v137 = vpop.f32.mrb[0].mxu0
  %v138 = vpop.f32.mrb[0].mxu0
  %v139 = vadd.f32 %v58, %v138
  %v140 = vpop.f32.mrb[0].mxu0
  %141 = vdwg.mxu0
  %v142 = vmax.f32 %v112, 0.0
  %v143 = vmax.f32 %v115, 0.0
  %v144 = vmax.f32 %v120, 0.0
  %v145 = vmax.f32 %v123, 0.0
  %v146 = vmax.f32 %v128, 0.0
  %v147 = vmax.f32 %v131, 0.0
  %v148 = vmax.f32 %v136, 0.0
  %v149 = vmax.f32 %v139, 0.0
  %v150 = vpack.c.bf16 %v143, %v142
  %v151 = vpack.c.bf16 %v145, %v144
  %v152 = vpack.c.bf16 %v147, %v146
  %v153 = vpack.c.bf16 %v149, %v148
  %v154 = vld [vmem:[%s3] sm:$0xff]
  %v155 = vld [vmem:[%s3 + $0x8] sm:$0xff]
  %v156 = vld [vmem:[%s3 + $0x10] sm:$0xff]
  %v157 = vld [vmem:[%s3 + $0x18] sm:$0xff]
  %v158 = vld [vmem:[%s3 + $0x20] sm:$0xff]
  %v159 = vld [vmem:[%s3 + $0x28] sm:$0xff]
  %v160 = vld [vmem:[%s3 + $0x30] sm:$0xff]
  %v161 = vld [vmem:[%s3 + $0x38] sm:$0xff]
  %v162 = vld [vmem:[%s3 + $0x40] sm:$0xff]
  %v163 = vld [vmem:[%s3 + $0x48] sm:$0xff]
  %v164 = vld [vmem:[%s3 + $0x50] sm:$0xff]
  %v165 = vld [vmem:[%s3 + $0x58] sm:$0xff]
  %v166 = vld [vmem:[%s3 + $0x60] sm:$0xff]
  %v167 = vld [vmem:[%s3 + $0x68] sm:$0xff]
  %v168 = vld [vmem:[%s3 + $0x70] sm:$0xff]
  %v169 = vld [vmem:[%s3 + $0x78] sm:$0xff]
  %v170 = vld [vmem:[%s3 + $0x80] sm:$0xff]
  %v171 = vld [vmem:[%s3 + $0x88] sm:$0xff]
  %v172 = vld [vmem:[%s3 + $0x90] sm:$0xff]
  %v173 = vld [vmem:[%s3 + $0x98] sm:$0xff]
  %v174 = vld [vmem:[%s3 + $0xa0] sm:$0xff]
  %v175 = vld [vmem:[%s3 + $0xa8] sm:$0xff]
  %v176 = vld [vmem:[%s3 + $0xb0] sm:$0xff]
  %v177 = vld [vmem:[%s3 + $0xb8] sm:$0xff]
  %v178 = vld [vmem:[%s3 + $0xc0] sm:$0xff]
  %v179 = vld [vmem:[%s3 + $0xc8] sm:$0xff]
  %v180 = vld [vmem:[%s3 + $0xd0] sm:$0xff]
  %v181 = vld [vmem:[%s3 + $0xd8] sm:$0xff]
  %v182 = vld [vmem:[%s3 + $0xe0] sm:$0xff]
  %v183 = vld [vmem:[%s3 + $0xe8] sm:$0xff]
  %v184 = vld [vmem:[%s3 + $0xf0] sm:$0xff]
  %v185 = vld [vmem:[%s3 + $0xf8] sm:$0xff]
  %v186 = vld [vmem:[%s4] sm:$0xf]
  %v188 = vlaneseq
  %v189 = vshrl.u32 %v188, 7
  %v190 = vsub.s32 0, %v189
  %v191 = vrot.slane %v186, %v190
  %v192 = vlaneseq
  %v193 = vshrl.u32 %v192, 7
  %v194 = vsub.s32 1, %v193
  %v195 = vrot.slane %v186, %v194
  %v196 = vlaneseq
  %v197 = vshrl.u32 %v196, 7
  %v198 = vsub.s32 2, %v197
  %v199 = vrot.slane %v186, %v198
  %v200 = vlaneseq
  %v201 = vshrl.u32 %v200, 7
  %v202 = vsub.s32 3, %v201
  %v203 = vrot.slane %v186, %v202
  %v240 = vunpack.c.l.b16 %v154
  %v241 = vunpack.c.h.b16 %v154
  %v242 = vunpack.c.l.b16 %v155
  %v243 = vunpack.c.h.b16 %v155
  %v244 = vunpack.c.l.b16 %v156
  %v245 = vunpack.c.h.b16 %v156
  %v246 = vunpack.c.l.b16 %v157
  %v247 = vunpack.c.h.b16 %v157
  %v248 = vunpack.c.l.b16 %v158
  %v249 = vunpack.c.h.b16 %v158
  %v250 = vunpack.c.l.b16 %v159
  %v251 = vunpack.c.h.b16 %v159
  %v252 = vunpack.c.l.b16 %v160
  %v253 = vunpack.c.h.b16 %v160
  %v254 = vunpack.c.l.b16 %v161
  %v255 = vunpack.c.h.b16 %v161
  %v256 = vunpack.c.l.b16 %v162
  %v257 = vunpack.c.h.b16 %v162
  %v258 = vunpack.c.l.b16 %v163
  %v259 = vunpack.c.h.b16 %v163
  %v260 = vunpack.c.l.b16 %v164
  %v261 = vunpack.c.h.b16 %v164
  %v262 = vunpack.c.l.b16 %v165
  %v263 = vunpack.c.h.b16 %v165
  %v264 = vunpack.c.l.b16 %v166
  %v265 = vunpack.c.h.b16 %v166
  %v266 = vunpack.c.l.b16 %v167
  %v267 = vunpack.c.h.b16 %v167
  %v268 = vunpack.c.l.b16 %v168
  %v269 = vunpack.c.h.b16 %v168
  %v270 = vunpack.c.l.b16 %v169
  %v271 = vunpack.c.h.b16 %v169
  %v272 = vunpack.c.l.b16 %v170
  %v273 = vunpack.c.h.b16 %v170
  %v274 = vunpack.c.l.b16 %v171
  %v275 = vunpack.c.h.b16 %v171
  %v276 = vunpack.c.l.b16 %v172
  %v277 = vunpack.c.h.b16 %v172
  %v278 = vunpack.c.l.b16 %v173
  %v279 = vunpack.c.h.b16 %v173
  %v280 = vunpack.c.l.b16 %v174
  %v281 = vunpack.c.h.b16 %v174
  %v282 = vunpack.c.l.b16 %v175
  %v283 = vunpack.c.h.b16 %v175
  %v284 = vunpack.c.l.b16 %v176
  %v285 = vunpack.c.h.b16 %v176
  %v286 = vunpack.c.l.b16 %v177
  %v287 = vunpack.c.h.b16 %v177
  %v288 = vunpack.c.l.b16 %v178
  %v289 = vunpack.c.h.b16 %v178
  %v290 = vunpack.c.l.b16 %v179
  %v291 = vunpack.c.h.b16 %v179
  %v292 = vunpack.c.l.b16 %v180
  %v293 = vunpack.c.h.b16 %v180
  %v294 = vunpack.c.l.b16 %v181
  %v295 = vunpack.c.h.b16 %v181
  %v296 = vunpack.c.l.b16 %v182
  %v297 = vunpack.c.h.b16 %v182
  %v298 = vunpack.c.l.b16 %v183
  %v299 = vunpack.c.h.b16 %v183
  %v300 = vunpack.c.l.b16 %v184
  %v301 = vunpack.c.h.b16 %v184
  %v302 = vunpack.c.l.b16 %v185
  %v303 = vunpack.c.h.b16 %v185
  %v304 = vpack.c.b16 %v244, %v240
  %v305 = vpack.c.b16 %v245, %v241
  %v306 = vpack.c.b16 %v246, %v242
  %v307 = vpack.c.b16 %v247, %v243
  %v308 = vpack.c.b16 %v252, %v248
  %v309 = vpack.c.b16 %v253, %v249
  %v310 = vpack.c.b16 %v254, %v250
  %v311 = vpack.c.b16 %v255, %v251
  %v312 = vpack.c.b16 %v260, %v256
  %v313 = vpack.c.b16 %v261, %v257
  %v314 = vpack.c.b16 %v262, %v258
  %v315 = vpack.c.b16 %v263, %v259
  %v316 = vpack.c.b16 %v268, %v264
  %v317 = vpack.c.b16 %v269, %v265
  %v318 = vpack.c.b16 %v270, %v266
  %v319 = vpack.c.b16 %v271, %v267
  %v320 = vpack.c.b16 %v276, %v272
  %v321 = vpack.c.b16 %v277, %v273
  %v322 = vpack.c.b16 %v278, %v274
  %v323 = vpack.c.b16 %v279, %v275
  %v324 = vpack.c.b16 %v284, %v280
  %v325 = vpack.c.b16 %v285, %v281
  %v326 = vpack.c.b16 %v286, %v282
  %v327 = vpack.c.b16 %v287, %v283
  %v328 = vpack.c.b16 %v292, %v288
  %v329 = vpack.c.b16 %v293, %v289
  %v330 = vpack.c.b16 %v294, %v290
  %v331 = vpack.c.b16 %v295, %v291
  %v332 = vpack.c.b16 %v300, %v296
  %v333 = vpack.c.b16 %v301, %v297
  %v334 = vpack.c.b16 %v302, %v298
  %v335 = vpack.c.b16 %v303, %v299
  %368 = vmatprep.subr.bf16.mxu0 %v305
  %369 = vmatpush1.bf16.msra.mxu0 %v304
  %370 = vmatprep.subr.bf16.mxu0 %v309
  %371 = vmatpush1.bf16.msra.mxu0 %v308
  %372 = vmatprep.subr.bf16.mxu0 %v313
  %373 = vmatpush1.bf16.msra.mxu0 %v312
  %374 = vmatprep.subr.bf16.mxu0 %v317
  %375 = vmatpush1.bf16.msra.mxu0 %v316
  %376 = vmatprep.subr.bf16.mxu0 %v321
  %377 = vmatpush1.bf16.msra.mxu0 %v320
  %378 = vmatprep.subr.bf16.mxu0 %v325
  %379 = vmatpush1.bf16.msra.mxu0 %v324
  %380 = vmatprep.subr.bf16.mxu0 %v329
  %381 = vmatpush1.bf16.msra.mxu0 %v328
  %382 = vmatprep.subr.bf16.mxu0 %v333
  %383 = vmatpush1.bf16.msra.mxu0 %v332
  %384 = vmatprep.subr.bf16.mxu0 0
  %385 = vmatpush1.bf16.msra.mxu0 0
  %386 = vmatprep.subr.bf16.mxu0 0
  %387 = vmatpush1.bf16.msra.mxu0 0
  %388 = vmatprep.subr.bf16.mxu0 0
  %389 = vmatpush1.bf16.msra.mxu0 0
  %390 = vmatprep.subr.bf16.mxu0 0
  %391 = vmatpush1.bf16.msra.mxu0 0
  %392 = vmatprep.subr.bf16.mxu0 0
  %393 = vmatpush1.bf16.msra.mxu0 0
  %394 = vmatprep.subr.bf16.mxu0 0
  %395 = vmatpush1.bf16.msra.mxu0 0
  %396 = vmatprep.subr.bf16.mxu0 0
  %397 = vmatpush1.bf16.msra.mxu0 0
  %398 = vmatprep.subr.bf16.mxu0 0
  %399 = vmatpush1.bf16.msra.mxu0 0
  %400 = vmatprep.mubr.bf16.mxu0 0
  %401 = vmatmul.mubr.bf16.gmra.mrb[0].mxu0 %v150
  %v402 = vpop.f32.mrb[0].mxu0
  %v403 = vadd.f32 %v191, %v402
  %v404 = vpop.f32.mrb[0].mxu0
  %v405 = vadd.f32 %v195, %v404
  %v406 = vpop.f32.mrb[0].mxu0
  %v407 = vadd.f32 %v191, %v406
  %v408 = vpop.f32.mrb[0].mxu0
  %v409 = vadd.f32 %v195, %v408
  %410 = vmatprep.mubr.bf16.mxu0 0
  %411 = vmatmul.mubr.bf16.gmra.mrb[0].mxu0 %v151
  %v412 = vpop.f32.mrb[0].mxu0
  %v413 = vadd.f32 %v191, %v412
  %v414 = vpop.f32.mrb[0].mxu0
  %v415 = vadd.f32 %v195, %v414
  %v416 = vpop.f32.mrb[0].mxu0
  %v417 = vadd.f32 %v191, %v416
  %v418 = vpop.f32.mrb[0].mxu0
  %v419 = vadd.f32 %v195, %v418
  %420 = vmatprep.mubr.bf16.mxu0 0
  %421 = vmatmul.mubr.bf16.gmra.mrb[0].mxu0 %v152
  %v422 = vpop.f32.mrb[0].mxu0
  %v423 = vadd.f32 %v191, %v422
  %v424 = vpop.f32.mrb[0].mxu0
  %v425 = vadd.f32 %v195, %v424
  %v426 = vpop.f32.mrb[0].mxu0
  %v427 = vadd.f32 %v191, %v426
  %v428 = vpop.f32.mrb[0].mxu0
  %v429 = vadd.f32 %v195, %v428
  %430 = vmatprep.mubr.bf16.mxu0 0
  %431 = vmatmul.mubr.bf16.gmra.mrb[0].mxu0 %v153
  %v432 = vpop.f32.mrb[0].mxu0
  %v433 = vadd.f32 %v191, %v432
  %v434 = vpop.f32.mrb[0].mxu0
  %v435 = vadd.f32 %v195, %v434
  %v436 = vpop.f32.mrb[0].mxu0
  %v437 = vadd.f32 %v191, %v436
  %v438 = vpop.f32.mrb[0].mxu0
  %v439 = vadd.f32 %v195, %v438
  %440 = vdwg.mxu0
  %441 = vmatprep.subr.bf16.mxu0 %v307
  %442 = vmatpush1.bf16.msra.mxu0 %v306
  %443 = vmatprep.subr.bf16.mxu0 %v311
  %444 = vmatpush1.bf16.msra.mxu0 %v310
  %445 = vmatprep.subr.bf16.mxu0 %v315
  %446 = vmatpush1.bf16.msra.mxu0 %v314
  %447 = vmatprep.subr.bf16.mxu0 %v319
  %448 = vmatpush1.bf16.msra.mxu0 %v318
  %449 = vmatprep.subr.bf16.mxu0 %v323
  %450 = vmatpush1.bf16.msra.mxu0 %v322
  %451 = vmatprep.subr.bf16.mxu0 %v327
  %452 = vmatpush1.bf16.msra.mxu0 %v326
  %453 = vmatprep.subr.bf16.mxu0 %v331
  %454 = vmatpush1.bf16.msra.mxu0 %v330
  %455 = vmatprep.subr.bf16.mxu0 %v335
  %456 = vmatpush1.bf16.msra.mxu0 %v334
  %457 = vmatprep.subr.bf16.mxu0 0
  %458 = vmatpush1.bf16.msra.mxu0 0
  %459 = vmatprep.subr.bf16.mxu0 0
  %460 = vmatpush1.bf16.msra.mxu0 0
  %461 = vmatprep.subr.bf16.mxu0 0
  %462 = vmatpush1.bf16.msra.mxu0 0
  %463 = vmatprep.subr.bf16.mxu0 0
  %464 = vmatpush1.bf16.msra.mxu0 0
  %465 = vmatprep.subr.bf16.mxu0 0
  %466 = vmatpush1.bf16.msra.mxu0 0
  %467 = vmatprep.subr.bf16.mxu0 0
  %468 = vmatpush1.bf16.msra.mxu0 0
  %469 = vmatprep.subr.bf16.mxu0 0
  %470 = vmatpush1.bf16.msra.mxu0 0
  %471 = vmatprep.subr.bf16.mxu0 0
  %472 = vmatpush1.bf16.msra.mxu0 0
  %473 = vmatprep.mubr.bf16.mxu0 0
  %474 = vmatmul.mubr.bf16.gmra.mrb[0].mxu0 %v150
  %v475 = vpop.f32.mrb[0].mxu0
  %v476 = vadd.f32 %v199, %v475
  %v477 = vpop.f32.mrb[0].mxu0
  %v478 = vadd.f32 %v203, %v477
  %v479 = vpop.f32.mrb[0].mxu0
  %v480 = vadd.f32 %v199, %v479
  %v481 = vpop.f32.mrb[0].mxu0
  %v482 = vadd.f32 %v203, %v481
  %483 = vmatprep.mubr.bf16.mxu0 0
  %484 = vmatmul.mubr.bf16.gmra.mrb[0].mxu0 %v151
  %v485 = vpop.f32.mrb[0].mxu0
  %v486 = vadd.f32 %v199, %v485
  %v487 = vpop.f32.mrb[0].mxu0
  %v488 = vadd.f32 %v203, %v487
  %v489 = vpop.f32.mrb[0].mxu0
  %v490 = vadd.f32 %v199, %v489
  %v491 = vpop.f32.mrb[0].mxu0
  %v492 = vadd.f32 %v203, %v491
  %493 = vmatprep.mubr.bf16.mxu0 0
  %494 = vmatmul.mubr.bf16.gmra.mrb[0].mxu0 %v152
  %v495 = vpop.f32.mrb[0].mxu0
  %v496 = vadd.f32 %v199, %v495
  %v497 = vpop.f32.mrb[0].mxu0
  %v498 = vadd.f32 %v203, %v497
  %v499 = vpop.f32.mrb[0].mxu0
  %v500 = vadd.f32 %v199, %v499
  %v501 = vpop.f32.mrb[0].mxu0
  %v502 = vadd.f32 %v203, %v501
  %503 = vmatprep.mubr.bf16.mxu0 0
  %504 = vmatmul.mubr.bf16.gmra.mrb[0].mxu0 %v153
  %v505 = vpop.f32.mrb[0].mxu0
  %v506 = vadd.f32 %v199, %v505
  %v507 = vpop.f32.mrb[0].mxu0
  %v508 = vadd.f32 %v203, %v507
  %v509 = vpop.f32.mrb[0].mxu0
  %v510 = vadd.f32 %v199, %v509
  %v511 = vpop.f32.mrb[0].mxu0
  %v512 = vadd.f32 %v203, %v511
  %513 = vdwg.mxu0
  %514 = vst [vmem:[#allocation4] sm:$0xff] %v403
  %515 = vst [vmem:[#allocation4 + $0x8] sm:$0xff] %v405
  %516 = vst [vmem:[#allocation4 + $0x10] sm:$0xff] %v476
  %517 = vst [vmem:[#allocation4 + $0x18] sm:$0xff] %v478
  %518 = vst [vmem:[#allocation4 + $0x20] sm:$0xff] %v407
  %519 = vst [vmem:[#allocation4 + $0x28] sm:$0xff] %v409
  %520 = vst [vmem:[#allocation4 + $0x30] sm:$0xff] %v480
  %521 = vst [vmem:[#allocation4 + $0x38] sm:$0xff] %v482
  %522 = vst [vmem:[#allocation4 + $0x40] sm:$0xff] %v413
  %523 = vst [vmem:[#allocation4 + $0x48] sm:$0xff] %v415
  %524 = vst [vmem:[#allocation4 + $0x50] sm:$0xff] %v486
  %525 = vst [vmem:[#allocation4 + $0x58] sm:$0xff] %v488
  %526 = vst [vmem:[#allocation4 + $0x60] sm:$0xff] %v417
  %527 = vst [vmem:[#allocation4 + $0x68] sm:$0xff] %v419
  %528 = vst [vmem:[#allocation4 + $0x70] sm:$0xff] %v490
  %529 = vst [vmem:[#allocation4 + $0x78] sm:$0xff] %v492
  %530 = vst [vmem:[#allocation4 + $0x80] sm:$0xff] %v423
  %531 = vst [vmem:[#allocation4 + $0x88] sm:$0xff] %v425
  %532 = vst [vmem:[#allocation4 + $0x90] sm:$0xff] %v496
  %533 = vst [vmem:[#allocation4 + $0x98] sm:$0xff] %v498
  %534 = vst [vmem:[#allocation4 + $0xa0] sm:$0xff] %v427
  %535 = vst [vmem:[#allocation4 + $0xa8] sm:$0xff] %v429
  %536 = vst [vmem:[#allocation4 + $0xb0] sm:$0xff] %v500
  %537 = vst [vmem:[#allocation4 + $0xb8] sm:$0xff] %v502
  %538 = vst [vmem:[#allocation4 + $0xc0] sm:$0xff] %v433
  %539 = vst [vmem:[#allocation4 + $0xc8] sm:$0xff] %v435
  %540 = vst [vmem:[#allocation4 + $0xd0] sm:$0xff] %v506
  %541 = vst [vmem:[#allocation4 + $0xd8] sm:$0xff] %v508
  %542 = vst [vmem:[#allocation4 + $0xe0] sm:$0xff] %v437
  %543 = vst [vmem:[#allocation4 + $0xe8] sm:$0xff] %v439
  %544 = vst [vmem:[#allocation4 + $0xf0] sm:$0xff] %v510
  %545 = vst [vmem:[#allocation4 + $0xf8] sm:$0xff] %v512
  %v546 = vld [vmem:[%s5] sm:$0xff]
  %v547 = vld [vmem:[%s5 + $0x8] sm:$0xff]
  %v548 = vld [vmem:[%s5 + $0x10] sm:$0xff]
  %v549 = vld [vmem:[%s5 + $0x18] sm:$0xff]
  %v550 = vld [vmem:[%s5 + $0x20] sm:$0xff]
  %v551 = vld [vmem:[%s5 + $0x28] sm:$0xff]
  %v552 = vld [vmem:[%s5 + $0x30] sm:$0xff]
  %v553 = vld [vmem:[%s5 + $0x38] sm:$0xff]
  %v554 = vld [vmem:[%s5 + $0x40] sm:$0xff]
  %v555 = vld [vmem:[%s5 + $0x48] sm:$0xff]
  %v556 = vld [vmem:[%s5 + $0x50] sm:$0xff]
  %v557 = vld [vmem:[%s5 + $0x58] sm:$0xff]
  %v558 = vld [vmem:[%s5 + $0x60] sm:$0xff]
  %v559 = vld [vmem:[%s5 + $0x68] sm:$0xff]
  %v560 = vld [vmem:[%s5 + $0x70] sm:$0xff]
  %v561 = vld [vmem:[%s5 + $0x78] sm:$0xff]
  %v562 = vld [vmem:[%s5 + $0x80] sm:$0xff]
  %v563 = vld [vmem:[%s5 + $0x88] sm:$0xff]
  %v564 = vld [vmem:[%s5 + $0x90] sm:$0xff]
  %v565 = vld [vmem:[%s5 + $0x98] sm:$0xff]
  %v566 = vld [vmem:[%s5 + $0xa0] sm:$0xff]
  %v567 = vld [vmem:[%s5 + $0xa8] sm:$0xff]
  %v568 = vld [vmem:[%s5 + $0xb0] sm:$0xff]
  %v569 = vld [vmem:[%s5 + $0xb8] sm:$0xff]
  %v570 = vld [vmem:[%s5 + $0xc0] sm:$0xff]
  %v571 = vld [vmem:[%s5 + $0xc8] sm:$0xff]
  %v572 = vld [vmem:[%s5 + $0xd0] sm:$0xff]
  %v573 = vld [vmem:[%s5 + $0xd8] sm:$0xff]
  %v574 = vld [vmem:[%s5 + $0xe0] sm:$0xff]
  %v575 = vld [vmem:[%s5 + $0xe8] sm:$0xff]
  %v576 = vld [vmem:[%s5 + $0xf0] sm:$0xff]
  %v577 = vld [vmem:[%s5 + $0xf8] sm:$0xff]
  %v578 = vld [vmem:[#allocation2] sm:$0xff]
  %v579 = vld [vmem:[#allocation3] sm:$0xff]
  %s580 = smul.u32 0, 4
  %s581 = smul.addr %s580, 8
  %s582 = scalar_lea.vmem [#allocation4], %s581
  %v583 = vld [vmem:[%s582] sm:$0xff]
  %v584 = vld [vmem:[%s582 + $0x8] sm:$0xff]
  %v585 = vld [vmem:[%s582 + $0x10] sm:$0xff]
  %v586 = vld [vmem:[%s582 + $0x18] sm:$0xff]
  %v587 = vpack.c.bf16 %v578, %v578
  %v620 = vunpack.c.l.b16 %v546
  %v621 = vunpack.c.h.b16 %v546
  %v622 = vunpack.c.l.b16 %v547
  %v623 = vunpack.c.h.b16 %v547
  %v624 = vunpack.c.l.b16 %v548
  %v625 = vunpack.c.h.b16 %v548
  %v626 = vunpack.c.l.b16 %v549
  %v627 = vunpack.c.h.b16 %v549
  %v628 = vunpack.c.l.b16 %v550
  %v629 = vunpack.c.h.b16 %v550
  %v630 = vunpack.c.l.b16 %v551
  %v631 = vunpack.c.h.b16 %v551
  %v632 = vunpack.c.l.b16 %v552
  %v633 = vunpack.c.h.b16 %v552
  %v634 = vunpack.c.l.b16 %v553
  %v635 = vunpack.c.h.b16 %v553
  %v636 = vunpack.c.l.b16 %v554
  %v637 = vunpack.c.h.b16 %v554
  %v638 = vunpack.c.l.b16 %v555
  %v639 = vunpack.c.h.b16 %v555
  %v640 = vunpack.c.l.b16 %v556
  %v641 = vunpack.c.h.b16 %v556
  %v642 = vunpack.c.l.b16 %v557
  %v643 = vunpack.c.h.b16 %v557
  %v644 = vunpack.c.l.b16 %v558
  %v645 = vunpack.c.h.b16 %v558
  %v646 = vunpack.c.l.b16 %v559
  %v647 = vunpack.c.h.b16 %v559
  %v648 = vunpack.c.l.b16 %v560
  %v649 = vunpack.c.h.b16 %v560
  %v650 = vunpack.c.l.b16 %v561
  %v651 = vunpack.c.h.b16 %v561
  %v652 = vunpack.c.l.b16 %v562
  %v653 = vunpack.c.h.b16 %v562
  %v654 = vunpack.c.l.b16 %v563
  %v655 = vunpack.c.h.b16 %v563
  %v656 = vunpack.c.l.b16 %v564
  %v657 = vunpack.c.h.b16 %v564
  %v658 = vunpack.c.l.b16 %v565
  %v659 = vunpack.c.h.b16 %v565
  %v660 = vunpack.c.l.b16 %v566
  %v661 = vunpack.c.h.b16 %v566
  %v662 = vunpack.c.l.b16 %v567
  %v663 = vunpack.c.h.b16 %v567
  %v664 = vunpack.c.l.b16 %v568
  %v665 = vunpack.c.h.b16 %v568
  %v666 = vunpack.c.l.b16 %v569
  %v667 = vunpack.c.h.b16 %v569
  %v668 = vunpack.c.l.b16 %v570
  %v669 = vunpack.c.h.b16 %v570
  %v670 = vunpack.c.l.b16 %v571
  %v671 = vunpack.c.h.b16 %v571
  %v672 = vunpack.c.l.b16 %v572
  %v673 = vunpack.c.h.b16 %v572
  %v674 = vunpack.c.l.b16 %v573
  %v675 = vunpack.c.h.b16 %v573
  %v676 = vunpack.c.l.b16 %v574
  %v677 = vunpack.c.h.b16 %v574
  %v678 = vunpack.c.l.b16 %v575
  %v679 = vunpack.c.h.b16 %v575
  %v680 = vunpack.c.l.b16 %v576
  %v681 = vunpack.c.h.b16 %v576
  %v682 = vunpack.c.l.b16 %v577
  %v683 = vunpack.c.h.b16 %v577
  %v684 = vpack.c.b16 %v624, %v620
  %v685 = vpack.c.b16 %v625, %v621
  %v686 = vpack.c.b16 %v626, %v622
  %v687 = vpack.c.b16 %v627, %v623
  %v688 = vpack.c.b16 %v632, %v628
  %v689 = vpack.c.b16 %v633, %v629
  %v690 = vpack.c.b16 %v634, %v630
  %v691 = vpack.c.b16 %v635, %v631
  %v692 = vpack.c.b16 %v640, %v636
  %v693 = vpack.c.b16 %v641, %v637
  %v694 = vpack.c.b16 %v642, %v638
  %v695 = vpack.c.b16 %v643, %v639
  %v696 = vpack.c.b16 %v648, %v644
  %v697 = vpack.c.b16 %v649, %v645
  %v698 = vpack.c.b16 %v650, %v646
  %v699 = vpack.c.b16 %v651, %v647
  %v700 = vpack.c.b16 %v656, %v652
  %v701 = vpack.c.b16 %v657, %v653
  %v702 = vpack.c.b16 %v658, %v654
  %v703 = vpack.c.b16 %v659, %v655
  %v704 = vpack.c.b16 %v664, %v660
  %v705 = vpack.c.b16 %v665, %v661
  %v706 = vpack.c.b16 %v666, %v662
  %v707 = vpack.c.b16 %v667, %v663
  %v708 = vpack.c.b16 %v672, %v668
  %v709 = vpack.c.b16 %v673, %v669
  %v710 = vpack.c.b16 %v674, %v670
  %v711 = vpack.c.b16 %v675, %v671
  %v712 = vpack.c.b16 %v680, %v676
  %v713 = vpack.c.b16 %v681, %v677
  %v714 = vpack.c.b16 %v682, %v678
  %v715 = vpack.c.b16 %v683, %v679
  %748 = vmatprep.subr.bf16.mxu0 %v685
  %749 = vmatpush1.bf16.msra.mxu0 %v684
  %750 = vmatprep.subr.bf16.mxu0 %v689
  %751 = vmatpush1.bf16.msra.mxu0 %v688
  %752 = vmatprep.subr.bf16.mxu0 %v693
  %753 = vmatpush1.bf16.msra.mxu0 %v692
  %754 = vmatprep.subr.bf16.mxu0 %v697
  %755 = vmatpush1.bf16.msra.mxu0 %v696
  %756 = vmatprep.subr.bf16.mxu0 %v701
  %757 = vmatpush1.bf16.msra.mxu0 %v700
  %758 = vmatprep.subr.bf16.mxu0 %v705
  %759 = vmatpush1.bf16.msra.mxu0 %v704
  %760 = vmatprep.subr.bf16.mxu0 %v709
  %761 = vmatpush1.bf16.msra.mxu0 %v708
  %762 = vmatprep.subr.bf16.mxu0 %v713
  %763 = vmatpush1.bf16.msra.mxu0 %v712
  %764 = vmatprep.subr.bf16.mxu0 0
  %765 = vmatpush1.bf16.msra.mxu0 0
  %766 = vmatprep.subr.bf16.mxu0 0
  %767 = vmatpush1.bf16.msra.mxu0 0
  %768 = vmatprep.subr.bf16.mxu0 0
  %769 = vmatpush1.bf16.msra.mxu0 0
  %770 = vmatprep.subr.bf16.mxu0 0
  %771 = vmatpush1.bf16.msra.mxu0 0
  %772 = vmatprep.subr.bf16.mxu0 0
  %773 = vmatpush1.bf16.msra.mxu0 0
  %774 = vmatprep.subr.bf16.mxu0 0
  %775 = vmatpush1.bf16.msra.mxu0 0
  %776 = vmatprep.subr.bf16.mxu0 0
  %777 = vmatpush1.bf16.msra.mxu0 0
  %778 = vmatprep.subr.bf16.mxu0 0
  %779 = vmatpush1.bf16.msra.mxu0 0
  %780 = vmatprep.mubr.bf16.mxu0 0
  %781 = vmatmul.mubr.bf16.gmra.mrb[0].mxu0 %v587
  %v782 = vpop.f32.mrb[0].mxu0
  %v783 = vadd.f32 0.0, %v782
  %v784 = vpop.f32.mrb[0].mxu0
  %v785 = vadd.f32 0.0, %v784
  %v786 = vpop.f32.mrb[0].mxu0
  %v787 = vpop.f32.mrb[0].mxu0
  %788 = vdwg.mxu0
  %789 = vmatprep.subr.bf16.mxu0 %v687
  %790 = vmatpush1.bf16.msra.mxu0 %v686
  %791 = vmatprep.subr.bf16.mxu0 %v691
  %792 = vmatpush1.bf16.msra.mxu0 %v690
  %793 = vmatprep.subr.bf16.mxu0 %v695
  %794 = vmatpush1.bf16.msra.mxu0 %v694
  %795 = vmatprep.subr.bf16.mxu0 %v699
  %796 = vmatpush1.bf16.msra.mxu0 %v698
  %797 = vmatprep.subr.bf16.mxu0 %v703
  %798 = vmatpush1.bf16.msra.mxu0 %v702
  %799 = vmatprep.subr.bf16.mxu0 %v707
  %800 = vmatpush1.bf16.msra.mxu0 %v706
  %801 = vmatprep.subr.bf16.mxu0 %v711
  %802 = vmatpush1.bf16.msra.mxu0 %v710
  %803 = vmatprep.subr.bf16.mxu0 %v715
  %804 = vmatpush1.bf16.msra.mxu0 %v714
  %805 = vmatprep.subr.bf16.mxu0 0
  %806 = vmatpush1.bf16.msra.mxu0 0
  %807 = vmatprep.subr.bf16.mxu0 0
  %808 = vmatpush1.bf16.msra.mxu0 0
  %809 = vmatprep.subr.bf16.mxu0 0
  %810 = vmatpush1.bf16.msra.mxu0 0
  %811 = vmatprep.subr.bf16.mxu0 0
  %812 = vmatpush1.bf16.msra.mxu0 0
  %813 = vmatprep.subr.bf16.mxu0 0
  %814 = vmatpush1.bf16.msra.mxu0 0
  %815 = vmatprep.subr.bf16.mxu0 0
  %816 = vmatpush1.bf16.msra.mxu0 0
  %817 = vmatprep.subr.bf16.mxu0 0
  %818 = vmatpush1.bf16.msra.mxu0 0
  %819 = vmatprep.subr.bf16.mxu0 0
  %820 = vmatpush1.bf16.msra.mxu0 0
  %821 = vmatprep.mubr.bf16.mxu0 0
  %822 = vmatmul.mubr.bf16.gmra.mrb[0].mxu0 %v587
  %v823 = vpop.f32.mrb[0].mxu0
  %v824 = vadd.f32 0.0, %v823
  %v825 = vpop.f32.mrb[0].mxu0
  %v826 = vadd.f32 0.0, %v825
  %v827 = vpop.f32.mrb[0].mxu0
  %v828 = vpop.f32.mrb[0].mxu0
  %829 = vdwg.mxu0
  %v830 = vadd.f32 %v583, %v783
  %v831 = vadd.f32 %v584, %v785
  %v832 = vadd.f32 %v585, %v824
  %v833 = vadd.f32 %v586, %v826
  %v834 = vxor.u32 %v830, 2147483648
  %v835 = vmul.f32 %v834, 1.442695
  %v836 = vpow.pop %v835
  %v837 = vadd.f32 %v836, 1.0
  %v838 = vrcp.pop %v837
  %v839 = vmul.f32 1.0, %v838
  %v840 = vxor.u32 %v831, 2147483648
  %v841 = vmul.f32 %v840, 1.442695
  %v842 = vpow.pop %v841
  %v843 = vadd.f32 %v842, 1.0
  %v844 = vrcp.pop %v843
  %v845 = vmul.f32 1.0, %v844
  %v846 = vtanh.pop %v832
  %v847 = vxor.u32 %v833, 2147483648
  %v848 = vmul.f32 %v847, 1.442695
  %v849 = vpow.pop %v848
  %v850 = vadd.f32 %v849, 1.0
  %v851 = vrcp.pop %v850
  %v852 = vmul.f32 1.0, %v851
  %v853 = vmul.f32 %v845, %v579
  %v854 = vmul.f32 %v839, %v846
  %v855 = vadd.f32 %v853, %v854
  %v856 = vtanh.pop %v855
  %v857 = vmul.f32 %v852, %v856
  %858 = vst [vmem:[#allocation2] sm:$0xff] %v857
  %859 = vst [vmem:[#allocation3] sm:$0xff] %v855
  %860 = vst [vmem:[#allocation5] sm:$0xff] %v857
  %v861 = vld [vmem:[#allocation2] sm:$0xff]
  %v862 = vld [vmem:[#allocation3] sm:$0xff]
  %s863 = smul.u32 1, 4
  %s864 = smul.addr %s863, 8
  %s865 = scalar_lea.vmem [#allocation4], %s864
  %v866 = vld [vmem:[%s865] sm:$0xff]
  %v867 = vld [vmem:[%s865 + $0x8] sm:$0xff]
  %v868 = vld [vmem:[%s865 + $0x10] sm:$0xff]
  %v869 = vld [vmem:[%s865 + $0x18] sm:$0xff]
  %v870 = vpack.c.bf16 %v861, %v861
  %871 = vmatprep.subr.bf16.mxu0 %v685
  %872 = vmatpush1.bf16.msra.mxu0 %v684
  %873 = vmatprep.subr.bf16.mxu0 %v689
  %874 = vmatpush1.bf16.msra.mxu0 %v688
  %875 = vmatprep.subr.bf16.mxu0 %v693
  %876 = vmatpush1.bf16.msra.mxu0 %v692
  %877 = vmatprep.subr.bf16.mxu0 %v697
  %878 = vmatpush1.bf16.msra.mxu0 %v696
  %879 = vmatprep.subr.bf16.mxu0 %v701
  %880 = vmatpush1.bf16.msra.mxu0 %v700
  %881 = vmatprep.subr.bf16.mxu0 %v705
  %882 = vmatpush1.bf16.msra.mxu0 %v704
  %883 = vmatprep.subr.bf16.mxu0 %v709
  %884 = vmatpush1.bf16.msra.mxu0 %v708
  %885 = vmatprep.subr.bf16.mxu0 %v713
  %886 = vmatpush1.bf16.msra.mxu0 %v712
  %887 = vmatprep.subr.bf16.mxu0 0
  %888 = vmatpush1.bf16.msra.mxu0 0
  %889 = vmatprep.subr.bf16.mxu0 0
  %890 = vmatpush1.bf16.msra.mxu0 0
  %891 = vmatprep.subr.bf16.mxu0 0
  %892 = vmatpush1.bf16.msra.mxu0 0
  %893 = vmatprep.subr.bf16.mxu0 0
  %894 = vmatpush1.bf16.msra.mxu0 0
  %895 = vmatprep.subr.bf16.mxu0 0
  %896 = vmatpush1.bf16.msra.mxu0 0
  %897 = vmatprep.subr.bf16.mxu0 0
  %898 = vmatpush1.bf16.msra.mxu0 0
  %899 = vmatprep.subr.bf16.mxu0 0
  %900 = vmatpush1.bf16.msra.mxu0 0
  %901 = vmatprep.subr.bf16.mxu0 0
  %902 = vmatpush1.bf16.msra.mxu0 0
  %903 = vmatprep.mubr.bf16.mxu0 0
  %904 = vmatmul.mubr.bf16.gmra.mrb[0].mxu0 %v870
  %v905 = vpop.f32.mrb[0].mxu0
  %v906 = vadd.f32 0.0, %v905
  %v907 = vpop.f32.mrb[0].mxu0
  %v908 = vadd.f32 0.0, %v907
  %v909 = vpop.f32.mrb[0].mxu0
  %v910 = vpop.f32.mrb[0].mxu0
  %911 = vdwg.mxu0
  %912 = vmatprep.subr.bf16.mxu0 %v687
  %913 = vmatpush1.bf16.msra.mxu0 %v686
  %914 = vmatprep.subr.bf16.mxu0 %v691
  %915 = vmatpush1.bf16.msra.mxu0 %v690
  %916 = vmatprep.subr.bf16.mxu0 %v695
  %917 = vmatpush1.bf16.msra.mxu0 %v694
  %918 = vmatprep.subr.bf16.mxu0 %v699
  %919 = vmatpush1.bf16.msra.mxu0 %v698
  %920 = vmatprep.subr.bf16.mxu0 %v703
  %921 = vmatpush1.bf16.msra.mxu0 %v702
  %922 = vmatprep.subr.bf16.mxu0 %v707
  %923 = vmatpush1.bf16.msra.mxu0 %v706
  %924 = vmatprep.subr.bf16.mxu0 %v711
  %925 = vmatpush1.bf16.msra.mxu0 %v710
  %926 = vmatprep.subr.bf16.mxu0 %v715
  %927 = vmatpush1.bf16.msra.mxu0 %v714
  %928 = vmatprep.subr.bf16.mxu0 0
  %929 = vmatpush1.bf16.msra.mxu0 0
  %930 = vmatprep.subr.bf16.mxu0 0
  %931 = vmatpush1.bf16.msra.mxu0 0
  %932 = vmatprep.subr.bf16.mxu0 0
  %933 = vmatpush1.bf16.msra.mxu0 0
  %934 = vmatprep.subr.bf16.mxu0 0
  %935 = vmatpush1.bf16.msra.mxu0 0
  %936 = vmatprep.subr.bf16.mxu0 0
  %937 = vmatpush1.bf16.msra.mxu0 0
  %938 = vmatprep.subr.bf16.mxu0 0
  %939 = vmatpush1.bf16.msra.mxu0 0
  %940 = vmatprep.subr.bf16.mxu0 0
  %941 = vmatpush1.bf16.msra.mxu0 0
  %942 = vmatprep.subr.bf16.mxu0 0
  %943 = vmatpush1.bf16.msra.mxu0 0
  %944 = vmatprep.mubr.bf16.mxu0 0
  %945 = vmatmul.mubr.bf16.gmra.mrb[0].mxu0 %v870
  %v946 = vpop.f32.mrb[0].mxu0
  %v947 = vadd.f32 0.0, %v946
  %v948 = vpop.f32.mrb[0].mxu0
  %v949 = vadd.f32 0.0, %v948
  %v950 = vpop.f32.mrb[0].mxu0
  %v951 = vpop.f32.mrb[0].mxu0
  %952 = vdwg.mxu0
  %v953 = vadd.f32 %v866, %v906
  %v954 = vadd.f32 %v867, %v908
  %v955 = vadd.f32 %v868, %v947
  %v956 = vadd.f32 %v869, %v949
  %v957 = vxor.u32 %v953, 2147483648
  %v958 = vmul.f32 %v957, 1.442695
  %v959 = vpow.pop %v958
  %v960 = vadd.f32 %v959, 1.0
  %v961 = vrcp.pop %v960
  %v962 = vmul.f32 1.0, %v961
  %v963 = vxor.u32 %v954, 2147483648
  %v964 = vmul.f32 %v963, 1.442695
  %v965 = vpow.pop %v964
  %v966 = vadd.f32 %v965, 1.0
  %v967 = vrcp.pop %v966
  %v968 = vmul.f32 1.0, %v967
  %v969 = vtanh.pop %v955
  %v970 = vxor.u32 %v956, 2147483648
  %v971 = vmul.f32 %v970, 1.442695
  %v972 = vpow.pop %v971
  %v973 = vadd.f32 %v972, 1.0
  %v974 = vrcp.pop %v973
  %v975 = vmul.f32 1.0, %v974
  %v976 = vmul.f32 %v968, %v862
  %v977 = vmul.f32 %v962, %v969
  %v978 = vadd.f32 %v976, %v977
  %v979 = vtanh.pop %v978
  %v980 = vmul.f32 %v975, %v979
  %981 = vst [vmem:[#allocation2] sm:$0xff] %v980
  %982 = vst [vmem:[#allocation3] sm:$0xff] %v978
  %s983 = scalar_lea.vmem [#allocation5], 8
  %984 = vst [vmem:[%s983] sm:$0xff] %v980
  %v985 = vld [vmem:[#allocation2] sm:$0xff]
  %v986 = vld [vmem:[#allocation3] sm:$0xff]
  %s987 = smul.u32 2, 4
  %s988 = smul.addr %s987, 8
  %s989 = scalar_lea.vmem [#allocation4], %s988
  %v990 = vld [vmem:[%s989] sm:$0xff]
  %v991 = vld [vmem:[%s989 + $0x8] sm:$0xff]
  %v992 = vld [vmem:[%s989 + $0x10] sm:$0xff]
  %v993 = vld [vmem:[%s989 + $0x18] sm:$0xff]
  %v994 = vpack.c.bf16 %v985, %v985
  %995 = vmatprep.subr.bf16.mxu0 %v685
  %996 = vmatpush1.bf16.msra.mxu0 %v684
  %997 = vmatprep.subr.bf16.mxu0 %v689
  %998 = vmatpush1.bf16.msra.mxu0 %v688
  %999 = vmatprep.subr.bf16.mxu0 %v693
  %1000 = vmatpush1.bf16.msra.mxu0 %v692
  %1001 = vmatprep.subr.bf16.mxu0 %v697
  %1002 = vmatpush1.bf16.msra.mxu0 %v696
  %1003 = vmatprep.subr.bf16.mxu0 %v701
  %1004 = vmatpush1.bf16.msra.mxu0 %v700
  %1005 = vmatprep.subr.bf16.mxu0 %v705
  %1006 = vmatpush1.bf16.msra.mxu0 %v704
  %1007 = vmatprep.subr.bf16.mxu0 %v709
  %1008 = vmatpush1.bf16.msra.mxu0 %v708
  %1009 = vmatprep.subr.bf16.mxu0 %v713
  %1010 = vmatpush1.bf16.msra.mxu0 %v712
  %1011 = vmatprep.subr.bf16.mxu0 0
  %1012 = vmatpush1.bf16.msra.mxu0 0
  %1013 = vmatprep.subr.bf16.mxu0 0
  %1014 = vmatpush1.bf16.msra.mxu0 0
  %1015 = vmatprep.subr.bf16.mxu0 0
  %1016 = vmatpush1.bf16.msra.mxu0 0
  %1017 = vmatprep.subr.bf16.mxu0 0
  %1018 = vmatpush1.bf16.msra.mxu0 0
  %1019 = vmatprep.subr.bf16.mxu0 0
  %1020 = vmatpush1.bf16.msra.mxu0 0
  %1021 = vmatprep.subr.bf16.mxu0 0
  %1022 = vmatpush1.bf16.msra.mxu0 0
  %1023 = vmatprep.subr.bf16.mxu0 0
  %1024 = vmatpush1.bf16.msra.mxu0 0
  %1025 = vmatprep.subr.bf16.mxu0 0
  %1026 = vmatpush1.bf16.msra.mxu0 0
  %1027 = vmatprep.mubr.bf16.mxu0 0
  %1028 = vmatmul.mubr.bf16.gmra.mrb[0].mxu0 %v994
  %v1029 = vpop.f32.mrb[0].mxu0
  %v1030 = vadd.f32 0.0, %v1029
  %v1031 = vpop.f32.mrb[0].mxu0
  %v1032 = vadd.f32 0.0, %v1031
  %v1033 = vpop.f32.mrb[0].mxu0
  %v1034 = vpop.f32.mrb[0].mxu0
  %1035 = vdwg.mxu0
  %1036 = vmatprep.subr.bf16.mxu0 %v687
  %1037 = vmatpush1.bf16.msra.mxu0 %v686
  %1038 = vmatprep.subr.bf16.mxu0 %v691
  %1039 = vmatpush1.bf16.msra.mxu0 %v690
  %1040 = vmatprep.subr.bf16.mxu0 %v695
  %1041 = vmatpush1.bf16.msra.mxu0 %v694
  %1042 = vmatprep.subr.bf16.mxu0 %v699
  %1043 = vmatpush1.bf16.msra.mxu0 %v698
  %1044 = vmatprep.subr.bf16.mxu0 %v703
  %1045 = vmatpush1.bf16.msra.mxu0 %v702
  %1046 = vmatprep.subr.bf16.mxu0 %v707
  %1047 = vmatpush1.bf16.msra.mxu0 %v706
  %1048 = vmatprep.subr.bf16.mxu0 %v711
  %1049 = vmatpush1.bf16.msra.mxu0 %v710
  %1050 = vmatprep.subr.bf16.mxu0 %v715
  %1051 = vmatpush1.bf16.msra.mxu0 %v714
  %1052 = vmatprep.subr.bf16.mxu0 0
  %1053 = vmatpush1.bf16.msra.mxu0 0
  %1054 = vmatprep.subr.bf16.mxu0 0
  %1055 = vmatpush1.bf16.msra.mxu0 0
  %1056 = vmatprep.subr.bf16.mxu0 0
  %1057 = vmatpush1.bf16.msra.mxu0 0
  %1058 = vmatprep.subr.bf16.mxu0 0
  %1059 = vmatpush1.bf16.msra.mxu0 0
  %1060 = vmatprep.subr.bf16.mxu0 0
  %1061 = vmatpush1.bf16.msra.mxu0 0
  %1062 = vmatprep.subr.bf16.mxu0 0
  %1063 = vmatpush1.bf16.msra.mxu0 0
  %1064 = vmatprep.subr.bf16.mxu0 0
  %1065 = vmatpush1.bf16.msra.mxu0 0
  %1066 = vmatprep.subr.bf16.mxu0 0
  %1067 = vmatpush1.bf16.msra.mxu0 0
  %1068 = vmatprep.mubr.bf16.mxu0 0
  %1069 = vmatmul.mubr.bf16.gmra.mrb[0].mxu0 %v994
  %v1070 = vpop.f32.mrb[0].mxu0
  %v1071 = vadd.f32 0.0, %v1070
  %v1072 = vpop.f32.mrb[0].mxu0
  %v1073 = vadd.f32 0.0, %v1072
  %v1074 = vpop.f32.mrb[0].mxu0
  %v1075 = vpop.f32.mrb[0].mxu0
  %1076 = vdwg.mxu0
  %v1077 = vadd.f32 %v990, %v1030
  %v1078 = vadd.f32 %v991, %v1032
  %v1079 = vadd.f32 %v992, %v1071
  %v1080 = vadd.f32 %v993, %v1073
  %v1081 = vxor.u32 %v1077, 2147483648
  %v1082 = vmul.f32 %v1081, 1.442695
  %v1083 = vpow.pop %v1082
  %v1084 = vadd.f32 %v1083, 1.0
  %v1085 = vrcp.pop %v1084
  %v1086 = vmul.f32 1.0, %v1085
  %v1087 = vxor.u32 %v1078, 2147483648
  %v1088 = vmul.f32 %v1087, 1.442695
  %v1089 = vpow.pop %v1088
  %v1090 = vadd.f32 %v1089, 1.0
  %v1091 = vrcp.pop %v1090
  %v1092 = vmul.f32 1.0, %v1091
  %v1093 = vtanh.pop %v1079
  %v1094 = vxor.u32 %v1080, 2147483648
  %v1095 = vmul.f32 %v1094, 1.442695
  %v1096 = vpow.pop %v1095
  %v1097 = vadd.f32 %v1096, 1.0
  %v1098 = vrcp.pop %v1097
  %v1099 = vmul.f32 1.0, %v1098
  %v1100 = vmul.f32 %v1092, %v986
  %v1101 = vmul.f32 %v1086, %v1093
  %v1102 = vadd.f32 %v1100, %v1101
  %v1103 = vtanh.pop %v1102
  %v1104 = vmul.f32 %v1099, %v1103
  %1105 = vst [vmem:[#allocation2] sm:$0xff] %v1104
  %1106 = vst [vmem:[#allocation3] sm:$0xff] %v1102
  %s1107 = scalar_lea.vmem [#allocation5], 16
  %1108 = vst [vmem:[%s1107] sm:$0xff] %v1104
  %v1109 = vld [vmem:[#allocation2] sm:$0xff]
  %v1110 = vld [vmem:[#allocation3] sm:$0xff]
  %s1111 = smul.u32 3, 4
  %s1112 = smul.addr %s1111, 8
  %s1113 = scalar_lea.vmem [#allocation4], %s1112
  %v1114 = vld [vmem:[%s1113] sm:$0xff]
  %v1115 = vld [vmem:[%s1113 + $0x8] sm:$0xff]
  %v1116 = vld [vmem:[%s1113 + $0x10] sm:$0xff]
  %v1117 = vld [vmem:[%s1113 + $0x18] sm:$0xff]
  %v1118 = vpack.c.bf16 %v1109, %v1109
  %1119 = vmatprep.subr.bf16.mxu0 %v685
  %1120 = vmatpush1.bf16.msra.mxu0 %v684
  %1121 = vmatprep.subr.bf16.mxu0 %v689
  %1122 = vmatpush1.bf16.msra.mxu0 %v688
  %1123 = vmatprep.subr.bf16.mxu0 %v693
  %1124 = vmatpush1.bf16.msra.mxu0 %v692
  %1125 = vmatprep.subr.bf16.mxu0 %v697
  %1126 = vmatpush1.bf16.msra.mxu0 %v696
  %1127 = vmatprep.subr.bf16.mxu0 %v701
  %1128 = vmatpush1.bf16.msra.mxu0 %v700
  %1129 = vmatprep.subr.bf16.mxu0 %v705
  %1130 = vmatpush1.bf16.msra.mxu0 %v704
  %1131 = vmatprep.subr.bf16.mxu0 %v709
  %1132 = vmatpush1.bf16.msra.mxu0 %v708
  %1133 = vmatprep.subr.bf16.mxu0 %v713
  %1134 = vmatpush1.bf16.msra.mxu0 %v712
  %1135 = vmatprep.subr.bf16.mxu0 0
  %1136 = vmatpush1.bf16.msra.mxu0 0
  %1137 = vmatprep.subr.bf16.mxu0 0
  %1138 = vmatpush1.bf16.msra.mxu0 0
  %1139 = vmatprep.subr.bf16.mxu0 0
  %1140 = vmatpush1.bf16.msra.mxu0 0
  %1141 = vmatprep.subr.bf16.mxu0 0
  %1142 = vmatpush1.bf16.msra.mxu0 0
  %1143 = vmatprep.subr.bf16.mxu0 0
  %1144 = vmatpush1.bf16.msra.mxu0 0
  %1145 = vmatprep.subr.bf16.mxu0 0
  %1146 = vmatpush1.bf16.msra.mxu0 0
  %1147 = vmatprep.subr.bf16.mxu0 0
  %1148 = vmatpush1.bf16.msra.mxu0 0
  %1149 = vmatprep.subr.bf16.mxu0 0
  %1150 = vmatpush1.bf16.msra.mxu0 0
  %1151 = vmatprep.mubr.bf16.mxu0 0
  %1152 = vmatmul.mubr.bf16.gmra.mrb[0].mxu0 %v1118
  %v1153 = vpop.f32.mrb[0].mxu0
  %v1154 = vadd.f32 0.0, %v1153
  %v1155 = vpop.f32.mrb[0].mxu0
  %v1156 = vadd.f32 0.0, %v1155
  %v1157 = vpop.f32.mrb[0].mxu0
  %v1158 = vpop.f32.mrb[0].mxu0
  %1159 = vdwg.mxu0
  %1160 = vmatprep.subr.bf16.mxu0 %v687
  %1161 = vmatpush1.bf16.msra.mxu0 %v686
  %1162 = vmatprep.subr.bf16.mxu0 %v691
  %1163 = vmatpush1.bf16.msra.mxu0 %v690
  %1164 = vmatprep.subr.bf16.mxu0 %v695
  %1165 = vmatpush1.bf16.msra.mxu0 %v694
  %1166 = vmatprep.subr.bf16.mxu0 %v699
  %1167 = vmatpush1.bf16.msra.mxu0 %v698
  %1168 = vmatprep.subr.bf16.mxu0 %v703
  %1169 = vmatpush1.bf16.msra.mxu0 %v702
  %1170 = vmatprep.subr.bf16.mxu0 %v707
  %1171 = vmatpush1.bf16.msra.mxu0 %v706
  %1172 = vmatprep.subr.bf16.mxu0 %v711
  %1173 = vmatpush1.bf16.msra.mxu0 %v710
  %1174 = vmatprep.subr.bf16.mxu0 %v715
  %1175 = vmatpush1.bf16.msra.mxu0 %v714
  %1176 = vmatprep.subr.bf16.mxu0 0
  %1177 = vmatpush1.bf16.msra.mxu0 0
  %1178 = vmatprep.subr.bf16.mxu0 0
  %1179 = vmatpush1.bf16.msra.mxu0 0
  %1180 = vmatprep.subr.bf16.mxu0 0
  %1181 = vmatpush1.bf16.msra.mxu0 0
  %1182 = vmatprep.subr.bf16.mxu0 0
  %1183 = vmatpush1.bf16.msra.mxu0 0
  %1184 = vmatprep.subr.bf16.mxu0 0
  %1185 = vmatpush1.bf16.msra.mxu0 0
  %1186 = vmatprep.subr.bf16.mxu0 0
  %1187 = vmatpush1.bf16.msra.mxu0 0
  %1188 = vmatprep.subr.bf16.mxu0 0
  %1189 = vmatpush1.bf16.msra.mxu0 0
  %1190 = vmatprep.subr.bf16.mxu0 0
  %1191 = vmatpush1.bf16.msra.mxu0 0
  %1192 = vmatprep.mubr.bf16.mxu0 0
  %1193 = vmatmul.mubr.bf16.gmra.mrb[0].mxu0 %v1118
  %v1194 = vpop.f32.mrb[0].mxu0
  %v1195 = vadd.f32 0.0, %v1194
  %v1196 = vpop.f32.mrb[0].mxu0
  %v1197 = vadd.f32 0.0, %v1196
  %v1198 = vpop.f32.mrb[0].mxu0
  %v1199 = vpop.f32.mrb[0].mxu0
  %1200 = vdwg.mxu0
  %v1201 = vadd.f32 %v1114, %v1154
  %v1202 = vadd.f32 %v1115, %v1156
  %v1203 = vadd.f32 %v1116, %v1195
  %v1204 = vadd.f32 %v1117, %v1197
  %v1205 = vxor.u32 %v1201, 2147483648
  %v1206 = vmul.f32 %v1205, 1.442695
  %v1207 = vpow.pop %v1206
  %v1208 = vadd.f32 %v1207, 1.0
  %v1209 = vrcp.pop %v1208
  %v1210 = vmul.f32 1.0, %v1209
  %v1211 = vxor.u32 %v1202, 2147483648
  %v1212 = vmul.f32 %v1211, 1.442695
  %v1213 = vpow.pop %v1212
  %v1214 = vadd.f32 %v1213, 1.0
  %v1215 = vrcp.pop %v1214
  %v1216 = vmul.f32 1.0, %v1215
  %v1217 = vtanh.pop %v1203
  %v1218 = vxor.u32 %v1204, 2147483648
  %v1219 = vmul.f32 %v1218, 1.442695
  %v1220 = vpow.pop %v1219
  %v1221 = vadd.f32 %v1220, 1.0
  %v1222 = vrcp.pop %v1221
  %v1223 = vmul.f32 1.0, %v1222
  %v1224 = vmul.f32 %v1216, %v1110
  %v1225 = vmul.f32 %v1210, %v1217
  %v1226 = vadd.f32 %v1224, %v1225
  %v1227 = vtanh.pop %v1226
  %v1228 = vmul.f32 %v1223, %v1227
  %1229 = vst [vmem:[#allocation2] sm:$0xff] %v1228
  %1230 = vst [vmem:[#allocation3] sm:$0xff] %v1226
  %s1231 = scalar_lea.vmem [#allocation5], 24
  %1232 = vst [vmem:[%s1231] sm:$0xff] %v1228
  %v1233 = vld [vmem:[#allocation2] sm:$0xff]
  %v1234 = vld [vmem:[#allocation3] sm:$0xff]
  %s1235 = smul.u32 4, 4
  %s1236 = smul.addr %s1235, 8
  %s1237 = scalar_lea.vmem [#allocation4], %s1236
  %v1238 = vld [vmem:[%s1237] sm:$0xff]
  %v1239 = vld [vmem:[%s1237 + $0x8] sm:$0xff]
  %v1240 = vld [vmem:[%s1237 + $0x10] sm:$0xff]
  %v1241 = vld [vmem:[%s1237 + $0x18] sm:$0xff]
  %v1242 = vpack.c.bf16 %v1233, %v1233
  %1243 = vmatprep.subr.bf16.mxu0 %v685
  %1244 = vmatpush1.bf16.msra.mxu0 %v684
  %1245 = vmatprep.subr.bf16.mxu0 %v689
  %1246 = vmatpush1.bf16.msra.mxu0 %v688
  %1247 = vmatprep.subr.bf16.mxu0 %v693
  %1248 = vmatpush1.bf16.msra.mxu0 %v692
  %1249 = vmatprep.subr.bf16.mxu0 %v697
  %1250 = vmatpush1.bf16.msra.mxu0 %v696
  %1251 = vmatprep.subr.bf16.mxu0 %v701
  %1252 = vmatpush1.bf16.msra.mxu0 %v700
  %1253 = vmatprep.subr.bf16.mxu0 %v705
  %1254 = vmatpush1.bf16.msra.mxu0 %v704
  %1255 = vmatprep.subr.bf16.mxu0 %v709
  %1256 = vmatpush1.bf16.msra.mxu0 %v708
  %1257 = vmatprep.subr.bf16.mxu0 %v713
  %1258 = vmatpush1.bf16.msra.mxu0 %v712
  %1259 = vmatprep.subr.bf16.mxu0 0
  %1260 = vmatpush1.bf16.msra.mxu0 0
  %1261 = vmatprep.subr.bf16.mxu0 0
  %1262 = vmatpush1.bf16.msra.mxu0 0
  %1263 = vmatprep.subr.bf16.mxu0 0
  %1264 = vmatpush1.bf16.msra.mxu0 0
  %1265 = vmatprep.subr.bf16.mxu0 0
  %1266 = vmatpush1.bf16.msra.mxu0 0
  %1267 = vmatprep.subr.bf16.mxu0 0
  %1268 = vmatpush1.bf16.msra.mxu0 0
  %1269 = vmatprep.subr.bf16.mxu0 0
  %1270 = vmatpush1.bf16.msra.mxu0 0
  %1271 = vmatprep.subr.bf16.mxu0 0
  %1272 = vmatpush1.bf16.msra.mxu0 0
  %1273 = vmatprep.subr.bf16.mxu0 0
  %1274 = vmatpush1.bf16.msra.mxu0 0
  %1275 = vmatprep.mubr.bf16.mxu0 0
  %1276 = vmatmul.mubr.bf16.gmra.mrb[0].mxu0 %v1242
  %v1277 = vpop.f32.mrb[0].mxu0
  %v1278 = vadd.f32 0.0, %v1277
  %v1279 = vpop.f32.mrb[0].mxu0
  %v1280 = vadd.f32 0.0, %v1279
  %v1281 = vpop.f32.mrb[0].mxu0
  %v1282 = vpop.f32.mrb[0].mxu0
  %1283 = vdwg.mxu0
  %1284 = vmatprep.subr.bf16.mxu0 %v687
  %1285 = vmatpush1.bf16.msra.mxu0 %v686
  %1286 = vmatprep.subr.bf16.mxu0 %v691
  %1287 = vmatpush1.bf16.msra.mxu0 %v690
  %1288 = vmatprep.subr.bf16.mxu0 %v695
  %1289 = vmatpush1.bf16.msra.mxu0 %v694
  %1290 = vmatprep.subr.bf16.mxu0 %v699
  %1291 = vmatpush1.bf16.msra.mxu0 %v698
  %1292 = vmatprep.subr.bf16.mxu0 %v703
  %1293 = vmatpush1.bf16.msra.mxu0 %v702
  %1294 = vmatprep.subr.bf16.mxu0 %v707
  %1295 = vmatpush1.bf16.msra.mxu0 %v706
  %1296 = vmatprep.subr.bf16.mxu0 %v711
  %1297 = vmatpush1.bf16.msra.mxu0 %v710
  %1298 = vmatprep.subr.bf16.mxu0 %v715
  %1299 = vmatpush1.bf16.msra.mxu0 %v714
  %1300 = vmatprep.subr.bf16.mxu0 0
  %1301 = vmatpush1.bf16.msra.mxu0 0
  %1302 = vmatprep.subr.bf16.mxu0 0
  %1303 = vmatpush1.bf16.msra.mxu0 0
  %1304 = vmatprep.subr.bf16.mxu0 0
  %1305 = vmatpush1.bf16.msra.mxu0 0
  %1306 = vmatprep.subr.bf16.mxu0 0
  %1307 = vmatpush1.bf16.msra.mxu0 0
  %1308 = vmatprep.subr.bf16.mxu0 0
  %1309 = vmatpush1.bf16.msra.mxu0 0
  %1310 = vmatprep.subr.bf16.mxu0 0
  %1311 = vmatpush1.bf16.msra.mxu0 0
  %1312 = vmatprep.subr.bf16.mxu0 0
  %1313 = vmatpush1.bf16.msra.mxu0 0
  %1314 = vmatprep.subr.bf16.mxu0 0
  %1315 = vmatpush1.bf16.msra.mxu0 0
  %1316 = vmatprep.mubr.bf16.mxu0 0
  %1317 = vmatmul.mubr.bf16.gmra.mrb[0].mxu0 %v1242
  %v1318 = vpop.f32.mrb[0].mxu0
  %v1319 = vadd.f32 0.0, %v1318
  %v1320 = vpop.f32.mrb[0].mxu0
  %v1321 = vadd.f32 0.0, %v1320
  %v1322 = vpop.f32.mrb[0].mxu0
  %v1323 = vpop.f32.mrb[0].mxu0
  %1324 = vdwg.mxu0
  %v1325 = vadd.f32 %v1238, %v1278
  %v1326 = vadd.f32 %v1239, %v1280
  %v1327 = vadd.f32 %v1240, %v1319
  %v1328 = vadd.f32 %v1241, %v1321
  %v1329 = vxor.u32 %v1325, 2147483648
  %v1330 = vmul.f32 %v1329, 1.442695
  %v1331 = vpow.pop %v1330
  %v1332 = vadd.f32 %v1331, 1.0
  %v1333 = vrcp.pop %v1332
  %v1334 = vmul.f32 1.0, %v1333
  %v1335 = vxor.u32 %v1326, 2147483648
  %v1336 = vmul.f32 %v1335, 1.442695
  %v1337 = vpow.pop %v1336
  %v1338 = vadd.f32 %v1337, 1.0
  %v1339 = vrcp.pop %v1338
  %v1340 = vmul.f32 1.0, %v1339
  %v1341 = vtanh.pop %v1327
  %v1342 = vxor.u32 %v1328, 2147483648
  %v1343 = vmul.f32 %v1342, 1.442695
  %v1344 = vpow.pop %v1343
  %v1345 = vadd.f32 %v1344, 1.0
  %v1346 = vrcp.pop %v1345
  %v1347 = vmul.f32 1.0, %v1346
  %v1348 = vmul.f32 %v1340, %v1234
  %v1349 = vmul.f32 %v1334, %v1341
  %v1350 = vadd.f32 %v1348, %v1349
  %v1351 = vtanh.pop %v1350
  %v1352 = vmul.f32 %v1347, %v1351
  %1353 = vst [vmem:[#allocation2] sm:$0xff] %v1352
  %1354 = vst [vmem:[#allocation3] sm:$0xff] %v1350
  %s1355 = scalar_lea.vmem [#allocation5], 32
  %1356 = vst [vmem:[%s1355] sm:$0xff] %v1352
  %v1357 = vld [vmem:[#allocation2] sm:$0xff]
  %v1358 = vld [vmem:[#allocation3] sm:$0xff]
  %s1359 = smul.u32 5, 4
  %s1360 = smul.addr %s1359, 8
  %s1361 = scalar_lea.vmem [#allocation4], %s1360
  %v1362 = vld [vmem:[%s1361] sm:$0xff]
  %v1363 = vld [vmem:[%s1361 + $0x8] sm:$0xff]
  %v1364 = vld [vmem:[%s1361 + $0x10] sm:$0xff]
  %v1365 = vld [vmem:[%s1361 + $0x18] sm:$0xff]
  %v1366 = vpack.c.bf16 %v1357, %v1357
  %1367 = vmatprep.subr.bf16.mxu0 %v685
  %1368 = vmatpush1.bf16.msra.mxu0 %v684
  %1369 = vmatprep.subr.bf16.mxu0 %v689
  %1370 = vmatpush1.bf16.msra.mxu0 %v688
  %1371 = vmatprep.subr.bf16.mxu0 %v693
  %1372 = vmatpush1.bf16.msra.mxu0 %v692
  %1373 = vmatprep.subr.bf16.mxu0 %v697
  %1374 = vmatpush1.bf16.msra.mxu0 %v696
  %1375 = vmatprep.subr.bf16.mxu0 %v701
  %1376 = vmatpush1.bf16.msra.mxu0 %v700
  %1377 = vmatprep.subr.bf16.mxu0 %v705
  %1378 = vmatpush1.bf16.msra.mxu0 %v704
  %1379 = vmatprep.subr.bf16.mxu0 %v709
  %1380 = vmatpush1.bf16.msra.mxu0 %v708
  %1381 = vmatprep.subr.bf16.mxu0 %v713
  %1382 = vmatpush1.bf16.msra.mxu0 %v712
  %1383 = vmatprep.subr.bf16.mxu0 0
  %1384 = vmatpush1.bf16.msra.mxu0 0
  %1385 = vmatprep.subr.bf16.mxu0 0
  %1386 = vmatpush1.bf16.msra.mxu0 0
  %1387 = vmatprep.subr.bf16.mxu0 0
  %1388 = vmatpush1.bf16.msra.mxu0 0
  %1389 = vmatprep.subr.bf16.mxu0 0
  %1390 = vmatpush1.bf16.msra.mxu0 0
  %1391 = vmatprep.subr.bf16.mxu0 0
  %1392 = vmatpush1.bf16.msra.mxu0 0
  %1393 = vmatprep.subr.bf16.mxu0 0
  %1394 = vmatpush1.bf16.msra.mxu0 0
  %1395 = vmatprep.subr.bf16.mxu0 0
  %1396 = vmatpush1.bf16.msra.mxu0 0
  %1397 = vmatprep.subr.bf16.mxu0 0
  %1398 = vmatpush1.bf16.msra.mxu0 0
  %1399 = vmatprep.mubr.bf16.mxu0 0
  %1400 = vmatmul.mubr.bf16.gmra.mrb[0].mxu0 %v1366
  %v1401 = vpop.f32.mrb[0].mxu0
  %v1402 = vadd.f32 0.0, %v1401
  %v1403 = vpop.f32.mrb[0].mxu0
  %v1404 = vadd.f32 0.0, %v1403
  %v1405 = vpop.f32.mrb[0].mxu0
  %v1406 = vpop.f32.mrb[0].mxu0
  %1407 = vdwg.mxu0
  %1408 = vmatprep.subr.bf16.mxu0 %v687
  %1409 = vmatpush1.bf16.msra.mxu0 %v686
  %1410 = vmatprep.subr.bf16.mxu0 %v691
  %1411 = vmatpush1.bf16.msra.mxu0 %v690
  %1412 = vmatprep.subr.bf16.mxu0 %v695
  %1413 = vmatpush1.bf16.msra.mxu0 %v694
  %1414 = vmatprep.subr.bf16.mxu0 %v699
  %1415 = vmatpush1.bf16.msra.mxu0 %v698
  %1416 = vmatprep.subr.bf16.mxu0 %v703
  %1417 = vmatpush1.bf16.msra.mxu0 %v702
  %1418 = vmatprep.subr.bf16.mxu0 %v707
  %1419 = vmatpush1.bf16.msra.mxu0 %v706
  %1420 = vmatprep.subr.bf16.mxu0 %v711
  %1421 = vmatpush1.bf16.msra.mxu0 %v710
  %1422 = vmatprep.subr.bf16.mxu0 %v715
  %1423 = vmatpush1.bf16.msra.mxu0 %v714
  %1424 = vmatprep.subr.bf16.mxu0 0
  %1425 = vmatpush1.bf16.msra.mxu0 0
  %1426 = vmatprep.subr.bf16.mxu0 0
  %1427 = vmatpush1.bf16.msra.mxu0 0
  %1428 = vmatprep.subr.bf16.mxu0 0
  %1429 = vmatpush1.bf16.msra.mxu0 0
  %1430 = vmatprep.subr.bf16.mxu0 0
  %1431 = vmatpush1.bf16.msra.mxu0 0
  %1432 = vmatprep.subr.bf16.mxu0 0
  %1433 = vmatpush1.bf16.msra.mxu0 0
  %1434 = vmatprep.subr.bf16.mxu0 0
  %1435 = vmatpush1.bf16.msra.mxu0 0
  %1436 = vmatprep.subr.bf16.mxu0 0
  %1437 = vmatpush1.bf16.msra.mxu0 0
  %1438 = vmatprep.subr.bf16.mxu0 0
  %1439 = vmatpush1.bf16.msra.mxu0 0
  %1440 = vmatprep.mubr.bf16.mxu0 0
  %1441 = vmatmul.mubr.bf16.gmra.mrb[0].mxu0 %v1366
  %v1442 = vpop.f32.mrb[0].mxu0
  %v1443 = vadd.f32 0.0, %v1442
  %v1444 = vpop.f32.mrb[0].mxu0
  %v1445 = vadd.f32 0.0, %v1444
  %v1446 = vpop.f32.mrb[0].mxu0
  %v1447 = vpop.f32.mrb[0].mxu0
  %1448 = vdwg.mxu0
  %v1449 = vadd.f32 %v1362, %v1402
  %v1450 = vadd.f32 %v1363, %v1404
  %v1451 = vadd.f32 %v1364, %v1443
  %v1452 = vadd.f32 %v1365, %v1445
  %v1453 = vxor.u32 %v1449, 2147483648
  %v1454 = vmul.f32 %v1453, 1.442695
  %v1455 = vpow.pop %v1454
  %v1456 = vadd.f32 %v1455, 1.0
  %v1457 = vrcp.pop %v1456
  %v1458 = vmul.f32 1.0, %v1457
  %v1459 = vxor.u32 %v1450, 2147483648
  %v1460 = vmul.f32 %v1459, 1.442695
  %v1461 = vpow.pop %v1460
  %v1462 = vadd.f32 %v1461, 1.0
  %v1463 = vrcp.pop %v1462
  %v1464 = vmul.f32 1.0, %v1463
  %v1465 = vtanh.pop %v1451
  %v1466 = vxor.u32 %v1452, 2147483648
  %v1467 = vmul.f32 %v1466, 1.442695
  %v1468 = vpow.pop %v1467
  %v1469 = vadd.f32 %v1468, 1.0
  %v1470 = vrcp.pop %v1469
  %v1471 = vmul.f32 1.0, %v1470
  %v1472 = vmul.f32 %v1464, %v1358
  %v1473 = vmul.f32 %v1458, %v1465
  %v1474 = vadd.f32 %v1472, %v1473
  %v1475 = vtanh.pop %v1474
  %v1476 = vmul.f32 %v1471, %v1475
  %1477 = vst [vmem:[#allocation2] sm:$0xff] %v1476
  %1478 = vst [vmem:[#allocation3] sm:$0xff] %v1474
  %s1479 = scalar_lea.vmem [#allocation5], 40
  %1480 = vst [vmem:[%s1479] sm:$0xff] %v1476
  %v1481 = vld [vmem:[#allocation2] sm:$0xff]
  %v1482 = vld [vmem:[#allocation3] sm:$0xff]
  %s1483 = smul.u32 6, 4
  %s1484 = smul.addr %s1483, 8
  %s1485 = scalar_lea.vmem [#allocation4], %s1484
  %v1486 = vld [vmem:[%s1485] sm:$0xff]
  %v1487 = vld [vmem:[%s1485 + $0x8] sm:$0xff]
  %v1488 = vld [vmem:[%s1485 + $0x10] sm:$0xff]
  %v1489 = vld [vmem:[%s1485 + $0x18] sm:$0xff]
  %v1490 = vpack.c.bf16 %v1481, %v1481
  %1491 = vmatprep.subr.bf16.mxu0 %v685
  %1492 = vmatpush1.bf16.msra.mxu0 %v684
  %1493 = vmatprep.subr.bf16.mxu0 %v689
  %1494 = vmatpush1.bf16.msra.mxu0 %v688
  %1495 = vmatprep.subr.bf16.mxu0 %v693
  %1496 = vmatpush1.bf16.msra.mxu0 %v692
  %1497 = vmatprep.subr.bf16.mxu0 %v697
  %1498 = vmatpush1.bf16.msra.mxu0 %v696
  %1499 = vmatprep.subr.bf16.mxu0 %v701
  %1500 = vmatpush1.bf16.msra.mxu0 %v700
  %1501 = vmatprep.subr.bf16.mxu0 %v705
  %1502 = vmatpush1.bf16.msra.mxu0 %v704
  %1503 = vmatprep.subr.bf16.mxu0 %v709
  %1504 = vmatpush1.bf16.msra.mxu0 %v708
  %1505 = vmatprep.subr.bf16.mxu0 %v713
  %1506 = vmatpush1.bf16.msra.mxu0 %v712
  %1507 = vmatprep.subr.bf16.mxu0 0
  %1508 = vmatpush1.bf16.msra.mxu0 0
  %1509 = vmatprep.subr.bf16.mxu0 0
  %1510 = vmatpush1.bf16.msra.mxu0 0
  %1511 = vmatprep.subr.bf16.mxu0 0
  %1512 = vmatpush1.bf16.msra.mxu0 0
  %1513 = vmatprep.subr.bf16.mxu0 0
  %1514 = vmatpush1.bf16.msra.mxu0 0
  %1515 = vmatprep.subr.bf16.mxu0 0
  %1516 = vmatpush1.bf16.msra.mxu0 0
  %1517 = vmatprep.subr.bf16.mxu0 0
  %1518 = vmatpush1.bf16.msra.mxu0 0
  %1519 = vmatprep.subr.bf16.mxu0 0
  %1520 = vmatpush1.bf16.msra.mxu0 0
  %1521 = vmatprep.subr.bf16.mxu0 0
  %1522 = vmatpush1.bf16.msra.mxu0 0
  %1523 = vmatprep.mubr.bf16.mxu0 0
  %1524 = vmatmul.mubr.bf16.gmra.mrb[0].mxu0 %v1490
  %v1525 = vpop.f32.mrb[0].mxu0
  %v1526 = vadd.f32 0.0, %v1525
  %v1527 = vpop.f32.mrb[0].mxu0
  %v1528 = vadd.f32 0.0, %v1527
  %v1529 = vpop.f32.mrb[0].mxu0
  %v1530 = vpop.f32.mrb[0].mxu0
  %1531 = vdwg.mxu0
  %1532 = vmatprep.subr.bf16.mxu0 %v687
  %1533 = vmatpush1.bf16.msra.mxu0 %v686
  %1534 = vmatprep.subr.bf16.mxu0 %v691
  %1535 = vmatpush1.bf16.msra.mxu0 %v690
  %1536 = vmatprep.subr.bf16.mxu0 %v695
  %1537 = vmatpush1.bf16.msra.mxu0 %v694
  %1538 = vmatprep.subr.bf16.mxu0 %v699
  %1539 = vmatpush1.bf16.msra.mxu0 %v698
  %1540 = vmatprep.subr.bf16.mxu0 %v703
  %1541 = vmatpush1.bf16.msra.mxu0 %v702
  %1542 = vmatprep.subr.bf16.mxu0 %v707
  %1543 = vmatpush1.bf16.msra.mxu0 %v706
  %1544 = vmatprep.subr.bf16.mxu0 %v711
  %1545 = vmatpush1.bf16.msra.mxu0 %v710
  %1546 = vmatprep.subr.bf16.mxu0 %v715
  %1547 = vmatpush1.bf16.msra.mxu0 %v714
  %1548 = vmatprep.subr.bf16.mxu0 0
  %1549 = vmatpush1.bf16.msra.mxu0 0
  %1550 = vmatprep.subr.bf16.mxu0 0
  %1551 = vmatpush1.bf16.msra.mxu0 0
  %1552 = vmatprep.subr.bf16.mxu0 0
  %1553 = vmatpush1.bf16.msra.mxu0 0
  %1554 = vmatprep.subr.bf16.mxu0 0
  %1555 = vmatpush1.bf16.msra.mxu0 0
  %1556 = vmatprep.subr.bf16.mxu0 0
  %1557 = vmatpush1.bf16.msra.mxu0 0
  %1558 = vmatprep.subr.bf16.mxu0 0
  %1559 = vmatpush1.bf16.msra.mxu0 0
  %1560 = vmatprep.subr.bf16.mxu0 0
  %1561 = vmatpush1.bf16.msra.mxu0 0
  %1562 = vmatprep.subr.bf16.mxu0 0
  %1563 = vmatpush1.bf16.msra.mxu0 0
  %1564 = vmatprep.mubr.bf16.mxu0 0
  %1565 = vmatmul.mubr.bf16.gmra.mrb[0].mxu0 %v1490
  %v1566 = vpop.f32.mrb[0].mxu0
  %v1567 = vadd.f32 0.0, %v1566
  %v1568 = vpop.f32.mrb[0].mxu0
  %v1569 = vadd.f32 0.0, %v1568
  %v1570 = vpop.f32.mrb[0].mxu0
  %v1571 = vpop.f32.mrb[0].mxu0
  %1572 = vdwg.mxu0
  %v1573 = vadd.f32 %v1486, %v1526
  %v1574 = vadd.f32 %v1487, %v1528
  %v1575 = vadd.f32 %v1488, %v1567
  %v1576 = vadd.f32 %v1489, %v1569
  %v1577 = vxor.u32 %v1573, 2147483648
  %v1578 = vmul.f32 %v1577, 1.442695
  %v1579 = vpow.pop %v1578
  %v1580 = vadd.f32 %v1579, 1.0
  %v1581 = vrcp.pop %v1580
  %v1582 = vmul.f32 1.0, %v1581
  %v1583 = vxor.u32 %v1574, 2147483648
  %v1584 = vmul.f32 %v1583, 1.442695
  %v1585 = vpow.pop %v1584
  %v1586 = vadd.f32 %v1585, 1.0
  %v1587 = vrcp.pop %v1586
  %v1588 = vmul.f32 1.0, %v1587
  %v1589 = vtanh.pop %v1575
  %v1590 = vxor.u32 %v1576, 2147483648
  %v1591 = vmul.f32 %v1590, 1.442695
  %v1592 = vpow.pop %v1591
  %v1593 = vadd.f32 %v1592, 1.0
  %v1594 = vrcp.pop %v1593
  %v1595 = vmul.f32 1.0, %v1594
  %v1596 = vmul.f32 %v1588, %v1482
  %v1597 = vmul.f32 %v1582, %v1589
  %v1598 = vadd.f32 %v1596, %v1597
  %v1599 = vtanh.pop %v1598
  %v1600 = vmul.f32 %v1595, %v1599
  %1601 = vst [vmem:[#allocation2] sm:$0xff] %v1600
  %1602 = vst [vmem:[#allocation3] sm:$0xff] %v1598
  %s1603 = scalar_lea.vmem [#allocation5], 48
  %1604 = vst [vmem:[%s1603] sm:$0xff] %v1600
  %v1605 = vld [vmem:[#allocation2] sm:$0xff]
  %v1606 = vld [vmem:[#allocation3] sm:$0xff]
  %s1607 = smul.u32 7, 4
  %s1608 = smul.addr %s1607, 8
  %s1609 = scalar_lea.vmem [#allocation4], %s1608
  %v1610 = vld [vmem:[%s1609] sm:$0xff]
  %v1611 = vld [vmem:[%s1609 + $0x8] sm:$0xff]
  %v1612 = vld [vmem:[%s1609 + $0x10] sm:$0xff]
  %v1613 = vld [vmem:[%s1609 + $0x18] sm:$0xff]
  %v1614 = vpack.c.bf16 %v1605, %v1605
  %1615 = vmatprep.subr.bf16.mxu0 %v685
  %1616 = vmatpush1.bf16.msra.mxu0 %v684
  %1617 = vmatprep.subr.bf16.mxu0 %v689
  %1618 = vmatpush1.bf16.msra.mxu0 %v688
  %1619 = vmatprep.subr.bf16.mxu0 %v693
  %1620 = vmatpush1.bf16.msra.mxu0 %v692
  %1621 = vmatprep.subr.bf16.mxu0 %v697
  %1622 = vmatpush1.bf16.msra.mxu0 %v696
  %1623 = vmatprep.subr.bf16.mxu0 %v701
  %1624 = vmatpush1.bf16.msra.mxu0 %v700
  %1625 = vmatprep.subr.bf16.mxu0 %v705
  %1626 = vmatpush1.bf16.msra.mxu0 %v704
  %1627 = vmatprep.subr.bf16.mxu0 %v709
  %1628 = vmatpush1.bf16.msra.mxu0 %v708
  %1629 = vmatprep.subr.bf16.mxu0 %v713
  %1630 = vmatpush1.bf16.msra.mxu0 %v712
  %1631 = vmatprep.subr.bf16.mxu0 0
  %1632 = vmatpush1.bf16.msra.mxu0 0
  %1633 = vmatprep.subr.bf16.mxu0 0
  %1634 = vmatpush1.bf16.msra.mxu0 0
  %1635 = vmatprep.subr.bf16.mxu0 0
  %1636 = vmatpush1.bf16.msra.mxu0 0
  %1637 = vmatprep.subr.bf16.mxu0 0
  %1638 = vmatpush1.bf16.msra.mxu0 0
  %1639 = vmatprep.subr.bf16.mxu0 0
  %1640 = vmatpush1.bf16.msra.mxu0 0
  %1641 = vmatprep.subr.bf16.mxu0 0
  %1642 = vmatpush1.bf16.msra.mxu0 0
  %1643 = vmatprep.subr.bf16.mxu0 0
  %1644 = vmatpush1.bf16.msra.mxu0 0
  %1645 = vmatprep.subr.bf16.mxu0 0
  %1646 = vmatpush1.bf16.msra.mxu0 0
  %1647 = vmatprep.mubr.bf16.mxu0 0
  %1648 = vmatmul.mubr.bf16.gmra.mrb[0].mxu0 %v1614
  %v1649 = vpop.f32.mrb[0].mxu0
  %v1650 = vadd.f32 0.0, %v1649
  %v1651 = vpop.f32.mrb[0].mxu0
  %v1652 = vadd.f32 0.0, %v1651
  %v1653 = vpop.f32.mrb[0].mxu0
  %v1654 = vpop.f32.mrb[0].mxu0
  %1655 = vdwg.mxu0
  %1656 = vmatprep.subr.bf16.mxu0 %v687
  %1657 = vmatpush1.bf16.msra.mxu0 %v686
  %1658 = vmatprep.subr.bf16.mxu0 %v691
  %1659 = vmatpush1.bf16.msra.mxu0 %v690
  %1660 = vmatprep.subr.bf16.mxu0 %v695
  %1661 = vmatpush1.bf16.msra.mxu0 %v694
  %1662 = vmatprep.subr.bf16.mxu0 %v699
  %1663 = vmatpush1.bf16.msra.mxu0 %v698
  %1664 = vmatprep.subr.bf16.mxu0 %v703
  %1665 = vmatpush1.bf16.msra.mxu0 %v702
  %1666 = vmatprep.subr.bf16.mxu0 %v707
  %1667 = vmatpush1.bf16.msra.mxu0 %v706
  %1668 = vmatprep.subr.bf16.mxu0 %v711
  %1669 = vmatpush1.bf16.msra.mxu0 %v710
  %1670 = vmatprep.subr.bf16.mxu0 %v715
  %1671 = vmatpush1.bf16.msra.mxu0 %v714
  %1672 = vmatprep.subr.bf16.mxu0 0
  %1673 = vmatpush1.bf16.msra.mxu0 0
  %1674 = vmatprep.subr.bf16.mxu0 0
  %1675 = vmatpush1.bf16.msra.mxu0 0
  %1676 = vmatprep.subr.bf16.mxu0 0
  %1677 = vmatpush1.bf16.msra.mxu0 0
  %1678 = vmatprep.subr.bf16.mxu0 0
  %1679 = vmatpush1.bf16.msra.mxu0 0
  %1680 = vmatprep.subr.bf16.mxu0 0
  %1681 = vmatpush1.bf16.msra.mxu0 0
  %1682 = vmatprep.subr.bf16.mxu0 0
  %1683 = vmatpush1.bf16.msra.mxu0 0
  %1684 = vmatprep.subr.bf16.mxu0 0
  %1685 = vmatpush1.bf16.msra.mxu0 0
  %1686 = vmatprep.subr.bf16.mxu0 0
  %1687 = vmatpush1.bf16.msra.mxu0 0
  %1688 = vmatprep.mubr.bf16.mxu0 0
  %1689 = vmatmul.mubr.bf16.gmra.mrb[0].mxu0 %v1614
  %v1690 = vpop.f32.mrb[0].mxu0
  %v1691 = vadd.f32 0.0, %v1690
  %v1692 = vpop.f32.mrb[0].mxu0
  %v1693 = vadd.f32 0.0, %v1692
  %v1694 = vpop.f32.mrb[0].mxu0
  %v1695 = vpop.f32.mrb[0].mxu0
  %1696 = vdwg.mxu0
  %v1697 = vadd.f32 %v1610, %v1650
  %v1698 = vadd.f32 %v1611, %v1652
  %v1699 = vadd.f32 %v1612, %v1691
  %v1700 = vadd.f32 %v1613, %v1693
  %v1701 = vxor.u32 %v1697, 2147483648
  %v1702 = vmul.f32 %v1701, 1.442695
  %v1703 = vpow.pop %v1702
  %v1704 = vadd.f32 %v1703, 1.0
  %v1705 = vrcp.pop %v1704
  %v1706 = vmul.f32 1.0, %v1705
  %v1707 = vxor.u32 %v1698, 2147483648
  %v1708 = vmul.f32 %v1707, 1.442695
  %v1709 = vpow.pop %v1708
  %v1710 = vadd.f32 %v1709, 1.0
  %v1711 = vrcp.pop %v1710
  %v1712 = vmul.f32 1.0, %v1711
  %v1713 = vtanh.pop %v1699
  %v1714 = vxor.u32 %v1700, 2147483648
  %v1715 = vmul.f32 %v1714, 1.442695
  %v1716 = vpow.pop %v1715
  %v1717 = vadd.f32 %v1716, 1.0
  %v1718 = vrcp.pop %v1717
  %v1719 = vmul.f32 1.0, %v1718
  %v1720 = vmul.f32 %v1712, %v1606
  %v1721 = vmul.f32 %v1706, %v1713
  %v1722 = vadd.f32 %v1720, %v1721
  %v1723 = vtanh.pop %v1722
  %v1724 = vmul.f32 %v1719, %v1723
  %1725 = vst [vmem:[#allocation2] sm:$0xff] %v1724
  %1726 = vst [vmem:[#allocation3] sm:$0xff] %v1722
  %s1727 = scalar_lea.vmem [#allocation5], 56
  %1728 = vst [vmem:[%s1727] sm:$0xff] %v1724
  %v1729 = vld [vmem:[#allocation5] sm:$0xff]
  %v1730 = vld [vmem:[#allocation5 + $0x8] sm:$0xff]
  %v1731 = vld [vmem:[#allocation5 + $0x10] sm:$0xff]
  %v1732 = vld [vmem:[#allocation5 + $0x18] sm:$0xff]
  %v1733 = vld [vmem:[#allocation5 + $0x20] sm:$0xff]
  %v1734 = vld [vmem:[#allocation5 + $0x28] sm:$0xff]
  %v1735 = vld [vmem:[#allocation5 + $0x30] sm:$0xff]
  %v1736 = vld [vmem:[#allocation5 + $0x38] sm:$0xff]
  %v1737 = vpack.c.bf16 %v1730, %v1729
  %v1738 = vpack.c.bf16 %v1732, %v1731
  %v1739 = vpack.c.bf16 %v1734, %v1733
  %v1740 = vpack.c.bf16 %v1736, %v1735
  %v1741 = vld [vmem:[%s6] sm:$0xf]
  %v1742 = vld [vmem:[%s6 + $0x4] sm:$0xf]
  %v1743 = vld [vmem:[%s6 + $0x8] sm:$0xf]
  %v1744 = vld [vmem:[%s6 + $0xc] sm:$0xf]
  %v1745 = vld [vmem:[%s6 + $0x10] sm:$0xf]
  %v1746 = vld [vmem:[%s6 + $0x14] sm:$0xf]
  %v1747 = vld [vmem:[%s6 + $0x18] sm:$0xf]
  %v1748 = vld [vmem:[%s6 + $0x1c] sm:$0xf]
  %v1749 = vld [vmem:[%s6 + $0x20] sm:$0xf]
  %v1750 = vld [vmem:[%s6 + $0x24] sm:$0xf]
  %v1751 = vld [vmem:[%s6 + $0x28] sm:$0xf]
  %v1752 = vld [vmem:[%s6 + $0x2c] sm:$0xf]
  %v1753 = vld [vmem:[%s6 + $0x30] sm:$0xf]
  %v1754 = vld [vmem:[%s6 + $0x34] sm:$0xf]
  %v1755 = vld [vmem:[%s6 + $0x38] sm:$0xf]
  %v1756 = vld [vmem:[%s6 + $0x3c] sm:$0xf]
  %v1757 = vld [vmem:[%s7] sm:$0x1]
  %v1759 = vlaneseq
  %v1760 = vshrl.u32 %v1759, 7
  %v1761 = vsub.s32 0, %v1760
  %v1762 = vrot.slane %v1757, %v1761
  %v1780 = vunpack.c.l.b16 %v1741
  %v1781 = vunpack.c.l.b16 %v1742
  %v1782 = vunpack.c.l.b16 %v1743
  %v1783 = vunpack.c.l.b16 %v1744
  %v1784 = vunpack.c.l.b16 %v1745
  %v1785 = vunpack.c.l.b16 %v1746
  %v1786 = vunpack.c.l.b16 %v1747
  %v1787 = vunpack.c.l.b16 %v1748
  %v1788 = vunpack.c.l.b16 %v1749
  %v1789 = vunpack.c.l.b16 %v1750
  %v1790 = vunpack.c.l.b16 %v1751
  %v1791 = vunpack.c.l.b16 %v1752
  %v1792 = vunpack.c.l.b16 %v1753
  %v1793 = vunpack.c.l.b16 %v1754
  %v1794 = vunpack.c.l.b16 %v1755
  %v1795 = vunpack.c.l.b16 %v1756
  %v1796 = vpack.c.b16 %v1781, %v1780
  %v1797 = vpack.c.b16 %v1783, %v1782
  %v1798 = vpack.c.b16 %v1785, %v1784
  %v1799 = vpack.c.b16 %v1787, %v1786
  %v1800 = vpack.c.b16 %v1789, %v1788
  %v1801 = vpack.c.b16 %v1791, %v1790
  %v1802 = vpack.c.b16 %v1793, %v1792
  %v1803 = vpack.c.b16 %v1795, %v1794
  %1812 = vmatprep.subr.bf16.mxu0 0
  %1813 = vmatpush1.bf16.msra.mxu0 %v1796
  %1814 = vmatprep.subr.bf16.mxu0 0
  %1815 = vmatpush1.bf16.msra.mxu0 %v1797
  %1816 = vmatprep.subr.bf16.mxu0 0
  %1817 = vmatpush1.bf16.msra.mxu0 %v1798
  %1818 = vmatprep.subr.bf16.mxu0 0
  %1819 = vmatpush1.bf16.msra.mxu0 %v1799
  %1820 = vmatprep.subr.bf16.mxu0 0
  %1821 = vmatpush1.bf16.msra.mxu0 %v1800
  %1822 = vmatprep.subr.bf16.mxu0 0
  %1823 = vmatpush1.bf16.msra.mxu0 %v1801
  %1824 = vmatprep.subr.bf16.mxu0 0
  %1825 = vmatpush1.bf16.msra.mxu0 %v1802
  %1826 = vmatprep.subr.bf16.mxu0 0
  %1827 = vmatpush1.bf16.msra.mxu0 %v1803
  %1828 = vmatprep.subr.bf16.mxu0 0
  %1829 = vmatpush1.bf16.msra.mxu0 0
  %1830 = vmatprep.subr.bf16.mxu0 0
  %1831 = vmatpush1.bf16.msra.mxu0 0
  %1832 = vmatprep.subr.bf16.mxu0 0
  %1833 = vmatpush1.bf16.msra.mxu0 0
  %1834 = vmatprep.subr.bf16.mxu0 0
  %1835 = vmatpush1.bf16.msra.mxu0 0
  %1836 = vmatprep.subr.bf16.mxu0 0
  %1837 = vmatpush1.bf16.msra.mxu0 0
  %1838 = vmatprep.subr.bf16.mxu0 0
  %1839 = vmatpush1.bf16.msra.mxu0 0
  %1840 = vmatprep.subr.bf16.mxu0 0
  %1841 = vmatpush1.bf16.msra.mxu0 0
  %1842 = vmatprep.subr.bf16.mxu0 0
  %1843 = vmatpush1.bf16.msra.mxu0 0
  %1844 = vmatprep.mubr.bf16.mxu0 0
  %1845 = vmatmul.mubr.bf16.gmra.mrb[0].mxu0 %v1737
  %v1846 = vpop.f32.mrb[0].mxu0
  %v1847 = vadd.f32 %v1762, %v1846
  %v1848 = vpop.f32.mrb[0].mxu0
  %v1849 = vpop.f32.mrb[0].mxu0
  %v1850 = vadd.f32 %v1762, %v1849
  %v1851 = vpop.f32.mrb[0].mxu0
  %1852 = vmatprep.mubr.bf16.mxu0 0
  %1853 = vmatmul.mubr.bf16.gmra.mrb[0].mxu0 %v1738
  %v1854 = vpop.f32.mrb[0].mxu0
  %v1855 = vadd.f32 %v1762, %v1854
  %v1856 = vpop.f32.mrb[0].mxu0
  %v1857 = vpop.f32.mrb[0].mxu0
  %v1858 = vadd.f32 %v1762, %v1857
  %v1859 = vpop.f32.mrb[0].mxu0
  %1860 = vmatprep.mubr.bf16.mxu0 0
  %1861 = vmatmul.mubr.bf16.gmra.mrb[0].mxu0 %v1739
  %v1862 = vpop.f32.mrb[0].mxu0
  %v1863 = vadd.f32 %v1762, %v1862
  %v1864 = vpop.f32.mrb[0].mxu0
  %v1865 = vpop.f32.mrb[0].mxu0
  %v1866 = vadd.f32 %v1762, %v1865
  %v1867 = vpop.f32.mrb[0].mxu0
  %1868 = vmatprep.mubr.bf16.mxu0 0
  %1869 = vmatmul.mubr.bf16.gmra.mrb[0].mxu0 %v1740
  %v1870 = vpop.f32.mrb[0].mxu0
  %v1871 = vadd.f32 %v1762, %v1870
  %v1872 = vpop.f32.mrb[0].mxu0
  %v1873 = vpop.f32.mrb[0].mxu0
  %v1874 = vadd.f32 %v1762, %v1873
  %v1875 = vpop.f32.mrb[0].mxu0
  %1876 = vdwg.mxu0
  %1877 = vst [vmem:[%s9] sm:$0xff] %v1847
  %1878 = vst [vmem:[%s9 + $0x8] sm:$0xff] %v1850
  %1879 = vst [vmem:[%s9 + $0x10] sm:$0xff] %v1855
  %1880 = vst [vmem:[%s9 + $0x18] sm:$0xff] %v1858
  %1881 = vst [vmem:[%s9 + $0x20] sm:$0xff] %v1863
  %1882 = vst [vmem:[%s9 + $0x28] sm:$0xff] %v1866
  %1883 = vst [vmem:[%s9 + $0x30] sm:$0xff] %v1871
  %1884 = vst [vmem:[%s9 + $0x38] sm:$0xff] %v1874
  // Predicated region
  $region42: #{lstm_cnn_cond_forward.9} parent=0 // pred_check
    _
  $region43: #{lstm_cnn_cond_forward.9} parent=0 // pred_check_branch
    %1886 = sbr.rel (0) target = $region45
  $region44: #{lstm_cnn_cond_forward.9} parent=0 // pred_region
    _
  $region45: #{lstm_cnn_cond_forward.9} parent=0 // pred_fallthru
    _
  // Predicated region
  $region46: #{lstm_cnn_cond_forward.9} parent=0 // pred_check
    _
  $region47: #{lstm_cnn_cond_forward.9} parent=0 // pred_check_branch
    %1888 = sbr.rel (0) target = $region49
  $region48: #{lstm_cnn_cond_forward.9} parent=0 // pred_region
    _
  $region49: #{lstm_cnn_cond_forward.9} parent=0 // pred_fallthru
    _

</llo_original>
